<compile_context>
chip_gen: v5e
topology: v5e:2x2
jax: 0.10.0
libtpu: 0.0.40
codegen_flags: <defaults>
</compile_context>

<pallas_src>
import math

import jax
import jax.numpy as jnp
from jax import lax
from jax.experimental import pallas as pl
from jax.experimental.pallas import tpu as pltpu

# ---------------- small hyper-params consistent with SPKT.forward ------------
B = 2            # batch
S = 7            # raw length of qseqs/cseqs/rseqs
L = S + 1        # effective seq length after cat([x[:, 0:1], x_shft])
NC = 3           # concepts per question (cseqs last dim)
D = 32           # d_model
NH = 8           # num_attn_heads
DK = D // NH     # d_feature per head
DFF = 64         # d_ff
NBLOCKS = 2      # n_blocks
FC1 = 64         # final_fc_dim
FC2 = 32         # final_fc_dim2
N_Q_VOCAB = 1000   # emb_q rows (module uses 200000; smaller synthetic table, same math)
N_C_VOCAB = 1000   # emb_c rows
N_DATASET = 20
MAX_LEN = 64       # positional-embedding table length (module default 1024)
LN_EPS = 1e-5

BL = B * L         # 16  : batch-folded activation rows
BH = B * NH * L    # 128 : stacked (batch, head, pos) attention rows
NEG = -1e30        # finite additive mask value (no -inf arithmetic anywhere)

# misc-embedding pack row offsets (sublane-tile aligned sections)
MISC_QA = 24       # rows 24/25 : qa_embed rows 0/1
MISC_POS = 32      # rows 32:48 : positional embedding tiled over batch
MISC_ROWS = 48

# The weight-packing below relies on these equalities (true for this config).
assert DFF == FC1 and D == FC2 and NH * DK == D


# ============== Pallas kernel: full SPKT forward (single fused call) =========
def spkt_fused_kernel(idx_ref, emb_q_ref, emb_c_ref, misc_ref,
                      attn_rb_ref, rt_ref, hm_ref,
                      wdd_ref, wa_ref, wb_ref, vec_ref, ovec_ref,
                      o_ref):
    # -------- embedding front-end: one-hot MXU gathers (exact row selects) ---
    idx = idx_ref[...]                            # (BL, 3+NC) int32
    pid = idx[:, 0:1]                             # question ids
    tgt = idx[:, 1:2]                             # responses in {0, 1}
    dsid = idx[:, 2:3]                            # dataset id per row
    rel = idx[:, 3:3 + NC]                        # concepts + 1 (0 == padding)

    lane_q = lax.broadcasted_iota(jnp.int32, (BL, N_Q_VOCAB), 1)
    oh_q = (lane_q == pid).astype(jnp.float32)
    emb_q_g = jnp.dot(oh_q, emb_q_ref[...], preferred_element_type=jnp.float32)

    lane_c = lax.broadcasted_iota(jnp.int32, (BL, N_C_VOCAB + 1), 1)
    mhot = (lane_c == rel[:, 0:1]).astype(jnp.float32)
    cnt = (rel[:, 0:1] != 0).astype(jnp.float32)
    for j in range(1, NC):                        # multi-hot sum == gather-sum
        mhot = mhot + (lane_c == rel[:, j:j + 1]).astype(jnp.float32)
        cnt = cnt + (rel[:, j:j + 1] != 0).astype(jnp.float32)
    csum = jnp.dot(mhot, emb_c_ref[...], preferred_element_type=jnp.float32)
    emb_c_g = csum / jnp.maximum(cnt, 1.0)        # exact divide (avg skill emb)

    lane_d = lax.broadcasted_iota(jnp.int32, (BL, N_DATASET), 1)
    oh_d = (lane_d == dsid).astype(jnp.float32)
    ds_g = jnp.dot(oh_d, misc_ref[0:N_DATASET, :],
                   preferred_element_type=jnp.float32)

    tgt_f = tgt.astype(jnp.float32)               # exact 2-row table select
    qa_g = (misc_ref[MISC_QA:MISC_QA + 1, :] * (1.0 - tgt_f)
            + misc_ref[MISC_QA + 1:MISC_QA + 2, :] * tgt_f)
    pos = misc_ref[MISC_POS:MISC_POS + BL, :]     # (BL, D) cosine pos emb

    q_emb = emb_q_g + emb_c_g + ds_g              # q_embed_data (no positional emb)
    x = q_emb + pos                               # query/key stream
    y = x + qa_g                                  # value stream (qa_embed + pos)

    # -------- precomputed attention constants (host-built, VMEM-resident) ----
    R = attn_rb_ref[0]        # (BH, BL) replicate (b,l) rows to (b,h,l)
    sbias = attn_rb_ref[1]    # (BH, BL) additive mask: 0 allowed / -1e30 masked
    rt = rt_ref[...]          # (BL, BH) head recombination, zero_pad row-0 folded in
    hm = hm_ref[...]          # (BH, D)  per-head lane mask

    for blk in range(NBLOCKS):                    # static unroll over blocks
        wk = wdd_ref[blk, 0]                      # (D, D) k/q proj (1/sqrt(dk) folded)
        wv = wdd_ref[blk, 1]                      # (D, D) v proj
        wo = wdd_ref[blk, 2]                      # (D, D) out_proj
        vec = vec_ref[blk]                        # (8, D)
        bk, bv, bo = vec[0:1], vec[1:2], vec[2:3]
        g1, beta1 = vec[3:4], vec[4:5]
        b2, g2, beta2 = vec[5:6], vec[6:7], vec[7:8]
        w1 = wa_ref[blk * D:(blk + 1) * D, :]     # (D, DFF)
        w2 = wb_ref[blk * DFF:(blk + 1) * DFF, :]  # (DFF, D)
        b1 = ovec_ref[blk:blk + 1, :]             # (1, DFF)

        # kq_same=1 and query==key  =>  q and k projections are identical.
        qk = jnp.dot(x, wk, preferred_element_type=jnp.float32) + bk   # (BL, D)
        v = jnp.dot(y, wv, preferred_element_type=jnp.float32) + bv    # (BL, D)

        # ---- batch+head-stacked attention (exact by head-lane-mask algebra) -
        q_stack = jnp.dot(R, qk, preferred_element_type=jnp.float32) * hm   # (BH, D)
        s = lax.dot_general(q_stack, qk, (((1,), (1,)), ((), ())),
                            preferred_element_type=jnp.float32) + sbias     # (BH, BL)
        s = s - jnp.max(s, axis=-1, keepdims=True)
        p = jnp.exp(s)
        p = p / jnp.sum(p, axis=-1, keepdims=True)      # exact softmax
        o_stack = jnp.dot(p, v, preferred_element_type=jnp.float32)         # (BH, D)
        # recombine heads: rt has zero_pad (query row 0) folded into its columns
        concat = jnp.dot(rt, o_stack * hm, preferred_element_type=jnp.float32)  # (BL, D)
        attn = jnp.dot(concat, wo, preferred_element_type=jnp.float32) + bo

        # residual + LayerNorm1
        h1 = x + attn
        mu = jnp.mean(h1, axis=-1, keepdims=True)
        var = jnp.mean((h1 - mu) ** 2, axis=-1, keepdims=True)
        h1n = (h1 - mu) * lax.rsqrt(var + LN_EPS) * g1 + beta1

        # position-wise FFN + residual + LayerNorm2
        ff = jnp.dot(h1n, w1, preferred_element_type=jnp.float32) + b1
        ff = jnp.maximum(ff, 0.0)
        ff = jnp.dot(ff, w2, preferred_element_type=jnp.float32) + b2
        h2 = h1n + ff
        mu2 = jnp.mean(h2, axis=-1, keepdims=True)
        var2 = jnp.mean((h2 - mu2) ** 2, axis=-1, keepdims=True)
        x = (h2 - mu2) * lax.rsqrt(var2 + LN_EPS) * g2 + beta2

    # -------- output head: cat([d_output, q_embed]) -> MLP -> sigmoid --------
    w1o = wa_ref[NBLOCKS * D:NBLOCKS * D + 2 * D, :]        # (2D, FC1)
    w2o = wb_ref[NBLOCKS * DFF:NBLOCKS * DFF + FC1, :]      # (FC1, FC2)
    b1o = ovec_ref[NBLOCKS:NBLOCKS + 1, :]                  # (1, FC1)
    b2o = ovec_ref[NBLOCKS + 1:NBLOCKS + 2, 0:FC2]          # (1, FC2)
    w3t = ovec_ref[NBLOCKS + 2:NBLOCKS + 3, 0:FC2]          # (1, FC2)
    b3 = ovec_ref[NBLOCKS + 3:NBLOCKS + 4, 0:1]             # (1, 1)

    cat = jnp.concatenate([x, q_emb], axis=-1)              # (BL, 2D)
    h = jnp.maximum(jnp.dot(cat, w1o, preferred_element_type=jnp.float32) + b1o, 0.0)
    h = jnp.maximum(jnp.dot(h, w2o, preferred_element_type=jnp.float32) + b2o, 0.0)
    # lane-dense final row: (1, FC2) contracted against (BL, FC2) -> (1, BL)
    logit = lax.dot_general(w3t, h, (((1,), (1,)), ((), ())),
                            preferred_element_type=jnp.float32) + b3
    o_ref[...] = 1.0 / (1.0 + jnp.exp(-logit))              # exact sigmoid


# ======================= wrapper ==============================================
def _rep_spec(a):
    nd = a.ndim
    return pl.BlockSpec(a.shape, lambda i, _nd=nd: (0,) * _nd)


def spkt_network(idx, params):
    inputs = (idx, params["emb_q"], params["emb_c_padded"], params["misc"],
              params["attn_rb"], params["rt_zp"], params["hm_full"],
              params["wdd"], params["wa"], params["wb"], params["vecs"],
              params["ovec"])
    out = pl.pallas_call(
        spkt_fused_kernel,
        out_shape=jax.ShapeDtypeStruct((1, BL), jnp.float32),
        grid=(1,),                                   # single step, batch folded
        in_specs=[_rep_spec(a) for a in inputs],
        out_specs=pl.BlockSpec((1, BL), lambda i: (0, 0)),
        compiler_params=pltpu.CompilerParams(dimension_semantics=("arbitrary",)),
    )(*inputs)
    return out.reshape(B, L)


# ======================= parameter construction ===============================
def xavier_w(key, din, dout):
    bound = math.sqrt(6.0 / (din + dout))
    return jax.random.uniform(key, (din, dout), jnp.float32, -bound, bound)


def default_linear(key, din, dout):
    kw, kb = jax.random.split(key)
    bound = 1.0 / math.sqrt(din)
    w = jax.random.uniform(kw, (din, dout), jnp.float32, -bound, bound)
    b = jax.random.uniform(kb, (dout,), jnp.float32, -bound, bound)
    return w, b


def build_params(key):
    keys = iter(jax.random.split(key, 64))
    p = {}
    # embedding tables (nn.Embedding default init: N(0, 1))
    p["emb_q"] = jax.random.normal(next(keys), (N_Q_VOCAB, D), jnp.float32)
    emb_c = jax.random.normal(next(keys), (N_C_VOCAB, D), jnp.float32)
    p["emb_c_padded"] = jnp.concatenate([jnp.zeros((1, D), jnp.float32), emb_c], axis=0)
    dataset_emb = jax.random.normal(next(keys), (N_DATASET, D), jnp.float32)
    qa_emb = jax.random.normal(next(keys), (2, D), jnp.float32)

    # CosinePositionalEmbedding: sin/cos fully overwrite the randn init (D even)
    pos = jnp.arange(MAX_LEN, dtype=jnp.float32)[:, None]
    div = jnp.exp(jnp.arange(0, D, 2, dtype=jnp.float32) * (-math.log(10000.0) / D))
    pe = jnp.zeros((MAX_LEN, D), jnp.float32)
    pe = pe.at[:, 0::2].set(jnp.sin(pos * div)).at[:, 1::2].set(jnp.cos(pos * div))

    # misc embedding pack: [0:20] dataset table, [24:26] qa rows, [32:48] pos tiled
    misc = jnp.zeros((MISC_ROWS, D), jnp.float32)
    misc = misc.at[0:N_DATASET].set(dataset_emb)
    misc = misc.at[MISC_QA].set(qa_emb[0])
    misc = misc.at[MISC_QA + 1].set(qa_emb[1])
    misc = misc.at[MISC_POS:MISC_POS + BL].set(jnp.tile(pe[:L], (B, 1)))
    p["misc"] = misc

    # attention constants (row r = b*NH*L + h*L + l ; col j = b*L + l)
    rr = jnp.arange(BH)
    b_r, h_r, l_r = rr // (NH * L), (rr // L) % NH, rr % L
    jj = jnp.arange(BL)
    b_j, l_j = jj // L, jj % L
    R = (jj[None, :] == (b_r * L + l_r)[:, None]).astype(jnp.float32)      # (BH, BL)
    # allowed iff same batch and strictly past (np.triu(ones,k=0)==0 semantics)
    sbias = jnp.where((b_j[None, :] == b_r[:, None]) & (l_j[None, :] < l_r[:, None]),
                      0.0, NEG).astype(jnp.float32)                        # (BH, BL)
    p["attn_rb"] = jnp.stack([R, sbias])                                   # (2, BH, BL)
    # head recombination with zero_pad (query position 0) folded in
    p["rt_zp"] = (R * (l_r != 0)[:, None].astype(jnp.float32)).T           # (BL, BH)
    dlane = jnp.arange(D)
    p["hm_full"] = ((dlane[None, :] >= (h_r * DK)[:, None]) &
                    (dlane[None, :] < ((h_r + 1) * DK)[:, None])).astype(jnp.float32)

    zeros_d = jnp.zeros((D,), jnp.float32)
    ones_d = jnp.ones((D,), jnp.float32)
    # fold 1/sqrt(dk) into the shared k/q projection: (a*q)·(a*k) == q·k/sqrt(dk)
    scale = float(DK) ** -0.25
    dd, vecs, w1s, b1s, w2s = [], [], [], [], []
    for _ in range(NBLOCKS):
        wk = xavier_w(next(keys), D, D) * scale    # k_linear (xavier weight, bias 0)
        wv = xavier_w(next(keys), D, D)            # v_linear (xavier weight, bias 0)
        wo, _ = default_linear(next(keys), D, D)   # out_proj (default weight, bias 0)
        w1, b1 = default_linear(next(keys), D, DFF)
        w2, b2 = default_linear(next(keys), DFF, D)
        dd.append(jnp.stack([wk, wv, wo]))
        # rows: bk (zero, scale-fold irrelevant), bv, bo, g1, beta1, b2, g2, beta2
        vecs.append(jnp.stack([zeros_d, zeros_d, zeros_d, ones_d, zeros_d,
                               b2, ones_d, zeros_d]))
        w1s.append(w1)
        b1s.append(b1)
        w2s.append(w2)

    # output MLP: Linear(2D, FC1) -> ReLU -> Linear(FC1, FC2) -> ReLU -> Linear(FC2, 1)
    ow1, ob1 = default_linear(next(keys), 2 * D, FC1)
    ow2, ob2 = default_linear(next(keys), FC1, FC2)
    ow3, ob3 = default_linear(next(keys), FC2, 1)

    def pad_fc1(v):
        return jnp.concatenate([v, jnp.zeros((FC1 - v.shape[0],), jnp.float32)])

    # packed weight bundles (relies on DFF == FC1 and D == FC2)
    p["wdd"] = jnp.stack(dd)                                    # (NBLOCKS, 3, D, D)
    p["vecs"] = jnp.stack(vecs)                                 # (NBLOCKS, 8, D)
    p["wa"] = jnp.concatenate(w1s + [ow1], axis=0)              # (NBLOCKS*D + 2D, FC1)
    p["wb"] = jnp.concatenate(w2s + [ow2], axis=0)              # (NBLOCKS*DFF + FC1, FC2)
    p["ovec"] = jnp.stack(b1s + [ob1, pad_fc1(ob2), pad_fc1(ow3[:, 0]), pad_fc1(ob3),
                                 jnp.zeros((FC1,), jnp.float32),
                                 jnp.zeros((FC1,), jnp.float32)])   # (8, FC1)
    return p


# ======================= SPKT forward (emb_type='qid', eval) ==================
def spkt_forward(params, q, c, r, qshft, cshft, rshft, dataset_id):
    # tiny int32 index prep only — all float work happens inside the kernel
    pid_data = jnp.concatenate([q[:, 0:1], qshft], axis=1)          # (B, L)
    q_data = jnp.concatenate([c[:, 0:1, :], cshft], axis=1)         # (B, L, NC)
    target = jnp.concatenate([r[:, 0:1], rshft], axis=1)            # (B, L)

    related = (q_data + 1).reshape(B * L, NC)                       # -1 pad -> 0
    ds = jnp.broadcast_to(dataset_id[:, None], (B, L)).reshape(B * L, 1)
    idx = jnp.concatenate(
        [pid_data.reshape(B * L, 1), target.reshape(B * L, 1), ds, related],
        axis=1).astype(jnp.int32)                                   # (BL, 3 + NC)
    return spkt_network(idx, params)                                # (B, L)


# ======================= main =================================================
if __name__ == "__main__":
    key = jax.random.PRNGKey(0)
    kp, kd = jax.random.split(key)
    params = build_params(kp)

    ks = jax.random.split(kd, 8)
    q = jax.random.randint(ks[0], (B, S), 0, N_Q_VOCAB)
    qshft = jax.random.randint(ks[1], (B, S), 0, N_Q_VOCAB)
    c = jax.random.randint(ks[2], (B, S, NC), -1, N_C_VOCAB)        # -1 == pad concept
    cshft = jax.random.randint(ks[3], (B, S, NC), -1, N_C_VOCAB)
    r = jax.random.randint(ks[4], (B, S), 0, 2)
    rshft = jax.random.randint(ks[5], (B, S), 0, 2)
    dataset_id = jax.random.randint(ks[6], (B,), 0, N_DATASET)

    preds = jax.jit(spkt_forward)(params, q, c, r, qshft, cshft, rshft, dataset_id)
    preds = jax.block_until_ready(preds)

    assert preds.shape == (B, L), preds.shape
    assert bool(jnp.all(jnp.isfinite(preds)))
    assert bool(jnp.all((preds >= 0.0) & (preds <= 1.0)))
    print("KERNEL_OK")
</pallas_src>

<mosaic_0001>
module attributes {stable_mosaic.version = 11 : i64} {
  func.func @spkt_fused_kernel(%arg0: i32, %arg1: memref<16x6xi32, #tpu.memory_space<vmem>>, %arg2: memref<1000x32xf32, #tpu.memory_space<vmem>>, %arg3: memref<1001x32xf32, #tpu.memory_space<vmem>>, %arg4: memref<48x32xf32, #tpu.memory_space<vmem>>, %arg5: memref<2x128x16xf32, #tpu.memory_space<vmem>>, %arg6: memref<16x128xf32, #tpu.memory_space<vmem>>, %arg7: memref<128x32xf32, #tpu.memory_space<vmem>>, %arg8: memref<2x3x32x32xf32, #tpu.memory_space<vmem>>, %arg9: memref<128x64xf32, #tpu.memory_space<vmem>>, %arg10: memref<192x32xf32, #tpu.memory_space<vmem>>, %arg11: memref<2x8x32xf32, #tpu.memory_space<vmem>>, %arg12: memref<8x64xf32, #tpu.memory_space<vmem>>, %arg13: memref<1x16xf32, #tpu.memory_space<vmem>>) attributes {dimension_semantics = [#tpu.dimension_semantics<arbitrary>], iteration_bounds = array<i64: 1>, scalar_prefetch = 0 : i64, scratch_operands = 0 : i64, tpu.core_type = #tpu.core_type<tc>, window_params = [{pipeline_mode = #tpu.pipeline_mode<synchronous>, transform_indices = @transform_0, window_bounds = array<i64: 16, 6>}, {pipeline_mode = #tpu.pipeline_mode<synchronous>, transform_indices = @transform_1, window_bounds = array<i64: 1000, 32>}, {pipeline_mode = #tpu.pipeline_mode<synchronous>, transform_indices = @transform_2, window_bounds = array<i64: 1001, 32>}, {pipeline_mode = #tpu.pipeline_mode<synchronous>, transform_indices = @transform_3, window_bounds = array<i64: 48, 32>}, {pipeline_mode = #tpu.pipeline_mode<synchronous>, transform_indices = @transform_4, window_bounds = array<i64: 2, 128, 16>}, {pipeline_mode = #tpu.pipeline_mode<synchronous>, transform_indices = @transform_5, window_bounds = array<i64: 16, 128>}, {pipeline_mode = #tpu.pipeline_mode<synchronous>, transform_indices = @transform_6, window_bounds = array<i64: 128, 32>}, {pipeline_mode = #tpu.pipeline_mode<synchronous>, transform_indices = @transform_7, window_bounds = array<i64: 2, 3, 32, 32>}, {pipeline_mode = #tpu.pipeline_mode<synchronous>, transform_indices = @transform_8, window_bounds = array<i64: 128, 64>}, {pipeline_mode = #tpu.pipeline_mode<synchronous>, transform_indices = @transform_9, window_bounds = array<i64: 192, 32>}, {pipeline_mode = #tpu.pipeline_mode<synchronous>, transform_indices = @transform_10, window_bounds = array<i64: 2, 8, 32>}, {pipeline_mode = #tpu.pipeline_mode<synchronous>, transform_indices = @transform_11, window_bounds = array<i64: 8, 64>}, {pipeline_mode = #tpu.pipeline_mode<synchronous>, transform_indices = @transform_12, window_bounds = array<i64: 1, 16>}]} {
    %c0 = arith.constant 0 : index
    %c0_0 = arith.constant 0 : index
    %0 = vector.load %arg1[%c0, %c0_0] : memref<16x6xi32, #tpu.memory_space<vmem>>, vector<16x6xi32>
    %1 = vector.extract_strided_slice %0 {offsets = [0, 0], sizes = [16, 1], strides = [1, 1]} : vector<16x6xi32> to vector<16x1xi32>
    %2 = vector.extract_strided_slice %0 {offsets = [0, 1], sizes = [16, 1], strides = [1, 1]} : vector<16x6xi32> to vector<16x1xi32>
    %3 = vector.extract_strided_slice %0 {offsets = [0, 2], sizes = [16, 1], strides = [1, 1]} : vector<16x6xi32> to vector<16x1xi32>
    %4 = vector.extract_strided_slice %0 {offsets = [0, 3], sizes = [16, 3], strides = [1, 1]} : vector<16x6xi32> to vector<16x3xi32>
    %5 = tpu.iota {dimensions = array<i32: 1>} : vector<16x1000xi32>
    %6 = vector.broadcast %1 : vector<16x1xi32> to vector<16x1000xi32>
    %7 = arith.cmpi eq, %5, %6 : vector<16x1000xi32>
    %8 = arith.extui %7 : vector<16x1000xi1> to vector<16x1000xi32>
    %9 = arith.sitofp %8 : vector<16x1000xi32> to vector<16x1000xf32>
    %c0_1 = arith.constant 0 : index
    %c0_2 = arith.constant 0 : index
    %10 = vector.load %arg2[%c0_1, %c0_2] : memref<1000x32xf32, #tpu.memory_space<vmem>>, vector<1000x32xf32>
    %cst = arith.constant dense<0.000000e+00> : vector<16x32xf32>
    %11 = tpu.matmul %9, %10, %cst {dimension_numbers = #tpu.dot_dimension_numbers<[1], [0], [0], [1], [0, 0, 1, 1], [], []>} : vector<16x1000xf32>, vector<1000x32xf32>, vector<16x32xf32> -> vector<16x32xf32>
    %12 = tpu.iota {dimensions = array<i32: 1>} : vector<16x1001xi32>
    %13 = vector.extract_strided_slice %4 {offsets = [0, 0], sizes = [16, 1], strides = [1, 1]} : vector<16x3xi32> to vector<16x1xi32>
    %14 = vector.broadcast %13 : vector<16x1xi32> to vector<16x1001xi32>
    %15 = arith.cmpi eq, %12, %14 : vector<16x1001xi32>
    %16 = arith.extui %15 : vector<16x1001xi1> to vector<16x1001xi32>
    %17 = arith.sitofp %16 : vector<16x1001xi32> to vector<16x1001xf32>
    %18 = vector.extract_strided_slice %4 {offsets = [0, 0], sizes = [16, 1], strides = [1, 1]} : vector<16x3xi32> to vector<16x1xi32>
    %c0_i32 = arith.constant 0 : i32
    %19 = vector.broadcast %c0_i32 : i32 to vector<16x1xi32>
    %20 = arith.cmpi ne, %18, %19 : vector<16x1xi32>
    %21 = arith.extui %20 : vector<16x1xi1> to vector<16x1xi32>
    %22 = arith.sitofp %21 : vector<16x1xi32> to vector<16x1xf32>
    %23 = vector.extract_strided_slice %4 {offsets = [0, 1], sizes = [16, 1], strides = [1, 1]} : vector<16x3xi32> to vector<16x1xi32>
    %24 = vector.broadcast %23 : vector<16x1xi32> to vector<16x1001xi32>
    %25 = arith.cmpi eq, %12, %24 : vector<16x1001xi32>
    %26 = arith.extui %25 : vector<16x1001xi1> to vector<16x1001xi32>
    %27 = arith.sitofp %26 : vector<16x1001xi32> to vector<16x1001xf32>
    %28 = arith.addf %17, %27 : vector<16x1001xf32>
    %29 = vector.extract_strided_slice %4 {offsets = [0, 1], sizes = [16, 1], strides = [1, 1]} : vector<16x3xi32> to vector<16x1xi32>
    %c0_i32_3 = arith.constant 0 : i32
    %30 = vector.broadcast %c0_i32_3 : i32 to vector<16x1xi32>
    %31 = arith.cmpi ne, %29, %30 : vector<16x1xi32>
    %32 = arith.extui %31 : vector<16x1xi1> to vector<16x1xi32>
    %33 = arith.sitofp %32 : vector<16x1xi32> to vector<16x1xf32>
    %34 = arith.addf %22, %33 : vector<16x1xf32>
    %35 = vector.extract_strided_slice %4 {offsets = [0, 2], sizes = [16, 1], strides = [1, 1]} : vector<16x3xi32> to vector<16x1xi32>
    %36 = vector.broadcast %35 : vector<16x1xi32> to vector<16x1001xi32>
    %37 = arith.cmpi eq, %12, %36 : vector<16x1001xi32>
    %38 = arith.extui %37 : vector<16x1001xi1> to vector<16x1001xi32>
    %39 = arith.sitofp %38 : vector<16x1001xi32> to vector<16x1001xf32>
    %40 = arith.addf %28, %39 : vector<16x1001xf32>
    %41 = vector.extract_strided_slice %4 {offsets = [0, 2], sizes = [16, 1], strides = [1, 1]} : vector<16x3xi32> to vector<16x1xi32>
    %c0_i32_4 = arith.constant 0 : i32
    %42 = vector.broadcast %c0_i32_4 : i32 to vector<16x1xi32>
    %43 = arith.cmpi ne, %41, %42 : vector<16x1xi32>
    %44 = arith.extui %43 : vector<16x1xi1> to vector<16x1xi32>
    %45 = arith.sitofp %44 : vector<16x1xi32> to vector<16x1xf32>
    %46 = arith.addf %34, %45 : vector<16x1xf32>
    %c0_5 = arith.constant 0 : index
    %c0_6 = arith.constant 0 : index
    %47 = vector.load %arg3[%c0_5, %c0_6] : memref<1001x32xf32, #tpu.memory_space<vmem>>, vector<1001x32xf32>
    %cst_7 = arith.constant dense<0.000000e+00> : vector<16x32xf32>
    %48 = tpu.matmul %40, %47, %cst_7 {dimension_numbers = #tpu.dot_dimension_numbers<[1], [0], [0], [1], [0, 0, 1, 1], [], []>} : vector<16x1001xf32>, vector<1001x32xf32>, vector<16x32xf32> -> vector<16x32xf32>
    %cst_8 = arith.constant 1.000000e+00 : f32
    %49 = vector.broadcast %cst_8 : f32 to vector<16x1xf32>
    %50 = arith.maximumf %46, %49 : vector<16x1xf32>
    %51 = vector.broadcast %50 : vector<16x1xf32> to vector<16x32xf32>
    %52 = arith.divf %48, %51 : vector<16x32xf32>
    %53 = tpu.iota {dimensions = array<i32: 1>} : vector<16x20xi32>
    %54 = vector.broadcast %3 : vector<16x1xi32> to vector<16x20xi32>
    %55 = arith.cmpi eq, %53, %54 : vector<16x20xi32>
    %56 = arith.extui %55 : vector<16x20xi1> to vector<16x20xi32>
    %57 = arith.sitofp %56 : vector<16x20xi32> to vector<16x20xf32>
    %c0_9 = arith.constant 0 : index
    %c0_10 = arith.constant 0 : index
    %58 = vector.load %arg4[%c0_9, %c0_10] : memref<48x32xf32, #tpu.memory_space<vmem>>, vector<20x32xf32>
    %cst_11 = arith.constant dense<0.000000e+00> : vector<16x32xf32>
    %59 = tpu.matmul %57, %58, %cst_11 {dimension_numbers = #tpu.dot_dimension_numbers<[1], [0], [0], [1], [0, 0, 1, 1], [], []>} : vector<16x20xf32>, vector<20x32xf32>, vector<16x32xf32> -> vector<16x32xf32>
    %60 = arith.sitofp %2 : vector<16x1xi32> to vector<16x1xf32>
    %c24 = arith.constant 24 : index
    %c0_12 = arith.constant 0 : index
    %61 = vector.load %arg4[%c24, %c0_12] : memref<48x32xf32, #tpu.memory_space<vmem>>, vector<1x32xf32>
    %cst_13 = arith.constant 1.000000e+00 : f32
    %62 = vector.broadcast %cst_13 : f32 to vector<16x1xf32>
    %63 = arith.subf %62, %60 : vector<16x1xf32>
    %64 = vector.broadcast %61 : vector<1x32xf32> to vector<16x32xf32>
    %65 = vector.broadcast %63 : vector<16x1xf32> to vector<16x32xf32>
    %66 = arith.mulf %64, %65 : vector<16x32xf32>
    %c25 = arith.constant 25 : index
    %c0_14 = arith.constant 0 : index
    %67 = vector.load %arg4[%c25, %c0_14] : memref<48x32xf32, #tpu.memory_space<vmem>>, vector<1x32xf32>
    %68 = vector.broadcast %67 : vector<1x32xf32> to vector<16x32xf32>
    %69 = vector.broadcast %60 : vector<16x1xf32> to vector<16x32xf32>
    %70 = arith.mulf %68, %69 : vector<16x32xf32>
    %71 = arith.addf %66, %70 : vector<16x32xf32>
    %c32 = arith.constant 32 : index
    %c0_15 = arith.constant 0 : index
    %72 = vector.load %arg4[%c32, %c0_15] : memref<48x32xf32, #tpu.memory_space<vmem>>, vector<16x32xf32>
    %73 = arith.addf %11, %52 : vector<16x32xf32>
    %74 = arith.addf %73, %59 : vector<16x32xf32>
    %75 = arith.addf %74, %72 : vector<16x32xf32>
    %76 = arith.addf %75, %71 : vector<16x32xf32>
    %c0_16 = arith.constant 0 : index
    %c0_17 = arith.constant 0 : index
    %c0_18 = arith.constant 0 : index
    %77 = vector.load %arg5[%c0_16, %c0_17, %c0_18] : memref<2x128x16xf32, #tpu.memory_space<vmem>>, vector<1x128x16xf32>
    %78 = vector.shape_cast %77 : vector<1x128x16xf32> to vector<128x16xf32>
    %c1 = arith.constant 1 : index
    %c0_19 = arith.constant 0 : index
    %c0_20 = arith.constant 0 : index
    %79 = vector.load %arg5[%c1, %c0_19, %c0_20] : memref<2x128x16xf32, #tpu.memory_space<vmem>>, vector<1x128x16xf32>
    %80 = vector.shape_cast %79 : vector<1x128x16xf32> to vector<128x16xf32>
    %c0_21 = arith.constant 0 : index
    %c0_22 = arith.constant 0 : index
    %81 = vector.load %arg6[%c0_21, %c0_22] : memref<16x128xf32, #tpu.memory_space<vmem>>, vector<16x128xf32>
    %c0_23 = arith.constant 0 : index
    %c0_24 = arith.constant 0 : index
    %82 = vector.load %arg7[%c0_23, %c0_24] : memref<128x32xf32, #tpu.memory_space<vmem>>, vector<128x32xf32>
    %c0_25 = arith.constant 0 : index
    %c0_26 = arith.constant 0 : index
    %c0_27 = arith.constant 0 : index
    %c0_28 = arith.constant 0 : index
    %83 = vector.load %arg8[%c0_25, %c0_26, %c0_27, %c0_28] : memref<2x3x32x32xf32, #tpu.memory_space<vmem>>, vector<1x1x32x32xf32>
    %84 = vector.shape_cast %83 : vector<1x1x32x32xf32> to vector<32x32xf32>
    %c0_29 = arith.constant 0 : index
    %c1_30 = arith.constant 1 : index
    %c0_31 = arith.constant 0 : index
    %c0_32 = arith.constant 0 : index
    %85 = vector.load %arg8[%c0_29, %c1_30, %c0_31, %c0_32] : memref<2x3x32x32xf32, #tpu.memory_space<vmem>>, vector<1x1x32x32xf32>
    %86 = vector.shape_cast %85 : vector<1x1x32x32xf32> to vector<32x32xf32>
    %c0_33 = arith.constant 0 : index
    %c2 = arith.constant 2 : index
    %c0_34 = arith.constant 0 : index
    %c0_35 = arith.constant 0 : index
    %87 = vector.load %arg8[%c0_33, %c2, %c0_34, %c0_35] : memref<2x3x32x32xf32, #tpu.memory_space<vmem>>, vector<1x1x32x32xf32>
    %88 = vector.shape_cast %87 : vector<1x1x32x32xf32> to vector<32x32xf32>
    %c0_36 = arith.constant 0 : index
    %c0_37 = arith.constant 0 : index
    %c0_38 = arith.constant 0 : index
    %89 = vector.load %arg11[%c0_36, %c0_37, %c0_38] : memref<2x8x32xf32, #tpu.memory_space<vmem>>, vector<1x8x32xf32>
    %90 = vector.shape_cast %89 : vector<1x8x32xf32> to vector<8x32xf32>
    %91 = vector.extract_strided_slice %90 {offsets = [0, 0], sizes = [1, 32], strides = [1, 1]} : vector<8x32xf32> to vector<1x32xf32>
    %92 = vector.extract_strided_slice %90 {offsets = [1, 0], sizes = [1, 32], strides = [1, 1]} : vector<8x32xf32> to vector<1x32xf32>
    %93 = vector.extract_strided_slice %90 {offsets = [2, 0], sizes = [1, 32], strides = [1, 1]} : vector<8x32xf32> to vector<1x32xf32>
    %94 = vector.extract_strided_slice %90 {offsets = [3, 0], sizes = [1, 32], strides = [1, 1]} : vector<8x32xf32> to vector<1x32xf32>
    %95 = vector.extract_strided_slice %90 {offsets = [4, 0], sizes = [1, 32], strides = [1, 1]} : vector<8x32xf32> to vector<1x32xf32>
    %96 = vector.extract_strided_slice %90 {offsets = [5, 0], sizes = [1, 32], strides = [1, 1]} : vector<8x32xf32> to vector<1x32xf32>
    %97 = vector.extract_strided_slice %90 {offsets = [6, 0], sizes = [1, 32], strides = [1, 1]} : vector<8x32xf32> to vector<1x32xf32>
    %98 = vector.extract_strided_slice %90 {offsets = [7, 0], sizes = [1, 32], strides = [1, 1]} : vector<8x32xf32> to vector<1x32xf32>
    %c0_39 = arith.constant 0 : index
    %c0_40 = arith.constant 0 : index
    %99 = vector.load %arg9[%c0_39, %c0_40] : memref<128x64xf32, #tpu.memory_space<vmem>>, vector<32x64xf32>
    %c0_41 = arith.constant 0 : index
    %c0_42 = arith.constant 0 : index
    %100 = vector.load %arg10[%c0_41, %c0_42] : memref<192x32xf32, #tpu.memory_space<vmem>>, vector<64x32xf32>
    %c0_43 = arith.constant 0 : index
    %c0_44 = arith.constant 0 : index
    %101 = vector.load %arg12[%c0_43, %c0_44] : memref<8x64xf32, #tpu.memory_space<vmem>>, vector<1x64xf32>
    %cst_45 = arith.constant dense<0.000000e+00> : vector<16x32xf32>
    %102 = tpu.matmul %75, %84, %cst_45 {dimension_numbers = #tpu.dot_dimension_numbers<[1], [0], [0], [1], [0, 0, 1, 1], [], []>} : vector<16x32xf32>, vector<32x32xf32>, vector<16x32xf32> -> vector<16x32xf32>
    %103 = vector.broadcast %91 : vector<1x32xf32> to vector<16x32xf32>
    %104 = arith.addf %102, %103 : vector<16x32xf32>
    %cst_46 = arith.constant dense<0.000000e+00> : vector<16x32xf32>
    %105 = tpu.matmul %76, %86, %cst_46 {dimension_numbers = #tpu.dot_dimension_numbers<[1], [0], [0], [1], [0, 0, 1, 1], [], []>} : vector<16x32xf32>, vector<32x32xf32>, vector<16x32xf32> -> vector<16x32xf32>
    %106 = vector.broadcast %92 : vector<1x32xf32> to vector<16x32xf32>
    %107 = arith.addf %105, %106 : vector<16x32xf32>
    %cst_47 = arith.constant dense<0.000000e+00> : vector<128x32xf32>
    %108 = tpu.matmul %78, %104, %cst_47 {dimension_numbers = #tpu.dot_dimension_numbers<[1], [0], [0], [1], [0, 0, 1, 1], [], []>} : vector<128x16xf32>, vector<16x32xf32>, vector<128x32xf32> -> vector<128x32xf32>
    %109 = arith.mulf %108, %82 : vector<128x32xf32>
    %cst_48 = arith.constant dense<0.000000e+00> : vector<128x16xf32>
    %110 = tpu.matmul %109, %104, %cst_48 {dimension_numbers = #tpu.dot_dimension_numbers<[1], [1], [0], [0], [0, 0, 1, 0], [], []>} : vector<128x32xf32>, vector<16x32xf32>, vector<128x16xf32> -> vector<128x16xf32>
    %111 = arith.addf %110, %80 : vector<128x16xf32>
    %cst_49 = arith.constant dense<0xFF800000> : vector<128xf32>
    %112 = vector.multi_reduction <maximumf>, %111, %cst_49 [1] : vector<128x16xf32> to vector<128xf32>
    %113 = vector.shape_cast %112 : vector<128xf32> to vector<128x1xf32>
    %114 = vector.broadcast %113 : vector<128x1xf32> to vector<128x16xf32>
    %115 = arith.subf %111, %114 : vector<128x16xf32>
    %116 = math.exp %115 : vector<128x16xf32>
    %cst_50 = arith.constant dense<0.000000e+00> : vector<128xf32>
    %117 = vector.multi_reduction <add>, %116, %cst_50 [1] : vector<128x16xf32> to vector<128xf32>
    %118 = vector.shape_cast %117 : vector<128xf32> to vector<128x1xf32>
    %119 = vector.broadcast %118 : vector<128x1xf32> to vector<128x16xf32>
    %120 = arith.divf %116, %119 : vector<128x16xf32>
    %cst_51 = arith.constant dense<0.000000e+00> : vector<128x32xf32>
    %121 = tpu.matmul %120, %107, %cst_51 {dimension_numbers = #tpu.dot_dimension_numbers<[1], [0], [0], [1], [0, 0, 1, 1], [], []>} : vector<128x16xf32>, vector<16x32xf32>, vector<128x32xf32> -> vector<128x32xf32>
    %122 = arith.mulf %121, %82 : vector<128x32xf32>
    %cst_52 = arith.constant dense<0.000000e+00> : vector<16x32xf32>
    %123 = tpu.matmul %81, %122, %cst_52 {dimension_numbers = #tpu.dot_dimension_numbers<[1], [0], [0], [1], [0, 0, 1, 1], [], []>} : vector<16x128xf32>, vector<128x32xf32>, vector<16x32xf32> -> vector<16x32xf32>
    %cst_53 = arith.constant dense<0.000000e+00> : vector<16x32xf32>
    %124 = tpu.matmul %123, %88, %cst_53 {dimension_numbers = #tpu.dot_dimension_numbers<[1], [0], [0], [1], [0, 0, 1, 1], [], []>} : vector<16x32xf32>, vector<32x32xf32>, vector<16x32xf32> -> vector<16x32xf32>
    %125 = vector.broadcast %93 : vector<1x32xf32> to vector<16x32xf32>
    %126 = arith.addf %124, %125 : vector<16x32xf32>
    %127 = arith.addf %75, %126 : vector<16x32xf32>
    %cst_54 = arith.constant dense<0.000000e+00> : vector<16xf32>
    %128 = vector.multi_reduction <add>, %127, %cst_54 [1] : vector<16x32xf32> to vector<16xf32>
    %129 = vector.shape_cast %128 : vector<16xf32> to vector<16x1xf32>
    %cst_55 = arith.constant 3.200000e+01 : f32
    %130 = vector.broadcast %cst_55 : f32 to vector<16x1xf32>
    %131 = arith.divf %129, %130 : vector<16x1xf32>
    %132 = vector.broadcast %131 : vector<16x1xf32> to vector<16x32xf32>
    %133 = arith.subf %127, %132 : vector<16x32xf32>
    %134 = arith.mulf %133, %133 : vector<16x32xf32>
    %cst_56 = arith.constant dense<0.000000e+00> : vector<16xf32>
    %135 = vector.multi_reduction <add>, %134, %cst_56 [1] : vector<16x32xf32> to vector<16xf32>
    %136 = vector.shape_cast %135 : vector<16xf32> to vector<16x1xf32>
    %cst_57 = arith.constant 3.200000e+01 : f32
    %137 = vector.broadcast %cst_57 : f32 to vector<16x1xf32>
    %138 = arith.divf %136, %137 : vector<16x1xf32>
    %139 = vector.broadcast %131 : vector<16x1xf32> to vector<16x32xf32>
    %140 = arith.subf %127, %139 : vector<16x32xf32>
    %cst_58 = arith.constant 9.99999974E-6 : f32
    %141 = vector.broadcast %cst_58 : f32 to vector<16x1xf32>
    %142 = arith.addf %138, %141 : vector<16x1xf32>
    %143 = math.rsqrt %142 : vector<16x1xf32>
    %144 = vector.broadcast %143 : vector<16x1xf32> to vector<16x32xf32>
    %145 = arith.mulf %140, %144 : vector<16x32xf32>
    %146 = vector.broadcast %94 : vector<1x32xf32> to vector<16x32xf32>
    %147 = arith.mulf %145, %146 : vector<16x32xf32>
    %148 = vector.broadcast %95 : vector<1x32xf32> to vector<16x32xf32>
    %149 = arith.addf %147, %148 : vector<16x32xf32>
    %cst_59 = arith.constant dense<0.000000e+00> : vector<16x64xf32>
    %150 = tpu.matmul %149, %99, %cst_59 {dimension_numbers = #tpu.dot_dimension_numbers<[1], [0], [0], [1], [0, 0, 1, 1], [], []>} : vector<16x32xf32>, vector<32x64xf32>, vector<16x64xf32> -> vector<16x64xf32>
    %151 = vector.broadcast %101 : vector<1x64xf32> to vector<16x64xf32>
    %152 = arith.addf %150, %151 : vector<16x64xf32>
    %cst_60 = arith.constant 0.000000e+00 : f32
    %153 = vector.broadcast %cst_60 : f32 to vector<16x64xf32>
    %154 = arith.maximumf %152, %153 : vector<16x64xf32>
    %cst_61 = arith.constant dense<0.000000e+00> : vector<16x32xf32>
    %155 = tpu.matmul %154, %100, %cst_61 {dimension_numbers = #tpu.dot_dimension_numbers<[1], [0], [0], [1], [0, 0, 1, 1], [], []>} : vector<16x64xf32>, vector<64x32xf32>, vector<16x32xf32> -> vector<16x32xf32>
    %156 = vector.broadcast %96 : vector<1x32xf32> to vector<16x32xf32>
    %157 = arith.addf %155, %156 : vector<16x32xf32>
    %158 = arith.addf %149, %157 : vector<16x32xf32>
    %cst_62 = arith.constant dense<0.000000e+00> : vector<16xf32>
    %159 = vector.multi_reduction <add>, %158, %cst_62 [1] : vector<16x32xf32> to vector<16xf32>
    %160 = vector.shape_cast %159 : vector<16xf32> to vector<16x1xf32>
    %cst_63 = arith.constant 3.200000e+01 : f32
    %161 = vector.broadcast %cst_63 : f32 to vector<16x1xf32>
    %162 = arith.divf %160, %161 : vector<16x1xf32>
    %163 = vector.broadcast %162 : vector<16x1xf32> to vector<16x32xf32>
    %164 = arith.subf %158, %163 : vector<16x32xf32>
    %165 = arith.mulf %164, %164 : vector<16x32xf32>
    %cst_64 = arith.constant dense<0.000000e+00> : vector<16xf32>
    %166 = vector.multi_reduction <add>, %165, %cst_64 [1] : vector<16x32xf32> to vector<16xf32>
    %167 = vector.shape_cast %166 : vector<16xf32> to vector<16x1xf32>
    %cst_65 = arith.constant 3.200000e+01 : f32
    %168 = vector.broadcast %cst_65 : f32 to vector<16x1xf32>
    %169 = arith.divf %167, %168 : vector<16x1xf32>
    %170 = vector.broadcast %162 : vector<16x1xf32> to vector<16x32xf32>
    %171 = arith.subf %158, %170 : vector<16x32xf32>
    %cst_66 = arith.constant 9.99999974E-6 : f32
    %172 = vector.broadcast %cst_66 : f32 to vector<16x1xf32>
    %173 = arith.addf %169, %172 : vector<16x1xf32>
    %174 = math.rsqrt %173 : vector<16x1xf32>
    %175 = vector.broadcast %174 : vector<16x1xf32> to vector<16x32xf32>
    %176 = arith.mulf %171, %175 : vector<16x32xf32>
    %177 = vector.broadcast %97 : vector<1x32xf32> to vector<16x32xf32>
    %178 = arith.mulf %176, %177 : vector<16x32xf32>
    %179 = vector.broadcast %98 : vector<1x32xf32> to vector<16x32xf32>
    %180 = arith.addf %178, %179 : vector<16x32xf32>
    %c1_67 = arith.constant 1 : index
    %c0_68 = arith.constant 0 : index
    %c0_69 = arith.constant 0 : index
    %c0_70 = arith.constant 0 : index
    %181 = vector.load %arg8[%c1_67, %c0_68, %c0_69, %c0_70] : memref<2x3x32x32xf32, #tpu.memory_space<vmem>>, vector<1x1x32x32xf32>
    %182 = vector.shape_cast %181 : vector<1x1x32x32xf32> to vector<32x32xf32>
    %c1_71 = arith.constant 1 : index
    %c1_72 = arith.constant 1 : index
    %c0_73 = arith.constant 0 : index
    %c0_74 = arith.constant 0 : index
    %183 = vector.load %arg8[%c1_71, %c1_72, %c0_73, %c0_74] : memref<2x3x32x32xf32, #tpu.memory_space<vmem>>, vector<1x1x32x32xf32>
    %184 = vector.shape_cast %183 : vector<1x1x32x32xf32> to vector<32x32xf32>
    %c1_75 = arith.constant 1 : index
    %c2_76 = arith.constant 2 : index
    %c0_77 = arith.constant 0 : index
    %c0_78 = arith.constant 0 : index
    %185 = vector.load %arg8[%c1_75, %c2_76, %c0_77, %c0_78] : memref<2x3x32x32xf32, #tpu.memory_space<vmem>>, vector<1x1x32x32xf32>
    %186 = vector.shape_cast %185 : vector<1x1x32x32xf32> to vector<32x32xf32>
    %c1_79 = arith.constant 1 : index
    %c0_80 = arith.constant 0 : index
    %c0_81 = arith.constant 0 : index
    %187 = vector.load %arg11[%c1_79, %c0_80, %c0_81] : memref<2x8x32xf32, #tpu.memory_space<vmem>>, vector<1x8x32xf32>
    %188 = vector.shape_cast %187 : vector<1x8x32xf32> to vector<8x32xf32>
    %189 = vector.extract_strided_slice %188 {offsets = [0, 0], sizes = [1, 32], strides = [1, 1]} : vector<8x32xf32> to vector<1x32xf32>
    %190 = vector.extract_strided_slice %188 {offsets = [1, 0], sizes = [1, 32], strides = [1, 1]} : vector<8x32xf32> to vector<1x32xf32>
    %191 = vector.extract_strided_slice %188 {offsets = [2, 0], sizes = [1, 32], strides = [1, 1]} : vector<8x32xf32> to vector<1x32xf32>
    %192 = vector.extract_strided_slice %188 {offsets = [3, 0], sizes = [1, 32], strides = [1, 1]} : vector<8x32xf32> to vector<1x32xf32>
    %193 = vector.extract_strided_slice %188 {offsets = [4, 0], sizes = [1, 32], strides = [1, 1]} : vector<8x32xf32> to vector<1x32xf32>
    %194 = vector.extract_strided_slice %188 {offsets = [5, 0], sizes = [1, 32], strides = [1, 1]} : vector<8x32xf32> to vector<1x32xf32>
    %195 = vector.extract_strided_slice %188 {offsets = [6, 0], sizes = [1, 32], strides = [1, 1]} : vector<8x32xf32> to vector<1x32xf32>
    %196 = vector.extract_strided_slice %188 {offsets = [7, 0], sizes = [1, 32], strides = [1, 1]} : vector<8x32xf32> to vector<1x32xf32>
    %c32_82 = arith.constant 32 : index
    %c0_83 = arith.constant 0 : index
    %197 = vector.load %arg9[%c32_82, %c0_83] : memref<128x64xf32, #tpu.memory_space<vmem>>, vector<32x64xf32>
    %c64 = arith.constant 64 : index
    %c0_84 = arith.constant 0 : index
    %198 = vector.load %arg10[%c64, %c0_84] : memref<192x32xf32, #tpu.memory_space<vmem>>, vector<64x32xf32>
    %c1_85 = arith.constant 1 : index
    %c0_86 = arith.constant 0 : index
    %199 = vector.load %arg12[%c1_85, %c0_86] : memref<8x64xf32, #tpu.memory_space<vmem>>, vector<1x64xf32>
    %cst_87 = arith.constant dense<0.000000e+00> : vector<16x32xf32>
    %200 = tpu.matmul %180, %182, %cst_87 {dimension_numbers = #tpu.dot_dimension_numbers<[1], [0], [0], [1], [0, 0, 1, 1], [], []>} : vector<16x32xf32>, vector<32x32xf32>, vector<16x32xf32> -> vector<16x32xf32>
    %201 = vector.broadcast %189 : vector<1x32xf32> to vector<16x32xf32>
    %202 = arith.addf %200, %201 : vector<16x32xf32>
    %cst_88 = arith.constant dense<0.000000e+00> : vector<16x32xf32>
    %203 = tpu.matmul %76, %184, %cst_88 {dimension_numbers = #tpu.dot_dimension_numbers<[1], [0], [0], [1], [0, 0, 1, 1], [], []>} : vector<16x32xf32>, vector<32x32xf32>, vector<16x32xf32> -> vector<16x32xf32>
    %204 = vector.broadcast %190 : vector<1x32xf32> to vector<16x32xf32>
    %205 = arith.addf %203, %204 : vector<16x32xf32>
    %cst_89 = arith.constant dense<0.000000e+00> : vector<128x32xf32>
    %206 = tpu.matmul %78, %202, %cst_89 {dimension_numbers = #tpu.dot_dimension_numbers<[1], [0], [0], [1], [0, 0, 1, 1], [], []>} : vector<128x16xf32>, vector<16x32xf32>, vector<128x32xf32> -> vector<128x32xf32>
    %207 = arith.mulf %206, %82 : vector<128x32xf32>
    %cst_90 = arith.constant dense<0.000000e+00> : vector<128x16xf32>
    %208 = tpu.matmul %207, %202, %cst_90 {dimension_numbers = #tpu.dot_dimension_numbers<[1], [1], [0], [0], [0, 0, 1, 0], [], []>} : vector<128x32xf32>, vector<16x32xf32>, vector<128x16xf32> -> vector<128x16xf32>
    %209 = arith.addf %208, %80 : vector<128x16xf32>
    %cst_91 = arith.constant dense<0xFF800000> : vector<128xf32>
    %210 = vector.multi_reduction <maximumf>, %209, %cst_91 [1] : vector<128x16xf32> to vector<128xf32>
    %211 = vector.shape_cast %210 : vector<128xf32> to vector<128x1xf32>
    %212 = vector.broadcast %211 : vector<128x1xf32> to vector<128x16xf32>
    %213 = arith.subf %209, %212 : vector<128x16xf32>
    %214 = math.exp %213 : vector<128x16xf32>
    %cst_92 = arith.constant dense<0.000000e+00> : vector<128xf32>
    %215 = vector.multi_reduction <add>, %214, %cst_92 [1] : vector<128x16xf32> to vector<128xf32>
    %216 = vector.shape_cast %215 : vector<128xf32> to vector<128x1xf32>
    %217 = vector.broadcast %216 : vector<128x1xf32> to vector<128x16xf32>
    %218 = arith.divf %214, %217 : vector<128x16xf32>
    %cst_93 = arith.constant dense<0.000000e+00> : vector<128x32xf32>
    %219 = tpu.matmul %218, %205, %cst_93 {dimension_numbers = #tpu.dot_dimension_numbers<[1], [0], [0], [1], [0, 0, 1, 1], [], []>} : vector<128x16xf32>, vector<16x32xf32>, vector<128x32xf32> -> vector<128x32xf32>
    %220 = arith.mulf %219, %82 : vector<128x32xf32>
    %cst_94 = arith.constant dense<0.000000e+00> : vector<16x32xf32>
    %221 = tpu.matmul %81, %220, %cst_94 {dimension_numbers = #tpu.dot_dimension_numbers<[1], [0], [0], [1], [0, 0, 1, 1], [], []>} : vector<16x128xf32>, vector<128x32xf32>, vector<16x32xf32> -> vector<16x32xf32>
    %cst_95 = arith.constant dense<0.000000e+00> : vector<16x32xf32>
    %222 = tpu.matmul %221, %186, %cst_95 {dimension_numbers = #tpu.dot_dimension_numbers<[1], [0], [0], [1], [0, 0, 1, 1], [], []>} : vector<16x32xf32>, vector<32x32xf32>, vector<16x32xf32> -> vector<16x32xf32>
    %223 = vector.broadcast %191 : vector<1x32xf32> to vector<16x32xf32>
    %224 = arith.addf %222, %223 : vector<16x32xf32>
    %225 = arith.addf %180, %224 : vector<16x32xf32>
    %cst_96 = arith.constant dense<0.000000e+00> : vector<16xf32>
    %226 = vector.multi_reduction <add>, %225, %cst_96 [1] : vector<16x32xf32> to vector<16xf32>
    %227 = vector.shape_cast %226 : vector<16xf32> to vector<16x1xf32>
    %cst_97 = arith.constant 3.200000e+01 : f32
    %228 = vector.broadcast %cst_97 : f32 to vector<16x1xf32>
    %229 = arith.divf %227, %228 : vector<16x1xf32>
    %230 = vector.broadcast %229 : vector<16x1xf32> to vector<16x32xf32>
    %231 = arith.subf %225, %230 : vector<16x32xf32>
    %232 = arith.mulf %231, %231 : vector<16x32xf32>
    %cst_98 = arith.constant dense<0.000000e+00> : vector<16xf32>
    %233 = vector.multi_reduction <add>, %232, %cst_98 [1] : vector<16x32xf32> to vector<16xf32>
    %234 = vector.shape_cast %233 : vector<16xf32> to vector<16x1xf32>
    %cst_99 = arith.constant 3.200000e+01 : f32
    %235 = vector.broadcast %cst_99 : f32 to vector<16x1xf32>
    %236 = arith.divf %234, %235 : vector<16x1xf32>
    %237 = vector.broadcast %229 : vector<16x1xf32> to vector<16x32xf32>
    %238 = arith.subf %225, %237 : vector<16x32xf32>
    %cst_100 = arith.constant 9.99999974E-6 : f32
    %239 = vector.broadcast %cst_100 : f32 to vector<16x1xf32>
    %240 = arith.addf %236, %239 : vector<16x1xf32>
    %241 = math.rsqrt %240 : vector<16x1xf32>
    %242 = vector.broadcast %241 : vector<16x1xf32> to vector<16x32xf32>
    %243 = arith.mulf %238, %242 : vector<16x32xf32>
    %244 = vector.broadcast %192 : vector<1x32xf32> to vector<16x32xf32>
    %245 = arith.mulf %243, %244 : vector<16x32xf32>
    %246 = vector.broadcast %193 : vector<1x32xf32> to vector<16x32xf32>
    %247 = arith.addf %245, %246 : vector<16x32xf32>
    %cst_101 = arith.constant dense<0.000000e+00> : vector<16x64xf32>
    %248 = tpu.matmul %247, %197, %cst_101 {dimension_numbers = #tpu.dot_dimension_numbers<[1], [0], [0], [1], [0, 0, 1, 1], [], []>} : vector<16x32xf32>, vector<32x64xf32>, vector<16x64xf32> -> vector<16x64xf32>
    %249 = vector.broadcast %199 : vector<1x64xf32> to vector<16x64xf32>
    %250 = arith.addf %248, %249 : vector<16x64xf32>
    %cst_102 = arith.constant 0.000000e+00 : f32
    %251 = vector.broadcast %cst_102 : f32 to vector<16x64xf32>
    %252 = arith.maximumf %250, %251 : vector<16x64xf32>
    %cst_103 = arith.constant dense<0.000000e+00> : vector<16x32xf32>
    %253 = tpu.matmul %252, %198, %cst_103 {dimension_numbers = #tpu.dot_dimension_numbers<[1], [0], [0], [1], [0, 0, 1, 1], [], []>} : vector<16x64xf32>, vector<64x32xf32>, vector<16x32xf32> -> vector<16x32xf32>
    %254 = vector.broadcast %194 : vector<1x32xf32> to vector<16x32xf32>
    %255 = arith.addf %253, %254 : vector<16x32xf32>
    %256 = arith.addf %247, %255 : vector<16x32xf32>
    %cst_104 = arith.constant dense<0.000000e+00> : vector<16xf32>
    %257 = vector.multi_reduction <add>, %256, %cst_104 [1] : vector<16x32xf32> to vector<16xf32>
    %258 = vector.shape_cast %257 : vector<16xf32> to vector<16x1xf32>
    %cst_105 = arith.constant 3.200000e+01 : f32
    %259 = vector.broadcast %cst_105 : f32 to vector<16x1xf32>
    %260 = arith.divf %258, %259 : vector<16x1xf32>
    %261 = vector.broadcast %260 : vector<16x1xf32> to vector<16x32xf32>
    %262 = arith.subf %256, %261 : vector<16x32xf32>
    %263 = arith.mulf %262, %262 : vector<16x32xf32>
    %cst_106 = arith.constant dense<0.000000e+00> : vector<16xf32>
    %264 = vector.multi_reduction <add>, %263, %cst_106 [1] : vector<16x32xf32> to vector<16xf32>
    %265 = vector.shape_cast %264 : vector<16xf32> to vector<16x1xf32>
    %cst_107 = arith.constant 3.200000e+01 : f32
    %266 = vector.broadcast %cst_107 : f32 to vector<16x1xf32>
    %267 = arith.divf %265, %266 : vector<16x1xf32>
    %268 = vector.broadcast %260 : vector<16x1xf32> to vector<16x32xf32>
    %269 = arith.subf %256, %268 : vector<16x32xf32>
    %cst_108 = arith.constant 9.99999974E-6 : f32
    %270 = vector.broadcast %cst_108 : f32 to vector<16x1xf32>
    %271 = arith.addf %267, %270 : vector<16x1xf32>
    %272 = math.rsqrt %271 : vector<16x1xf32>
    %273 = vector.broadcast %272 : vector<16x1xf32> to vector<16x32xf32>
    %274 = arith.mulf %269, %273 : vector<16x32xf32>
    %275 = vector.broadcast %195 : vector<1x32xf32> to vector<16x32xf32>
    %276 = arith.mulf %274, %275 : vector<16x32xf32>
    %277 = vector.broadcast %196 : vector<1x32xf32> to vector<16x32xf32>
    %278 = arith.addf %276, %277 : vector<16x32xf32>
    %c64_109 = arith.constant 64 : index
    %c0_110 = arith.constant 0 : index
    %279 = vector.load %arg9[%c64_109, %c0_110] : memref<128x64xf32, #tpu.memory_space<vmem>>, vector<64x64xf32>
    %c128 = arith.constant 128 : index
    %c0_111 = arith.constant 0 : index
    %280 = vector.load %arg10[%c128, %c0_111] : memref<192x32xf32, #tpu.memory_space<vmem>>, vector<64x32xf32>
    %c2_112 = arith.constant 2 : index
    %c0_113 = arith.constant 0 : index
    %281 = vector.load %arg12[%c2_112, %c0_113] : memref<8x64xf32, #tpu.memory_space<vmem>>, vector<1x64xf32>
    %c3 = arith.constant 3 : index
    %c0_114 = arith.constant 0 : index
    %282 = vector.load %arg12[%c3, %c0_114] : memref<8x64xf32, #tpu.memory_space<vmem>>, vector<1x32xf32>
    %c4 = arith.constant 4 : index
    %c0_115 = arith.constant 0 : index
    %283 = vector.load %arg12[%c4, %c0_115] : memref<8x64xf32, #tpu.memory_space<vmem>>, vector<1x32xf32>
    %c5 = arith.constant 5 : index
    %c0_116 = arith.constant 0 : index
    %284 = vector.load %arg12[%c5, %c0_116] : memref<8x64xf32, #tpu.memory_space<vmem>>, vector<1x1xf32>
    %285 = tpu.concatenate %278, %74 in 1 : vector<16x32xf32>, vector<16x32xf32> -> vector<16x64xf32>
    %cst_117 = arith.constant dense<0.000000e+00> : vector<16x64xf32>
    %286 = tpu.matmul %285, %279, %cst_117 {dimension_numbers = #tpu.dot_dimension_numbers<[1], [0], [0], [1], [0, 0, 1, 1], [], []>} : vector<16x64xf32>, vector<64x64xf32>, vector<16x64xf32> -> vector<16x64xf32>
    %287 = vector.broadcast %281 : vector<1x64xf32> to vector<16x64xf32>
    %288 = arith.addf %286, %287 : vector<16x64xf32>
    %cst_118 = arith.constant 0.000000e+00 : f32
    %289 = vector.broadcast %cst_118 : f32 to vector<16x64xf32>
    %290 = arith.maximumf %288, %289 : vector<16x64xf32>
    %cst_119 = arith.constant dense<0.000000e+00> : vector<16x32xf32>
    %291 = tpu.matmul %290, %280, %cst_119 {dimension_numbers = #tpu.dot_dimension_numbers<[1], [0], [0], [1], [0, 0, 1, 1], [], []>} : vector<16x64xf32>, vector<64x32xf32>, vector<16x32xf32> -> vector<16x32xf32>
    %292 = vector.broadcast %282 : vector<1x32xf32> to vector<16x32xf32>
    %293 = arith.addf %291, %292 : vector<16x32xf32>
    %cst_120 = arith.constant 0.000000e+00 : f32
    %294 = vector.broadcast %cst_120 : f32 to vector<16x32xf32>
    %295 = arith.maximumf %293, %294 : vector<16x32xf32>
    %cst_121 = arith.constant dense<0.000000e+00> : vector<1x16xf32>
    %296 = tpu.matmul %283, %295, %cst_121 {dimension_numbers = #tpu.dot_dimension_numbers<[1], [1], [0], [0], [0, 0, 1, 0], [], []>} : vector<1x32xf32>, vector<16x32xf32>, vector<1x16xf32> -> vector<1x16xf32>
    %297 = vector.broadcast %284 : vector<1x1xf32> to vector<1x16xf32>
    %298 = arith.addf %296, %297 : vector<1x16xf32>
    %cst_122 = arith.constant 0.000000e+00 : f32
    %299 = vector.broadcast %cst_122 : f32 to vector<1x16xf32>
    %300 = arith.subf %299, %298 : vector<1x16xf32>
    %301 = math.exp %300 : vector<1x16xf32>
    %cst_123 = arith.constant 1.000000e+00 : f32
    %302 = vector.broadcast %cst_123 : f32 to vector<1x16xf32>
    %303 = arith.addf %302, %301 : vector<1x16xf32>
    %cst_124 = arith.constant 1.000000e+00 : f32
    %304 = vector.broadcast %cst_124 : f32 to vector<1x16xf32>
    %305 = arith.divf %304, %303 : vector<1x16xf32>
    %c0_125 = arith.constant 0 : index
    %c0_126 = arith.constant 0 : index
    %306 = vector.load %arg13[%c0_125, %c0_126] : memref<1x16xf32, #tpu.memory_space<vmem>>, vector<1x16xf32>
    tpu.vector_store %arg13[%c0_125, %c0_126], %305 {strides = array<i32>} : memref<1x16xf32, #tpu.memory_space<vmem>>, vector<1x16xf32>,
    return
  }
  func.func @transform_0(%arg0: i32) -> (i32, i32) {
    %c0_i32 = arith.constant 0 : i32
    %c0_i32_0 = arith.constant 0 : i32
    %c0_i32_1 = arith.constant 0 : i32
    return %c0_i32, %c0_i32_0 : i32, i32
  }
  func.func @transform_1(%arg0: i32) -> (i32, i32) {
    %c0_i32 = arith.constant 0 : i32
    %c0_i32_0 = arith.constant 0 : i32
    %c0_i32_1 = arith.constant 0 : i32
    return %c0_i32, %c0_i32_0 : i32, i32
  }
  func.func @transform_2(%arg0: i32) -> (i32, i32) {
    %c0_i32 = arith.constant 0 : i32
    %c0_i32_0 = arith.constant 0 : i32
    %c0_i32_1 = arith.constant 0 : i32
    return %c0_i32, %c0_i32_0 : i32, i32
  }
  func.func @transform_3(%arg0: i32) -> (i32, i32) {
    %c0_i32 = arith.constant 0 : i32
    %c0_i32_0 = arith.constant 0 : i32
    %c0_i32_1 = arith.constant 0 : i32
    return %c0_i32, %c0_i32_0 : i32, i32
  }
  func.func @transform_4(%arg0: i32) -> (i32, i32, i32) {
    %c0_i32 = arith.constant 0 : i32
    %c0_i32_0 = arith.constant 0 : i32
    %c0_i32_1 = arith.constant 0 : i32
    %c0_i32_2 = arith.constant 0 : i32
    return %c0_i32, %c0_i32_0, %c0_i32_1 : i32, i32, i32
  }
  func.func @transform_5(%arg0: i32) -> (i32, i32) {
    %c0_i32 = arith.constant 0 : i32
    %c0_i32_0 = arith.constant 0 : i32
    %c0_i32_1 = arith.constant 0 : i32
    return %c0_i32, %c0_i32_0 : i32, i32
  }
  func.func @transform_6(%arg0: i32) -> (i32, i32) {
    %c0_i32 = arith.constant 0 : i32
    %c0_i32_0 = arith.constant 0 : i32
    %c0_i32_1 = arith.constant 0 : i32
    return %c0_i32, %c0_i32_0 : i32, i32
  }
  func.func @transform_7(%arg0: i32) -> (i32, i32, i32, i32) {
    %c0_i32 = arith.constant 0 : i32
    %c0_i32_0 = arith.constant 0 : i32
    %c0_i32_1 = arith.constant 0 : i32
    %c0_i32_2 = arith.constant 0 : i32
    %c0_i32_3 = arith.constant 0 : i32
    return %c0_i32, %c0_i32_0, %c0_i32_1, %c0_i32_2 : i32, i32, i32, i32
  }
  func.func @transform_8(%arg0: i32) -> (i32, i32) {
    %c0_i32 = arith.constant 0 : i32
    %c0_i32_0 = arith.constant 0 : i32
    %c0_i32_1 = arith.constant 0 : i32
    return %c0_i32, %c0_i32_0 : i32, i32
  }
  func.func @transform_9(%arg0: i32) -> (i32, i32) {
    %c0_i32 = arith.constant 0 : i32
    %c0_i32_0 = arith.constant 0 : i32
    %c0_i32_1 = arith.constant 0 : i32
    return %c0_i32, %c0_i32_0 : i32, i32
  }
  func.func @transform_10(%arg0: i32) -> (i32, i32, i32) {
    %c0_i32 = arith.constant 0 : i32
    %c0_i32_0 = arith.constant 0 : i32
    %c0_i32_1 = arith.constant 0 : i32
    %c0_i32_2 = arith.constant 0 : i32
    return %c0_i32, %c0_i32_0, %c0_i32_1 : i32, i32, i32
  }
  func.func @transform_11(%arg0: i32) -> (i32, i32) {
    %c0_i32 = arith.constant 0 : i32
    %c0_i32_0 = arith.constant 0 : i32
    %c0_i32_1 = arith.constant 0 : i32
    return %c0_i32, %c0_i32_0 : i32, i32
  }
  func.func @transform_12(%arg0: i32) -> (i32, i32) {
    %c0_i32 = arith.constant 0 : i32
    %c0_i32_0 = arith.constant 0 : i32
    %c0_i32_1 = arith.constant 0 : i32
    return %c0_i32, %c0_i32_0 : i32, i32
  }
}

</mosaic_0001>

<llo_original>
// kernel: spkt_forward.1
$region0: #{spkt_forward.1}
  #allocation0 [shape = 'u32[]', space=smem, size = 0x4, offset = 0x4, fixed_abs, tag = 'smem constant byte address 0x4 - core index']
  #allocation1 [shape = 'u32[72,128]{1,0:T(1,128)}', space=vmem, size = 0x9000, scoped, tag = 'internal scratch']
  %s0 = inlined_call_operand.vmem [shape: s32[16,6], index: 0, kind: input, shape index: {}]
  %s1 = inlined_call_operand.vmem [shape: f32[1000,32], index: 1, kind: input, shape index: {}]
  %s2 = inlined_call_operand.vmem [shape: f32[1001,32], index: 2, kind: input, shape index: {}]
  %s3 = inlined_call_operand.vmem [shape: f32[48,32], index: 3, kind: input, shape index: {}]
  %s4 = inlined_call_operand.vmem [shape: f32[2,128,16], index: 4, kind: input, shape index: {}]
  %s5 = inlined_call_operand.vmem [shape: f32[16,128], index: 5, kind: input, shape index: {}]
  %s6 = inlined_call_operand.vmem [shape: f32[128,32], index: 6, kind: input, shape index: {}]
  %s7 = inlined_call_operand.vmem [shape: f32[2,3,32,32], index: 7, kind: input, shape index: {}]
  %s8 = inlined_call_operand.vmem [shape: f32[128,64], index: 8, kind: input, shape index: {}]
  %s9 = inlined_call_operand.vmem [shape: f32[192,32], index: 9, kind: input, shape index: {}]
  %s10 = inlined_call_operand.vmem [shape: f32[2,8,32], index: 10, kind: input, shape index: {}]
  %s11 = inlined_call_operand.vmem [shape: f32[8,64], index: 11, kind: input, shape index: {}]
  %s12 = inlined_call_operand.vmem [shape: f32[1,16], index: 12, kind: output, shape index: {}]
  %s13 = sld [smem:[#allocation0]]
  $region58: #{spkt_forward.1} parent=0
    _
  %s15 = ssub.s32 1, %s13
  %s16 = scalar_select 0, %s15, %s13
  // Predicated region
  $region2: #{spkt_forward.1} parent=0 // pred_check
    _
  $region3: #{spkt_forward.1} parent=0 // pred_check_branch
    %18 = sbr.rel (0) target = $region5
  $region4: #{spkt_forward.1} parent=0 // pred_region
    _
  $region5: #{spkt_forward.1} parent=0 // pred_fallthru
    _
  // Predicated region
  $region6: #{spkt_forward.1} parent=0 // pred_check
    _
  $region7: #{spkt_forward.1} parent=0 // pred_check_branch
    %20 = sbr.rel (0) target = $region9
  $region8: #{spkt_forward.1} parent=0 // pred_region
    _
  $region9: #{spkt_forward.1} parent=0 // pred_fallthru
    _
  // Predicated region
  $region10: #{spkt_forward.1} parent=0 // pred_check
    _
  $region11: #{spkt_forward.1} parent=0 // pred_check_branch
    %22 = sbr.rel (0) target = $region13
  $region12: #{spkt_forward.1} parent=0 // pred_region
    _
  $region13: #{spkt_forward.1} parent=0 // pred_fallthru
    _
  // Predicated region
  $region14: #{spkt_forward.1} parent=0 // pred_check
    _
  $region15: #{spkt_forward.1} parent=0 // pred_check_branch
    %24 = sbr.rel (0) target = $region17
  $region16: #{spkt_forward.1} parent=0 // pred_region
    _
  $region17: #{spkt_forward.1} parent=0 // pred_fallthru
    _
  // Predicated region
  $region18: #{spkt_forward.1} parent=0 // pred_check
    _
  $region19: #{spkt_forward.1} parent=0 // pred_check_branch
    %26 = sbr.rel (0) target = $region21
  $region20: #{spkt_forward.1} parent=0 // pred_region
    _
  $region21: #{spkt_forward.1} parent=0 // pred_fallthru
    _
  // Predicated region
  $region22: #{spkt_forward.1} parent=0 // pred_check
    _
  $region23: #{spkt_forward.1} parent=0 // pred_check_branch
    %28 = sbr.rel (0) target = $region25
  $region24: #{spkt_forward.1} parent=0 // pred_region
    _
  $region25: #{spkt_forward.1} parent=0 // pred_fallthru
    _
  // Predicated region
  $region26: #{spkt_forward.1} parent=0 // pred_check
    _
  $region27: #{spkt_forward.1} parent=0 // pred_check_branch
    %30 = sbr.rel (0) target = $region29
  $region28: #{spkt_forward.1} parent=0 // pred_region
    _
  $region29: #{spkt_forward.1} parent=0 // pred_fallthru
    _
  // Predicated region
  $region30: #{spkt_forward.1} parent=0 // pred_check
    _
  $region31: #{spkt_forward.1} parent=0 // pred_check_branch
    %32 = sbr.rel (0) target = $region33
  $region32: #{spkt_forward.1} parent=0 // pred_region
    _
  $region33: #{spkt_forward.1} parent=0 // pred_fallthru
    _
  // Predicated region
  $region34: #{spkt_forward.1} parent=0 // pred_check
    _
  $region35: #{spkt_forward.1} parent=0 // pred_check_branch
    %34 = sbr.rel (0) target = $region37
  $region36: #{spkt_forward.1} parent=0 // pred_region
    _
  $region37: #{spkt_forward.1} parent=0 // pred_fallthru
    _
  // Predicated region
  $region38: #{spkt_forward.1} parent=0 // pred_check
    _
  $region39: #{spkt_forward.1} parent=0 // pred_check_branch
    %36 = sbr.rel (0) target = $region41
  $region40: #{spkt_forward.1} parent=0 // pred_region
    _
  $region41: #{spkt_forward.1} parent=0 // pred_fallthru
    _
  // Predicated region
  $region42: #{spkt_forward.1} parent=0 // pred_check
    _
  $region43: #{spkt_forward.1} parent=0 // pred_check_branch
    %38 = sbr.rel (0) target = $region45
  $region44: #{spkt_forward.1} parent=0 // pred_region
    _
  $region45: #{spkt_forward.1} parent=0 // pred_fallthru
    _
  // Predicated region
  $region46: #{spkt_forward.1} parent=0 // pred_check
    _
  $region47: #{spkt_forward.1} parent=0 // pred_check_branch
    %40 = sbr.rel (0) target = $region49
  $region48: #{spkt_forward.1} parent=0 // pred_region
    _
  $region49: #{spkt_forward.1} parent=0 // pred_fallthru
    _
  %v41 = vld [vmem:[%s0] sm:$0xff]
  %v42 = vld [vmem:[%s0 + $0x8] sm:$0xff]
  %v43 = vlaneseq
  %v44 = vand.u32 %v43, 127
  %v45 = vadd.s32 %v44, 128
  %v46 = vadd.s32 %v44, 256
  %v47 = vadd.s32 %v44, 384
  %v48 = vadd.s32 %v44, 512
  %v49 = vadd.s32 %v44, 640
  %v50 = vadd.s32 %v44, 768
  %v51 = vadd.s32 %v44, 896
  %52 = vset.pattern.permute.xlu0 0
  %53 = vperm.xlu0 %52, %v41
  %v54 = vpop.permute.xlu0 %53
  %55 = vset.pattern.permute.xlu0 0
  %56 = vperm.xlu0 %55, %v42
  %v57 = vpop.permute.xlu0 %56
  %vm58 = vcmp.eq.s32.totalorder %v44, %v54
  %vm59 = vcmp.eq.s32.totalorder %v45, %v54
  %vm60 = vcmp.eq.s32.totalorder %v46, %v54
  %vm61 = vcmp.eq.s32.totalorder %v47, %v54
  %vm62 = vcmp.eq.s32.totalorder %v48, %v54
  %vm63 = vcmp.eq.s32.totalorder %v49, %v54
  %vm64 = vcmp.eq.s32.totalorder %v50, %v54
  %vm65 = vcmp.eq.s32.totalorder %v51, %v54
  %vm66 = vcmp.eq.s32.totalorder %v44, %v57
  %vm67 = vcmp.eq.s32.totalorder %v45, %v57
  %vm68 = vcmp.eq.s32.totalorder %v46, %v57
  %vm69 = vcmp.eq.s32.totalorder %v47, %v57
  %vm70 = vcmp.eq.s32.totalorder %v48, %v57
  %vm71 = vcmp.eq.s32.totalorder %v49, %v57
  %vm72 = vcmp.eq.s32.totalorder %v50, %v57
  %vm73 = vcmp.eq.s32.totalorder %v51, %v57
  %v74 = vsel %vm58, 1, 0
  %v75 = vsel %vm59, 1, 0
  %v76 = vsel %vm60, 1, 0
  %v77 = vsel %vm61, 1, 0
  %v78 = vsel %vm62, 1, 0
  %v79 = vsel %vm63, 1, 0
  %v80 = vsel %vm64, 1, 0
  %v81 = vsel %vm65, 1, 0
  %v82 = vsel %vm66, 1, 0
  %v83 = vsel %vm67, 1, 0
  %v84 = vsel %vm68, 1, 0
  %v85 = vsel %vm69, 1, 0
  %v86 = vsel %vm70, 1, 0
  %v87 = vsel %vm71, 1, 0
  %v88 = vsel %vm72, 1, 0
  %v89 = vsel %vm73, 1, 0
  %v90 = vcvt.s32.f32 %v74
  %v91 = vcvt.s32.f32 %v75
  %v92 = vcvt.s32.f32 %v76
  %v93 = vcvt.s32.f32 %v77
  %v94 = vcvt.s32.f32 %v78
  %v95 = vcvt.s32.f32 %v79
  %v96 = vcvt.s32.f32 %v80
  %v97 = vcvt.s32.f32 %v81
  %v98 = vcvt.s32.f32 %v82
  %v99 = vcvt.s32.f32 %v83
  %v100 = vcvt.s32.f32 %v84
  %v101 = vcvt.s32.f32 %v85
  %v102 = vcvt.s32.f32 %v86
  %v103 = vcvt.s32.f32 %v87
  %v104 = vcvt.s32.f32 %v88
  %v105 = vcvt.s32.f32 %v89
  %v106 = vld [vmem:[%s1] sm:$0xff]
  %v107 = vld [vmem:[%s1 + $0x8] sm:$0xff]
  %v108 = vld [vmem:[%s1 + $0x10] sm:$0xff]
  %v109 = vld [vmem:[%s1 + $0x18] sm:$0xff]
  %v110 = vld [vmem:[%s1 + $0x20] sm:$0xff]
  %v111 = vld [vmem:[%s1 + $0x28] sm:$0xff]
  %v112 = vld [vmem:[%s1 + $0x30] sm:$0xff]
  %v113 = vld [vmem:[%s1 + $0x38] sm:$0xff]
  %v114 = vld [vmem:[%s1 + $0x40] sm:$0xff]
  %v115 = vld [vmem:[%s1 + $0x48] sm:$0xff]
  %v116 = vld [vmem:[%s1 + $0x50] sm:$0xff]
  %v117 = vld [vmem:[%s1 + $0x58] sm:$0xff]
  %v118 = vld [vmem:[%s1 + $0x60] sm:$0xff]
  %v119 = vld [vmem:[%s1 + $0x68] sm:$0xff]
  %v120 = vld [vmem:[%s1 + $0x70] sm:$0xff]
  %v121 = vld [vmem:[%s1 + $0x78] sm:$0xff]
  %v122 = vld [vmem:[%s1 + $0x80] sm:$0xff]
  %v123 = vld [vmem:[%s1 + $0x88] sm:$0xff]
  %v124 = vld [vmem:[%s1 + $0x90] sm:$0xff]
  %v125 = vld [vmem:[%s1 + $0x98] sm:$0xff]
  %v126 = vld [vmem:[%s1 + $0xa0] sm:$0xff]
  %v127 = vld [vmem:[%s1 + $0xa8] sm:$0xff]
  %v128 = vld [vmem:[%s1 + $0xb0] sm:$0xff]
  %v129 = vld [vmem:[%s1 + $0xb8] sm:$0xff]
  %v130 = vld [vmem:[%s1 + $0xc0] sm:$0xff]
  %v131 = vld [vmem:[%s1 + $0xc8] sm:$0xff]
  %v132 = vld [vmem:[%s1 + $0xd0] sm:$0xff]
  %v133 = vld [vmem:[%s1 + $0xd8] sm:$0xff]
  %v134 = vld [vmem:[%s1 + $0xe0] sm:$0xff]
  %v135 = vld [vmem:[%s1 + $0xe8] sm:$0xff]
  %v136 = vld [vmem:[%s1 + $0xf0] sm:$0xff]
  %v137 = vld [vmem:[%s1 + $0xf8] sm:$0xff]
  %v138 = vld [vmem:[%s1 + $0x100] sm:$0xff]
  %v139 = vld [vmem:[%s1 + $0x108] sm:$0xff]
  %v140 = vld [vmem:[%s1 + $0x110] sm:$0xff]
  %v141 = vld [vmem:[%s1 + $0x118] sm:$0xff]
  %v142 = vld [vmem:[%s1 + $0x120] sm:$0xff]
  %v143 = vld [vmem:[%s1 + $0x128] sm:$0xff]
  %v144 = vld [vmem:[%s1 + $0x130] sm:$0xff]
  %v145 = vld [vmem:[%s1 + $0x138] sm:$0xff]
  %v146 = vld [vmem:[%s1 + $0x140] sm:$0xff]
  %v147 = vld [vmem:[%s1 + $0x148] sm:$0xff]
  %v148 = vld [vmem:[%s1 + $0x150] sm:$0xff]
  %v149 = vld [vmem:[%s1 + $0x158] sm:$0xff]
  %v150 = vld [vmem:[%s1 + $0x160] sm:$0xff]
  %v151 = vld [vmem:[%s1 + $0x168] sm:$0xff]
  %v152 = vld [vmem:[%s1 + $0x170] sm:$0xff]
  %v153 = vld [vmem:[%s1 + $0x178] sm:$0xff]
  %v154 = vld [vmem:[%s1 + $0x180] sm:$0xff]
  %v155 = vld [vmem:[%s1 + $0x188] sm:$0xff]
  %v156 = vld [vmem:[%s1 + $0x190] sm:$0xff]
  %v157 = vld [vmem:[%s1 + $0x198] sm:$0xff]
  %v158 = vld [vmem:[%s1 + $0x1a0] sm:$0xff]
  %v159 = vld [vmem:[%s1 + $0x1a8] sm:$0xff]
  %v160 = vld [vmem:[%s1 + $0x1b0] sm:$0xff]
  %v161 = vld [vmem:[%s1 + $0x1b8] sm:$0xff]
  %v162 = vld [vmem:[%s1 + $0x1c0] sm:$0xff]
  %v163 = vld [vmem:[%s1 + $0x1c8] sm:$0xff]
  %v164 = vld [vmem:[%s1 + $0x1d0] sm:$0xff]
  %v165 = vld [vmem:[%s1 + $0x1d8] sm:$0xff]
  %v166 = vld [vmem:[%s1 + $0x1e0] sm:$0xff]
  %v167 = vld [vmem:[%s1 + $0x1e8] sm:$0xff]
  %v168 = vld [vmem:[%s1 + $0x1f0] sm:$0xff]
  %v169 = vld [vmem:[%s1 + $0x1f8] sm:$0xff]
  %v170 = vld [vmem:[%s1 + $0x200] sm:$0xff]
  %v171 = vld [vmem:[%s1 + $0x208] sm:$0xff]
  %v172 = vld [vmem:[%s1 + $0x210] sm:$0xff]
  %v173 = vld [vmem:[%s1 + $0x218] sm:$0xff]
  %v174 = vld [vmem:[%s1 + $0x220] sm:$0xff]
  %v175 = vld [vmem:[%s1 + $0x228] sm:$0xff]
  %v176 = vld [vmem:[%s1 + $0x230] sm:$0xff]
  %v177 = vld [vmem:[%s1 + $0x238] sm:$0xff]
  %v178 = vld [vmem:[%s1 + $0x240] sm:$0xff]
  %v179 = vld [vmem:[%s1 + $0x248] sm:$0xff]
  %v180 = vld [vmem:[%s1 + $0x250] sm:$0xff]
  %v181 = vld [vmem:[%s1 + $0x258] sm:$0xff]
  %v182 = vld [vmem:[%s1 + $0x260] sm:$0xff]
  %v183 = vld [vmem:[%s1 + $0x268] sm:$0xff]
  %v184 = vld [vmem:[%s1 + $0x270] sm:$0xff]
  %v185 = vld [vmem:[%s1 + $0x278] sm:$0xff]
  %v186 = vld [vmem:[%s1 + $0x280] sm:$0xff]
  %v187 = vld [vmem:[%s1 + $0x288] sm:$0xff]
  %v188 = vld [vmem:[%s1 + $0x290] sm:$0xff]
  %v189 = vld [vmem:[%s1 + $0x298] sm:$0xff]
  %v190 = vld [vmem:[%s1 + $0x2a0] sm:$0xff]
  %v191 = vld [vmem:[%s1 + $0x2a8] sm:$0xff]
  %v192 = vld [vmem:[%s1 + $0x2b0] sm:$0xff]
  %v193 = vld [vmem:[%s1 + $0x2b8] sm:$0xff]
  %v194 = vld [vmem:[%s1 + $0x2c0] sm:$0xff]
  %v195 = vld [vmem:[%s1 + $0x2c8] sm:$0xff]
  %v196 = vld [vmem:[%s1 + $0x2d0] sm:$0xff]
  %v197 = vld [vmem:[%s1 + $0x2d8] sm:$0xff]
  %v198 = vld [vmem:[%s1 + $0x2e0] sm:$0xff]
  %v199 = vld [vmem:[%s1 + $0x2e8] sm:$0xff]
  %v200 = vld [vmem:[%s1 + $0x2f0] sm:$0xff]
  %v201 = vld [vmem:[%s1 + $0x2f8] sm:$0xff]
  %v202 = vld [vmem:[%s1 + $0x300] sm:$0xff]
  %v203 = vld [vmem:[%s1 + $0x308] sm:$0xff]
  %v204 = vld [vmem:[%s1 + $0x310] sm:$0xff]
  %v205 = vld [vmem:[%s1 + $0x318] sm:$0xff]
  %v206 = vld [vmem:[%s1 + $0x320] sm:$0xff]
  %v207 = vld [vmem:[%s1 + $0x328] sm:$0xff]
  %v208 = vld [vmem:[%s1 + $0x330] sm:$0xff]
  %v209 = vld [vmem:[%s1 + $0x338] sm:$0xff]
  %v210 = vld [vmem:[%s1 + $0x340] sm:$0xff]
  %v211 = vld [vmem:[%s1 + $0x348] sm:$0xff]
  %v212 = vld [vmem:[%s1 + $0x350] sm:$0xff]
  %v213 = vld [vmem:[%s1 + $0x358] sm:$0xff]
  %v214 = vld [vmem:[%s1 + $0x360] sm:$0xff]
  %v215 = vld [vmem:[%s1 + $0x368] sm:$0xff]
  %v216 = vld [vmem:[%s1 + $0x370] sm:$0xff]
  %v217 = vld [vmem:[%s1 + $0x378] sm:$0xff]
  %v218 = vld [vmem:[%s1 + $0x380] sm:$0xff]
  %v219 = vld [vmem:[%s1 + $0x388] sm:$0xff]
  %v220 = vld [vmem:[%s1 + $0x390] sm:$0xff]
  %v221 = vld [vmem:[%s1 + $0x398] sm:$0xff]
  %v222 = vld [vmem:[%s1 + $0x3a0] sm:$0xff]
  %v223 = vld [vmem:[%s1 + $0x3a8] sm:$0xff]
  %v224 = vld [vmem:[%s1 + $0x3b0] sm:$0xff]
  %v225 = vld [vmem:[%s1 + $0x3b8] sm:$0xff]
  %v226 = vld [vmem:[%s1 + $0x3c0] sm:$0xff]
  %v227 = vld [vmem:[%s1 + $0x3c8] sm:$0xff]
  %v228 = vld [vmem:[%s1 + $0x3d0] sm:$0xff]
  %v229 = vld [vmem:[%s1 + $0x3d8] sm:$0xff]
  %v230 = vld [vmem:[%s1 + $0x3e0] sm:$0xff]
  %231 = vset.pattern.permute.xlu0 3
  %232 = vperm.xlu0 %231, %v41
  %v233 = vpop.permute.xlu0 %232
  %234 = vset.pattern.permute.xlu0 3
  %235 = vperm.xlu0 %234, %v42
  %v236 = vpop.permute.xlu0 %235
  %vm237 = vcmp.eq.s32.totalorder %v44, %v233
  %vm238 = vcmp.eq.s32.totalorder %v45, %v233
  %vm239 = vcmp.eq.s32.totalorder %v46, %v233
  %vm240 = vcmp.eq.s32.totalorder %v47, %v233
  %vm241 = vcmp.eq.s32.totalorder %v48, %v233
  %vm242 = vcmp.eq.s32.totalorder %v49, %v233
  %vm243 = vcmp.eq.s32.totalorder %v50, %v233
  %vm244 = vcmp.eq.s32.totalorder %v51, %v233
  %vm245 = vcmp.eq.s32.totalorder %v44, %v236
  %vm246 = vcmp.eq.s32.totalorder %v45, %v236
  %vm247 = vcmp.eq.s32.totalorder %v46, %v236
  %vm248 = vcmp.eq.s32.totalorder %v47, %v236
  %vm249 = vcmp.eq.s32.totalorder %v48, %v236
  %vm250 = vcmp.eq.s32.totalorder %v49, %v236
  %vm251 = vcmp.eq.s32.totalorder %v50, %v236
  %vm252 = vcmp.eq.s32.totalorder %v51, %v236
  %v253 = vsel %vm237, 1, 0
  %v254 = vsel %vm238, 1, 0
  %v255 = vsel %vm239, 1, 0
  %v256 = vsel %vm240, 1, 0
  %v257 = vsel %vm241, 1, 0
  %v258 = vsel %vm242, 1, 0
  %v259 = vsel %vm243, 1, 0
  %v260 = vsel %vm244, 1, 0
  %v261 = vsel %vm245, 1, 0
  %v262 = vsel %vm246, 1, 0
  %v263 = vsel %vm247, 1, 0
  %v264 = vsel %vm248, 1, 0
  %v265 = vsel %vm249, 1, 0
  %v266 = vsel %vm250, 1, 0
  %v267 = vsel %vm251, 1, 0
  %v268 = vsel %vm252, 1, 0
  %v269 = vcvt.s32.f32 %v253
  %v270 = vcvt.s32.f32 %v254
  %v271 = vcvt.s32.f32 %v255
  %v272 = vcvt.s32.f32 %v256
  %v273 = vcvt.s32.f32 %v257
  %v274 = vcvt.s32.f32 %v258
  %v275 = vcvt.s32.f32 %v259
  %v276 = vcvt.s32.f32 %v260
  %v277 = vcvt.s32.f32 %v261
  %v278 = vcvt.s32.f32 %v262
  %v279 = vcvt.s32.f32 %v263
  %v280 = vcvt.s32.f32 %v264
  %v281 = vcvt.s32.f32 %v265
  %v282 = vcvt.s32.f32 %v266
  %v283 = vcvt.s32.f32 %v267
  %v284 = vcvt.s32.f32 %v268
  %vm285 = vcmp.ne.s32.totalorder %v41, 0
  %vm286 = vcmp.ne.s32.totalorder %v42, 0
  %v287 = vsel %vm285, 1, 0
  %v288 = vsel %vm286, 1, 0
  %v289 = vcvt.s32.f32 %v287
  %v290 = vcvt.s32.f32 %v288
  %291 = vset.pattern.permute.xlu0 4
  %292 = vperm.xlu0 %291, %v41
  %v293 = vpop.permute.xlu0 %292
  %294 = vset.pattern.permute.xlu0 4
  %295 = vperm.xlu0 %294, %v42
  %v296 = vpop.permute.xlu0 %295
  %vm297 = vcmp.eq.s32.totalorder %v44, %v293
  %vm298 = vcmp.eq.s32.totalorder %v45, %v293
  %vm299 = vcmp.eq.s32.totalorder %v46, %v293
  %vm300 = vcmp.eq.s32.totalorder %v47, %v293
  %vm301 = vcmp.eq.s32.totalorder %v48, %v293
  %vm302 = vcmp.eq.s32.totalorder %v49, %v293
  %vm303 = vcmp.eq.s32.totalorder %v50, %v293
  %vm304 = vcmp.eq.s32.totalorder %v51, %v293
  %vm305 = vcmp.eq.s32.totalorder %v44, %v296
  %vm306 = vcmp.eq.s32.totalorder %v45, %v296
  %vm307 = vcmp.eq.s32.totalorder %v46, %v296
  %vm308 = vcmp.eq.s32.totalorder %v47, %v296
  %vm309 = vcmp.eq.s32.totalorder %v48, %v296
  %vm310 = vcmp.eq.s32.totalorder %v49, %v296
  %vm311 = vcmp.eq.s32.totalorder %v50, %v296
  %vm312 = vcmp.eq.s32.totalorder %v51, %v296
  %v313 = vsel %vm297, 1, 0
  %v314 = vsel %vm298, 1, 0
  %v315 = vsel %vm299, 1, 0
  %v316 = vsel %vm300, 1, 0
  %v317 = vsel %vm301, 1, 0
  %v318 = vsel %vm302, 1, 0
  %v319 = vsel %vm303, 1, 0
  %v320 = vsel %vm304, 1, 0
  %v321 = vsel %vm305, 1, 0
  %v322 = vsel %vm306, 1, 0
  %v323 = vsel %vm307, 1, 0
  %v324 = vsel %vm308, 1, 0
  %v325 = vsel %vm309, 1, 0
  %v326 = vsel %vm310, 1, 0
  %v327 = vsel %vm311, 1, 0
  %v328 = vsel %vm312, 1, 0
  %v329 = vcvt.s32.f32 %v313
  %v330 = vcvt.s32.f32 %v314
  %v331 = vcvt.s32.f32 %v315
  %v332 = vcvt.s32.f32 %v316
  %v333 = vcvt.s32.f32 %v317
  %v334 = vcvt.s32.f32 %v318
  %v335 = vcvt.s32.f32 %v319
  %v336 = vcvt.s32.f32 %v320
  %v337 = vcvt.s32.f32 %v321
  %v338 = vcvt.s32.f32 %v322
  %v339 = vcvt.s32.f32 %v323
  %v340 = vcvt.s32.f32 %v324
  %v341 = vcvt.s32.f32 %v325
  %v342 = vcvt.s32.f32 %v326
  %v343 = vcvt.s32.f32 %v327
  %v344 = vcvt.s32.f32 %v328
  %v345 = vadd.f32 %v269, %v329
  %v346 = vadd.f32 %v270, %v330
  %v347 = vadd.f32 %v271, %v331
  %v348 = vadd.f32 %v272, %v332
  %v349 = vadd.f32 %v273, %v333
  %v350 = vadd.f32 %v274, %v334
  %v351 = vadd.f32 %v275, %v335
  %v352 = vadd.f32 %v276, %v336
  %v353 = vadd.f32 %v277, %v337
  %v354 = vadd.f32 %v278, %v338
  %v355 = vadd.f32 %v279, %v339
  %v356 = vadd.f32 %v280, %v340
  %v357 = vadd.f32 %v281, %v341
  %v358 = vadd.f32 %v282, %v342
  %v359 = vadd.f32 %v283, %v343
  %v360 = vadd.f32 %v284, %v344
  %363 = vrot.lane.b32.xlu0 %v289, 127
  %v364 = vpop.permute.xlu0 %363
  %365 = vrot.lane.b32.xlu0 %v290, 127
  %v366 = vpop.permute.xlu0 %365
  %v369 = vadd.f32 %v289, %v364
  %v370 = vadd.f32 %v290, %v366
  %371 = vset.pattern.permute.xlu0 5
  %372 = vperm.xlu0 %371, %v41
  %v373 = vpop.permute.xlu0 %372
  %374 = vset.pattern.permute.xlu0 5
  %375 = vperm.xlu0 %374, %v42
  %v376 = vpop.permute.xlu0 %375
  %vm377 = vcmp.eq.s32.totalorder %v44, %v373
  %vm378 = vcmp.eq.s32.totalorder %v45, %v373
  %vm379 = vcmp.eq.s32.totalorder %v46, %v373
  %vm380 = vcmp.eq.s32.totalorder %v47, %v373
  %vm381 = vcmp.eq.s32.totalorder %v48, %v373
  %vm382 = vcmp.eq.s32.totalorder %v49, %v373
  %vm383 = vcmp.eq.s32.totalorder %v50, %v373
  %vm384 = vcmp.eq.s32.totalorder %v51, %v373
  %vm385 = vcmp.eq.s32.totalorder %v44, %v376
  %vm386 = vcmp.eq.s32.totalorder %v45, %v376
  %vm387 = vcmp.eq.s32.totalorder %v46, %v376
  %vm388 = vcmp.eq.s32.totalorder %v47, %v376
  %vm389 = vcmp.eq.s32.totalorder %v48, %v376
  %vm390 = vcmp.eq.s32.totalorder %v49, %v376
  %vm391 = vcmp.eq.s32.totalorder %v50, %v376
  %vm392 = vcmp.eq.s32.totalorder %v51, %v376
  %v393 = vsel %vm377, 1, 0
  %v394 = vsel %vm378, 1, 0
  %v395 = vsel %vm379, 1, 0
  %v396 = vsel %vm380, 1, 0
  %v397 = vsel %vm381, 1, 0
  %v398 = vsel %vm382, 1, 0
  %v399 = vsel %vm383, 1, 0
  %v400 = vsel %vm384, 1, 0
  %v401 = vsel %vm385, 1, 0
  %v402 = vsel %vm386, 1, 0
  %v403 = vsel %vm387, 1, 0
  %v404 = vsel %vm388, 1, 0
  %v405 = vsel %vm389, 1, 0
  %v406 = vsel %vm390, 1, 0
  %v407 = vsel %vm391, 1, 0
  %v408 = vsel %vm392, 1, 0
  %v409 = vcvt.s32.f32 %v393
  %v410 = vcvt.s32.f32 %v394
  %v411 = vcvt.s32.f32 %v395
  %v412 = vcvt.s32.f32 %v396
  %v413 = vcvt.s32.f32 %v397
  %v414 = vcvt.s32.f32 %v398
  %v415 = vcvt.s32.f32 %v399
  %v416 = vcvt.s32.f32 %v400
  %v417 = vcvt.s32.f32 %v401
  %v418 = vcvt.s32.f32 %v402
  %v419 = vcvt.s32.f32 %v403
  %v420 = vcvt.s32.f32 %v404
  %v421 = vcvt.s32.f32 %v405
  %v422 = vcvt.s32.f32 %v406
  %v423 = vcvt.s32.f32 %v407
  %v424 = vcvt.s32.f32 %v408
  %v425 = vadd.f32 %v345, %v409
  %v426 = vadd.f32 %v346, %v410
  %v427 = vadd.f32 %v347, %v411
  %v428 = vadd.f32 %v348, %v412
  %v429 = vadd.f32 %v349, %v413
  %v430 = vadd.f32 %v350, %v414
  %v431 = vadd.f32 %v351, %v415
  %v432 = vadd.f32 %v352, %v416
  %v433 = vadd.f32 %v353, %v417
  %v434 = vadd.f32 %v354, %v418
  %v435 = vadd.f32 %v355, %v419
  %v436 = vadd.f32 %v356, %v420
  %v437 = vadd.f32 %v357, %v421
  %v438 = vadd.f32 %v358, %v422
  %v439 = vadd.f32 %v359, %v423
  %v440 = vadd.f32 %v360, %v424
  %441 = vrot.lane.b32.xlu0 %v289, 126
  %v442 = vpop.permute.xlu0 %441
  %443 = vrot.lane.b32.xlu0 %v290, 126
  %v444 = vpop.permute.xlu0 %443
  %v447 = vadd.f32 %v369, %v442
  %v448 = vadd.f32 %v370, %v444
  %v449 = vld [vmem:[%s2] sm:$0xff]
  %v450 = vld [vmem:[%s2 + $0x8] sm:$0xff]
  %v451 = vld [vmem:[%s2 + $0x10] sm:$0xff]
  %v452 = vld [vmem:[%s2 + $0x18] sm:$0xff]
  %v453 = vld [vmem:[%s2 + $0x20] sm:$0xff]
  %v454 = vld [vmem:[%s2 + $0x28] sm:$0xff]
  %v455 = vld [vmem:[%s2 + $0x30] sm:$0xff]
  %v456 = vld [vmem:[%s2 + $0x38] sm:$0xff]
  %v457 = vld [vmem:[%s2 + $0x40] sm:$0xff]
  %v458 = vld [vmem:[%s2 + $0x48] sm:$0xff]
  %v459 = vld [vmem:[%s2 + $0x50] sm:$0xff]
  %v460 = vld [vmem:[%s2 + $0x58] sm:$0xff]
  %v461 = vld [vmem:[%s2 + $0x60] sm:$0xff]
  %v462 = vld [vmem:[%s2 + $0x68] sm:$0xff]
  %v463 = vld [vmem:[%s2 + $0x70] sm:$0xff]
  %v464 = vld [vmem:[%s2 + $0x78] sm:$0xff]
  %v465 = vld [vmem:[%s2 + $0x80] sm:$0xff]
  %v466 = vld [vmem:[%s2 + $0x88] sm:$0xff]
  %v467 = vld [vmem:[%s2 + $0x90] sm:$0xff]
  %v468 = vld [vmem:[%s2 + $0x98] sm:$0xff]
  %v469 = vld [vmem:[%s2 + $0xa0] sm:$0xff]
  %v470 = vld [vmem:[%s2 + $0xa8] sm:$0xff]
  %v471 = vld [vmem:[%s2 + $0xb0] sm:$0xff]
  %v472 = vld [vmem:[%s2 + $0xb8] sm:$0xff]
  %v473 = vld [vmem:[%s2 + $0xc0] sm:$0xff]
  %v474 = vld [vmem:[%s2 + $0xc8] sm:$0xff]
  %v475 = vld [vmem:[%s2 + $0xd0] sm:$0xff]
  %v476 = vld [vmem:[%s2 + $0xd8] sm:$0xff]
  %v477 = vld [vmem:[%s2 + $0xe0] sm:$0xff]
  %v478 = vld [vmem:[%s2 + $0xe8] sm:$0xff]
  %v479 = vld [vmem:[%s2 + $0xf0] sm:$0xff]
  %v480 = vld [vmem:[%s2 + $0xf8] sm:$0xff]
  %v481 = vld [vmem:[%s2 + $0x100] sm:$0xff]
  %v482 = vld [vmem:[%s2 + $0x108] sm:$0xff]
  %v483 = vld [vmem:[%s2 + $0x110] sm:$0xff]
  %v484 = vld [vmem:[%s2 + $0x118] sm:$0xff]
  %v485 = vld [vmem:[%s2 + $0x120] sm:$0xff]
  %v486 = vld [vmem:[%s2 + $0x128] sm:$0xff]
  %v487 = vld [vmem:[%s2 + $0x130] sm:$0xff]
  %v488 = vld [vmem:[%s2 + $0x138] sm:$0xff]
  %v489 = vld [vmem:[%s2 + $0x140] sm:$0xff]
  %v490 = vld [vmem:[%s2 + $0x148] sm:$0xff]
  %v491 = vld [vmem:[%s2 + $0x150] sm:$0xff]
  %v492 = vld [vmem:[%s2 + $0x158] sm:$0xff]
  %v493 = vld [vmem:[%s2 + $0x160] sm:$0xff]
  %v494 = vld [vmem:[%s2 + $0x168] sm:$0xff]
  %v495 = vld [vmem:[%s2 + $0x170] sm:$0xff]
  %v496 = vld [vmem:[%s2 + $0x178] sm:$0xff]
  %v497 = vld [vmem:[%s2 + $0x180] sm:$0xff]
  %v498 = vld [vmem:[%s2 + $0x188] sm:$0xff]
  %v499 = vld [vmem:[%s2 + $0x190] sm:$0xff]
  %v500 = vld [vmem:[%s2 + $0x198] sm:$0xff]
  %v501 = vld [vmem:[%s2 + $0x1a0] sm:$0xff]
  %v502 = vld [vmem:[%s2 + $0x1a8] sm:$0xff]
  %v503 = vld [vmem:[%s2 + $0x1b0] sm:$0xff]
  %v504 = vld [vmem:[%s2 + $0x1b8] sm:$0xff]
  %v505 = vld [vmem:[%s2 + $0x1c0] sm:$0xff]
  %v506 = vld [vmem:[%s2 + $0x1c8] sm:$0xff]
  %v507 = vld [vmem:[%s2 + $0x1d0] sm:$0xff]
  %v508 = vld [vmem:[%s2 + $0x1d8] sm:$0xff]
  %v509 = vld [vmem:[%s2 + $0x1e0] sm:$0xff]
  %v510 = vld [vmem:[%s2 + $0x1e8] sm:$0xff]
  %v511 = vld [vmem:[%s2 + $0x1f0] sm:$0xff]
  %v512 = vld [vmem:[%s2 + $0x1f8] sm:$0xff]
  %v513 = vld [vmem:[%s2 + $0x200] sm:$0xff]
  %v514 = vld [vmem:[%s2 + $0x208] sm:$0xff]
  %v515 = vld [vmem:[%s2 + $0x210] sm:$0xff]
  %v516 = vld [vmem:[%s2 + $0x218] sm:$0xff]
  %v517 = vld [vmem:[%s2 + $0x220] sm:$0xff]
  %v518 = vld [vmem:[%s2 + $0x228] sm:$0xff]
  %v519 = vld [vmem:[%s2 + $0x230] sm:$0xff]
  %v520 = vld [vmem:[%s2 + $0x238] sm:$0xff]
  %v521 = vld [vmem:[%s2 + $0x240] sm:$0xff]
  %v522 = vld [vmem:[%s2 + $0x248] sm:$0xff]
  %v523 = vld [vmem:[%s2 + $0x250] sm:$0xff]
  %v524 = vld [vmem:[%s2 + $0x258] sm:$0xff]
  %v525 = vld [vmem:[%s2 + $0x260] sm:$0xff]
  %v526 = vld [vmem:[%s2 + $0x268] sm:$0xff]
  %v527 = vld [vmem:[%s2 + $0x270] sm:$0xff]
  %v528 = vld [vmem:[%s2 + $0x278] sm:$0xff]
  %v529 = vld [vmem:[%s2 + $0x280] sm:$0xff]
  %v530 = vld [vmem:[%s2 + $0x288] sm:$0xff]
  %v531 = vld [vmem:[%s2 + $0x290] sm:$0xff]
  %v532 = vld [vmem:[%s2 + $0x298] sm:$0xff]
  %v533 = vld [vmem:[%s2 + $0x2a0] sm:$0xff]
  %v534 = vld [vmem:[%s2 + $0x2a8] sm:$0xff]
  %v535 = vld [vmem:[%s2 + $0x2b0] sm:$0xff]
  %v536 = vld [vmem:[%s2 + $0x2b8] sm:$0xff]
  %v537 = vld [vmem:[%s2 + $0x2c0] sm:$0xff]
  %v538 = vld [vmem:[%s2 + $0x2c8] sm:$0xff]
  %v539 = vld [vmem:[%s2 + $0x2d0] sm:$0xff]
  %v540 = vld [vmem:[%s2 + $0x2d8] sm:$0xff]
  %v541 = vld [vmem:[%s2 + $0x2e0] sm:$0xff]
  %v542 = vld [vmem:[%s2 + $0x2e8] sm:$0xff]
  %v543 = vld [vmem:[%s2 + $0x2f0] sm:$0xff]
  %v544 = vld [vmem:[%s2 + $0x2f8] sm:$0xff]
  %v545 = vld [vmem:[%s2 + $0x300] sm:$0xff]
  %v546 = vld [vmem:[%s2 + $0x308] sm:$0xff]
  %v547 = vld [vmem:[%s2 + $0x310] sm:$0xff]
  %v548 = vld [vmem:[%s2 + $0x318] sm:$0xff]
  %v549 = vld [vmem:[%s2 + $0x320] sm:$0xff]
  %v550 = vld [vmem:[%s2 + $0x328] sm:$0xff]
  %v551 = vld [vmem:[%s2 + $0x330] sm:$0xff]
  %v552 = vld [vmem:[%s2 + $0x338] sm:$0xff]
  %v553 = vld [vmem:[%s2 + $0x340] sm:$0xff]
  %v554 = vld [vmem:[%s2 + $0x348] sm:$0xff]
  %v555 = vld [vmem:[%s2 + $0x350] sm:$0xff]
  %v556 = vld [vmem:[%s2 + $0x358] sm:$0xff]
  %v557 = vld [vmem:[%s2 + $0x360] sm:$0xff]
  %v558 = vld [vmem:[%s2 + $0x368] sm:$0xff]
  %v559 = vld [vmem:[%s2 + $0x370] sm:$0xff]
  %v560 = vld [vmem:[%s2 + $0x378] sm:$0xff]
  %v561 = vld [vmem:[%s2 + $0x380] sm:$0xff]
  %v562 = vld [vmem:[%s2 + $0x388] sm:$0xff]
  %v563 = vld [vmem:[%s2 + $0x390] sm:$0xff]
  %v564 = vld [vmem:[%s2 + $0x398] sm:$0xff]
  %v565 = vld [vmem:[%s2 + $0x3a0] sm:$0xff]
  %v566 = vld [vmem:[%s2 + $0x3a8] sm:$0xff]
  %v567 = vld [vmem:[%s2 + $0x3b0] sm:$0xff]
  %v568 = vld [vmem:[%s2 + $0x3b8] sm:$0xff]
  %v569 = vld [vmem:[%s2 + $0x3c0] sm:$0xff]
  %v570 = vld [vmem:[%s2 + $0x3c8] sm:$0xff]
  %v571 = vld [vmem:[%s2 + $0x3d0] sm:$0xff]
  %v572 = vld [vmem:[%s2 + $0x3d8] sm:$0xff]
  %v573 = vld [vmem:[%s2 + $0x3e0] sm:$0xff]
  %v574 = vld [vmem:[%s2 + $0x3e8] sm:$0x1]
  %vm575 = vcmask 859136
  %v577 = vsel %vm575, %v432, 0
  %v580 = vsel %vm575, %v440, 0
  %vm582 = vcmask 1040384
  %v584 = vsel %vm582, %v574, 0
  %586 = vmatpush.msra.mxu0 %v464
  %587 = vmatpush.msra.mxu0 %v463
  %588 = vmatpush.msra.mxu0 %v462
  %589 = vmatpush.msra.mxu0 %v461
  %590 = vmatpush.msra.mxu0 %v460
  %591 = vmatpush.msra.mxu0 %v459
  %592 = vmatpush.msra.mxu0 %v458
  %593 = vmatpush.msra.mxu0 %v457
  %594 = vmatpush.msra.mxu0 %v456
  %595 = vmatpush.msra.mxu0 %v455
  %596 = vmatpush.msra.mxu0 %v454
  %597 = vmatpush.msra.mxu0 %v453
  %598 = vmatpush.msra.mxu0 %v452
  %599 = vmatpush.msra.mxu0 %v451
  %600 = vmatpush.msra.mxu0 %v450
  %601 = vmatpush.msra.mxu0 %v449
  %602 = vmatmul.f32.gmra.mxu0 %v425
  %v603 = vpop.f32.mrf.mxu0
  %v604 = vadd.f32 0.0, %v603
  %605 = vmatmul.f32.gmra.mxu0 %v433
  %v606 = vpop.f32.mrf.mxu0
  %v607 = vadd.f32 0.0, %v606
  %608 = vdwg.mxu0
  %609 = vmatpush.msra.mxu0 %v480
  %610 = vmatpush.msra.mxu0 %v479
  %611 = vmatpush.msra.mxu0 %v478
  %612 = vmatpush.msra.mxu0 %v477
  %613 = vmatpush.msra.mxu0 %v476
  %614 = vmatpush.msra.mxu0 %v475
  %615 = vmatpush.msra.mxu0 %v474
  %616 = vmatpush.msra.mxu0 %v473
  %617 = vmatpush.msra.mxu0 %v472
  %618 = vmatpush.msra.mxu0 %v471
  %619 = vmatpush.msra.mxu0 %v470
  %620 = vmatpush.msra.mxu0 %v469
  %621 = vmatpush.msra.mxu0 %v468
  %622 = vmatpush.msra.mxu0 %v467
  %623 = vmatpush.msra.mxu0 %v466
  %624 = vmatpush.msra.mxu0 %v465
  %625 = vmatmul.f32.gmra.mxu0 %v426
  %v626 = vpop.f32.mrf.mxu0
  %v627 = vadd.f32 %v604, %v626
  %628 = vmatmul.f32.gmra.mxu0 %v434
  %v629 = vpop.f32.mrf.mxu0
  %v630 = vadd.f32 %v607, %v629
  %631 = vdwg.mxu0
  %632 = vmatpush.msra.mxu0 %v496
  %633 = vmatpush.msra.mxu0 %v495
  %634 = vmatpush.msra.mxu0 %v494
  %635 = vmatpush.msra.mxu0 %v493
  %636 = vmatpush.msra.mxu0 %v492
  %637 = vmatpush.msra.mxu0 %v491
  %638 = vmatpush.msra.mxu0 %v490
  %639 = vmatpush.msra.mxu0 %v489
  %640 = vmatpush.msra.mxu0 %v488
  %641 = vmatpush.msra.mxu0 %v487
  %642 = vmatpush.msra.mxu0 %v486
  %643 = vmatpush.msra.mxu0 %v485
  %644 = vmatpush.msra.mxu0 %v484
  %645 = vmatpush.msra.mxu0 %v483
  %646 = vmatpush.msra.mxu0 %v482
  %647 = vmatpush.msra.mxu0 %v481
  %648 = vmatmul.f32.gmra.mxu0 %v427
  %v649 = vpop.f32.mrf.mxu0
  %v650 = vadd.f32 %v627, %v649
  %651 = vmatmul.f32.gmra.mxu0 %v435
  %v652 = vpop.f32.mrf.mxu0
  %v653 = vadd.f32 %v630, %v652
  %654 = vdwg.mxu0
  %655 = vmatpush.msra.mxu0 %v512
  %656 = vmatpush.msra.mxu0 %v511
  %657 = vmatpush.msra.mxu0 %v510
  %658 = vmatpush.msra.mxu0 %v509
  %659 = vmatpush.msra.mxu0 %v508
  %660 = vmatpush.msra.mxu0 %v507
  %661 = vmatpush.msra.mxu0 %v506
  %662 = vmatpush.msra.mxu0 %v505
  %663 = vmatpush.msra.mxu0 %v504
  %664 = vmatpush.msra.mxu0 %v503
  %665 = vmatpush.msra.mxu0 %v502
  %666 = vmatpush.msra.mxu0 %v501
  %667 = vmatpush.msra.mxu0 %v500
  %668 = vmatpush.msra.mxu0 %v499
  %669 = vmatpush.msra.mxu0 %v498
  %670 = vmatpush.msra.mxu0 %v497
  %671 = vmatmul.f32.gmra.mxu0 %v428
  %v672 = vpop.f32.mrf.mxu0
  %v673 = vadd.f32 %v650, %v672
  %674 = vmatmul.f32.gmra.mxu0 %v436
  %v675 = vpop.f32.mrf.mxu0
  %v676 = vadd.f32 %v653, %v675
  %677 = vdwg.mxu0
  %678 = vmatpush.msra.mxu0 %v528
  %679 = vmatpush.msra.mxu0 %v527
  %680 = vmatpush.msra.mxu0 %v526
  %681 = vmatpush.msra.mxu0 %v525
  %682 = vmatpush.msra.mxu0 %v524
  %683 = vmatpush.msra.mxu0 %v523
  %684 = vmatpush.msra.mxu0 %v522
  %685 = vmatpush.msra.mxu0 %v521
  %686 = vmatpush.msra.mxu0 %v520
  %687 = vmatpush.msra.mxu0 %v519
  %688 = vmatpush.msra.mxu0 %v518
  %689 = vmatpush.msra.mxu0 %v517
  %690 = vmatpush.msra.mxu0 %v516
  %691 = vmatpush.msra.mxu0 %v515
  %692 = vmatpush.msra.mxu0 %v514
  %693 = vmatpush.msra.mxu0 %v513
  %694 = vmatmul.f32.gmra.mxu0 %v429
  %v695 = vpop.f32.mrf.mxu0
  %v696 = vadd.f32 %v673, %v695
  %697 = vmatmul.f32.gmra.mxu0 %v437
  %v698 = vpop.f32.mrf.mxu0
  %v699 = vadd.f32 %v676, %v698
  %700 = vdwg.mxu0
  %701 = vmatpush.msra.mxu0 %v544
  %702 = vmatpush.msra.mxu0 %v543
  %703 = vmatpush.msra.mxu0 %v542
  %704 = vmatpush.msra.mxu0 %v541
  %705 = vmatpush.msra.mxu0 %v540
  %706 = vmatpush.msra.mxu0 %v539
  %707 = vmatpush.msra.mxu0 %v538
  %708 = vmatpush.msra.mxu0 %v537
  %709 = vmatpush.msra.mxu0 %v536
  %710 = vmatpush.msra.mxu0 %v535
  %711 = vmatpush.msra.mxu0 %v534
  %712 = vmatpush.msra.mxu0 %v533
  %713 = vmatpush.msra.mxu0 %v532
  %714 = vmatpush.msra.mxu0 %v531
  %715 = vmatpush.msra.mxu0 %v530
  %716 = vmatpush.msra.mxu0 %v529
  %717 = vmatmul.f32.gmra.mxu0 %v430
  %v718 = vpop.f32.mrf.mxu0
  %v719 = vadd.f32 %v696, %v718
  %720 = vmatmul.f32.gmra.mxu0 %v438
  %v721 = vpop.f32.mrf.mxu0
  %v722 = vadd.f32 %v699, %v721
  %723 = vdwg.mxu0
  %724 = vmatpush.msra.mxu0 %v560
  %725 = vmatpush.msra.mxu0 %v559
  %726 = vmatpush.msra.mxu0 %v558
  %727 = vmatpush.msra.mxu0 %v557
  %728 = vmatpush.msra.mxu0 %v556
  %729 = vmatpush.msra.mxu0 %v555
  %730 = vmatpush.msra.mxu0 %v554
  %731 = vmatpush.msra.mxu0 %v553
  %732 = vmatpush.msra.mxu0 %v552
  %733 = vmatpush.msra.mxu0 %v551
  %734 = vmatpush.msra.mxu0 %v550
  %735 = vmatpush.msra.mxu0 %v549
  %736 = vmatpush.msra.mxu0 %v548
  %737 = vmatpush.msra.mxu0 %v547
  %738 = vmatpush.msra.mxu0 %v546
  %739 = vmatpush.msra.mxu0 %v545
  %740 = vmatmul.f32.gmra.mxu0 %v431
  %v741 = vpop.f32.mrf.mxu0
  %v742 = vadd.f32 %v719, %v741
  %743 = vmatmul.f32.gmra.mxu0 %v439
  %v744 = vpop.f32.mrf.mxu0
  %v745 = vadd.f32 %v722, %v744
  %746 = vdwg.mxu0
  %747 = vmatpush.msra.mxu0 0.0
  %748 = vmatpush.msra.mxu0 0.0
  %749 = vmatpush.msra.mxu0 %v584
  %750 = vmatpush.msra.mxu0 %v573
  %751 = vmatpush.msra.mxu0 %v572
  %752 = vmatpush.msra.mxu0 %v571
  %753 = vmatpush.msra.mxu0 %v570
  %754 = vmatpush.msra.mxu0 %v569
  %755 = vmatpush.msra.mxu0 %v568
  %756 = vmatpush.msra.mxu0 %v567
  %757 = vmatpush.msra.mxu0 %v566
  %758 = vmatpush.msra.mxu0 %v565
  %759 = vmatpush.msra.mxu0 %v564
  %760 = vmatpush.msra.mxu0 %v563
  %761 = vmatpush.msra.mxu0 %v562
  %762 = vmatpush.msra.mxu0 %v561
  %763 = vmatmul.f32.gmra.mxu0 %v577
  %v764 = vpop.f32.mrf.mxu0
  %v765 = vadd.f32 %v742, %v764
  %766 = vmatmul.f32.gmra.mxu0 %v580
  %v767 = vpop.f32.mrf.mxu0
  %v768 = vadd.f32 %v745, %v767
  %769 = vdwg.mxu0
  %v770 = vmax.f32 %v447, 1.0
  %v771 = vmax.f32 %v448, 1.0
  %773 = vset.pattern.permute.xlu0 3
  %774 = vperm.xlu0 %773, %v770
  %v775 = vpop.permute.xlu0 %774
  %778 = vset.pattern.permute.xlu0 3
  %779 = vperm.xlu0 %778, %v771
  %v780 = vpop.permute.xlu0 %779
  %v782 = vrcp.pop %v775
  %v783 = vmul.f32 %v775, %v782
  %v784 = vsub.f32 1.0, %v783
  %v785 = vmul.f32 %v782, %v784
  %v786 = vadd.f32 %v782, %v785
  %vm787 = vweird.f32 %v775
  %vm788 = vweird.f32 %v782
  %vm789 = vmor %vm787, %vm788
  %v790 = vsel %vm789, %v782, %v786
  %v791 = vand.u32 2147483647, %v775
  %vm792 = vcmp.eq.f32.partialorder %v791, 8.507059e+37
  %v793 = vand.u32 %v775, 2147483648
  %v794 = vor.u32 1.1754944e-38, %v793
  %v795 = vsel %vm792, %v794, %v790
  %v796 = vmul.f32 %v765, %v795
  %v797 = vrcp.pop %v780
  %v798 = vmul.f32 %v780, %v797
  %v799 = vsub.f32 1.0, %v798
  %v800 = vmul.f32 %v797, %v799
  %v801 = vadd.f32 %v797, %v800
  %vm802 = vweird.f32 %v780
  %vm803 = vweird.f32 %v797
  %vm804 = vmor %vm802, %vm803
  %v805 = vsel %vm804, %v797, %v801
  %v806 = vand.u32 2147483647, %v780
  %vm807 = vcmp.eq.f32.partialorder %v806, 8.507059e+37
  %v808 = vand.u32 %v780, 2147483648
  %v809 = vor.u32 1.1754944e-38, %v808
  %v810 = vsel %vm807, %v809, %v805
  %v811 = vmul.f32 %v768, %v810
  %812 = vset.pattern.permute.xlu0 2
  %813 = vperm.xlu0 %812, %v41
  %v814 = vpop.permute.xlu0 %813
  %815 = vset.pattern.permute.xlu0 2
  %816 = vperm.xlu0 %815, %v42
  %v817 = vpop.permute.xlu0 %816
  %vm818 = vcmp.eq.s32.totalorder %v44, %v814
  %vm819 = vcmp.eq.s32.totalorder %v44, %v817
  %v820 = vsel %vm818, 1, 0
  %v821 = vsel %vm819, 1, 0
  %v822 = vcvt.s32.f32 %v820
  %v823 = vcvt.s32.f32 %v821
  %v824 = vld [vmem:[%s3] sm:$0xff]
  %v825 = vld [vmem:[%s3 + $0x8] sm:$0xff]
  %v826 = vld [vmem:[%s3 + $0x10] sm:$0xf]
  %vm827 = vcmask 162816
  %v829 = vsel %vm827, %v822, 0
  %v832 = vsel %vm827, %v823, 0
  %vm834 = vcmask 1043456
  %v836 = vsel %vm834, %v826, 0
  %838 = vmatpush.msra.mxu0 0.0
  %839 = vmatpush.msra.mxu0 0.0
  %840 = vmatpush.msra.mxu0 0.0
  %841 = vmatpush.msra.mxu0 0.0
  %842 = vmatpush.msra.mxu0 0.0
  %843 = vmatpush.msra.mxu0 0.0
  %844 = vmatpush.msra.mxu0 0.0
  %845 = vmatpush.msra.mxu0 0.0
  %846 = vmatpush.msra.mxu0 0.0
  %847 = vmatpush.msra.mxu0 0.0
  %848 = vmatpush.msra.mxu0 0.0
  %849 = vmatpush.msra.mxu0 0.0
  %850 = vmatpush.msra.mxu0 0.0
  %851 = vmatpush.msra.mxu0 %v836
  %852 = vmatpush.msra.mxu0 %v825
  %853 = vmatpush.msra.mxu0 %v824
  %854 = vmatmul.f32.gmra.mxu0 %v829
  %v855 = vpop.f32.mrf.mxu0
  %v856 = vadd.f32 0.0, %v855
  %857 = vmatmul.f32.gmra.mxu0 %v832
  %v858 = vpop.f32.mrf.mxu0
  %v859 = vadd.f32 0.0, %v858
  %860 = vdwg.mxu0
  %v861 = vcvt.s32.f32 %v41
  %v862 = vcvt.s32.f32 %v42
  %v863 = vld [vmem:[%s3 + $0x18] sm:$0x1]
  %v864 = vsub.f32 1.0, %v861
  %v865 = vsub.f32 1.0, %v862
  %v866 = vperm.slane %v863, 0
  %868 = vset.pattern.permute.xlu0 1
  %869 = vperm.xlu0 %868, %v864
  %v870 = vpop.permute.xlu0 %869
  %873 = vset.pattern.permute.xlu0 1
  %874 = vperm.xlu0 %873, %v865
  %v875 = vpop.permute.xlu0 %874
  %v877 = vmul.f32 %v866, %v870
  %v878 = vmul.f32 %v866, %v875
  %v879 = vld [vmem:[%s3 + $0x19] sm:$0x1]
  %v880 = vperm.slane %v879, 0
  %882 = vset.pattern.permute.xlu0 1
  %883 = vperm.xlu0 %882, %v861
  %v884 = vpop.permute.xlu0 %883
  %887 = vset.pattern.permute.xlu0 1
  %888 = vperm.xlu0 %887, %v862
  %v889 = vpop.permute.xlu0 %888
  %v891 = vmul.f32 %v880, %v884
  %v892 = vmul.f32 %v880, %v889
  %v893 = vadd.f32 %v877, %v891
  %v894 = vadd.f32 %v878, %v892
  %v895 = vld [vmem:[%s3 + $0x20] sm:$0xff]
  %v896 = vld [vmem:[%s3 + $0x28] sm:$0xff]
  %vm897 = vcmask 850944
  %v899 = vsel %vm897, %v97, 0
  %v902 = vsel %vm897, %v105, 0
  %904 = vmatpush.msra.mxu0 %v121
  %905 = vmatpush.msra.mxu0 %v120
  %906 = vmatpush.msra.mxu0 %v119
  %907 = vmatpush.msra.mxu0 %v118
  %908 = vmatpush.msra.mxu0 %v117
  %909 = vmatpush.msra.mxu0 %v116
  %910 = vmatpush.msra.mxu0 %v115
  %911 = vmatpush.msra.mxu0 %v114
  %912 = vmatpush.msra.mxu0 %v113
  %913 = vmatpush.msra.mxu0 %v112
  %914 = vmatpush.msra.mxu0 %v111
  %915 = vmatpush.msra.mxu0 %v110
  %916 = vmatpush.msra.mxu0 %v109
  %917 = vmatpush.msra.mxu0 %v108
  %918 = vmatpush.msra.mxu0 %v107
  %919 = vmatpush.msra.mxu0 %v106
  %920 = vmatmul.f32.gmra.mxu0 %v90
  %v921 = vpop.f32.mrf.mxu0
  %v922 = vadd.f32 %v796, %v921
  %923 = vmatmul.f32.gmra.mxu0 %v98
  %v924 = vpop.f32.mrf.mxu0
  %v925 = vadd.f32 %v811, %v924
  %926 = vdwg.mxu0
  %927 = vmatpush.msra.mxu0 %v137
  %928 = vmatpush.msra.mxu0 %v136
  %929 = vmatpush.msra.mxu0 %v135
  %930 = vmatpush.msra.mxu0 %v134
  %931 = vmatpush.msra.mxu0 %v133
  %932 = vmatpush.msra.mxu0 %v132
  %933 = vmatpush.msra.mxu0 %v131
  %934 = vmatpush.msra.mxu0 %v130
  %935 = vmatpush.msra.mxu0 %v129
  %936 = vmatpush.msra.mxu0 %v128
  %937 = vmatpush.msra.mxu0 %v127
  %938 = vmatpush.msra.mxu0 %v126
  %939 = vmatpush.msra.mxu0 %v125
  %940 = vmatpush.msra.mxu0 %v124
  %941 = vmatpush.msra.mxu0 %v123
  %942 = vmatpush.msra.mxu0 %v122
  %943 = vmatmul.f32.gmra.mxu0 %v91
  %v944 = vpop.f32.mrf.mxu0
  %v945 = vadd.f32 %v922, %v944
  %946 = vmatmul.f32.gmra.mxu0 %v99
  %v947 = vpop.f32.mrf.mxu0
  %v948 = vadd.f32 %v925, %v947
  %949 = vdwg.mxu0
  %950 = vmatpush.msra.mxu0 %v153
  %951 = vmatpush.msra.mxu0 %v152
  %952 = vmatpush.msra.mxu0 %v151
  %953 = vmatpush.msra.mxu0 %v150
  %954 = vmatpush.msra.mxu0 %v149
  %955 = vmatpush.msra.mxu0 %v148
  %956 = vmatpush.msra.mxu0 %v147
  %957 = vmatpush.msra.mxu0 %v146
  %958 = vmatpush.msra.mxu0 %v145
  %959 = vmatpush.msra.mxu0 %v144
  %960 = vmatpush.msra.mxu0 %v143
  %961 = vmatpush.msra.mxu0 %v142
  %962 = vmatpush.msra.mxu0 %v141
  %963 = vmatpush.msra.mxu0 %v140
  %964 = vmatpush.msra.mxu0 %v139
  %965 = vmatpush.msra.mxu0 %v138
  %966 = vmatmul.f32.gmra.mxu0 %v92
  %v967 = vpop.f32.mrf.mxu0
  %v968 = vadd.f32 %v945, %v967
  %969 = vmatmul.f32.gmra.mxu0 %v100
  %v970 = vpop.f32.mrf.mxu0
  %v971 = vadd.f32 %v948, %v970
  %972 = vdwg.mxu0
  %973 = vmatpush.msra.mxu0 %v169
  %974 = vmatpush.msra.mxu0 %v168
  %975 = vmatpush.msra.mxu0 %v167
  %976 = vmatpush.msra.mxu0 %v166
  %977 = vmatpush.msra.mxu0 %v165
  %978 = vmatpush.msra.mxu0 %v164
  %979 = vmatpush.msra.mxu0 %v163
  %980 = vmatpush.msra.mxu0 %v162
  %981 = vmatpush.msra.mxu0 %v161
  %982 = vmatpush.msra.mxu0 %v160
  %983 = vmatpush.msra.mxu0 %v159
  %984 = vmatpush.msra.mxu0 %v158
  %985 = vmatpush.msra.mxu0 %v157
  %986 = vmatpush.msra.mxu0 %v156
  %987 = vmatpush.msra.mxu0 %v155
  %988 = vmatpush.msra.mxu0 %v154
  %989 = vmatmul.f32.gmra.mxu0 %v93
  %v990 = vpop.f32.mrf.mxu0
  %v991 = vadd.f32 %v968, %v990
  %992 = vmatmul.f32.gmra.mxu0 %v101
  %v993 = vpop.f32.mrf.mxu0
  %v994 = vadd.f32 %v971, %v993
  %995 = vdwg.mxu0
  %996 = vmatpush.msra.mxu0 %v185
  %997 = vmatpush.msra.mxu0 %v184
  %998 = vmatpush.msra.mxu0 %v183
  %999 = vmatpush.msra.mxu0 %v182
  %1000 = vmatpush.msra.mxu0 %v181
  %1001 = vmatpush.msra.mxu0 %v180
  %1002 = vmatpush.msra.mxu0 %v179
  %1003 = vmatpush.msra.mxu0 %v178
  %1004 = vmatpush.msra.mxu0 %v177
  %1005 = vmatpush.msra.mxu0 %v176
  %1006 = vmatpush.msra.mxu0 %v175
  %1007 = vmatpush.msra.mxu0 %v174
  %1008 = vmatpush.msra.mxu0 %v173
  %1009 = vmatpush.msra.mxu0 %v172
  %1010 = vmatpush.msra.mxu0 %v171
  %1011 = vmatpush.msra.mxu0 %v170
  %1012 = vmatmul.f32.gmra.mxu0 %v94
  %v1013 = vpop.f32.mrf.mxu0
  %v1014 = vadd.f32 %v991, %v1013
  %1015 = vmatmul.f32.gmra.mxu0 %v102
  %v1016 = vpop.f32.mrf.mxu0
  %v1017 = vadd.f32 %v994, %v1016
  %1018 = vdwg.mxu0
  %1019 = vmatpush.msra.mxu0 %v201
  %1020 = vmatpush.msra.mxu0 %v200
  %1021 = vmatpush.msra.mxu0 %v199
  %1022 = vmatpush.msra.mxu0 %v198
  %1023 = vmatpush.msra.mxu0 %v197
  %1024 = vmatpush.msra.mxu0 %v196
  %1025 = vmatpush.msra.mxu0 %v195
  %1026 = vmatpush.msra.mxu0 %v194
  %1027 = vmatpush.msra.mxu0 %v193
  %1028 = vmatpush.msra.mxu0 %v192
  %1029 = vmatpush.msra.mxu0 %v191
  %1030 = vmatpush.msra.mxu0 %v190
  %1031 = vmatpush.msra.mxu0 %v189
  %1032 = vmatpush.msra.mxu0 %v188
  %1033 = vmatpush.msra.mxu0 %v187
  %1034 = vmatpush.msra.mxu0 %v186
  %1035 = vmatmul.f32.gmra.mxu0 %v95
  %v1036 = vpop.f32.mrf.mxu0
  %v1037 = vadd.f32 %v1014, %v1036
  %1038 = vmatmul.f32.gmra.mxu0 %v103
  %v1039 = vpop.f32.mrf.mxu0
  %v1040 = vadd.f32 %v1017, %v1039
  %1041 = vdwg.mxu0
  %1042 = vmatpush.msra.mxu0 %v217
  %1043 = vmatpush.msra.mxu0 %v216
  %1044 = vmatpush.msra.mxu0 %v215
  %1045 = vmatpush.msra.mxu0 %v214
  %1046 = vmatpush.msra.mxu0 %v213
  %1047 = vmatpush.msra.mxu0 %v212
  %1048 = vmatpush.msra.mxu0 %v211
  %1049 = vmatpush.msra.mxu0 %v210
  %1050 = vmatpush.msra.mxu0 %v209
  %1051 = vmatpush.msra.mxu0 %v208
  %1052 = vmatpush.msra.mxu0 %v207
  %1053 = vmatpush.msra.mxu0 %v206
  %1054 = vmatpush.msra.mxu0 %v205
  %1055 = vmatpush.msra.mxu0 %v204
  %1056 = vmatpush.msra.mxu0 %v203
  %1057 = vmatpush.msra.mxu0 %v202
  %1058 = vmatmul.f32.gmra.mxu0 %v96
  %v1059 = vpop.f32.mrf.mxu0
  %v1060 = vadd.f32 %v1037, %v1059
  %1061 = vmatmul.f32.gmra.mxu0 %v104
  %v1062 = vpop.f32.mrf.mxu0
  %v1063 = vadd.f32 %v1040, %v1062
  %1064 = vdwg.mxu0
  %1065 = vmatpush.msra.mxu0 0.0
  %1066 = vmatpush.msra.mxu0 0.0
  %1067 = vmatpush.msra.mxu0 0.0
  %1068 = vmatpush.msra.mxu0 %v230
  %1069 = vmatpush.msra.mxu0 %v229
  %1070 = vmatpush.msra.mxu0 %v228
  %1071 = vmatpush.msra.mxu0 %v227
  %1072 = vmatpush.msra.mxu0 %v226
  %1073 = vmatpush.msra.mxu0 %v225
  %1074 = vmatpush.msra.mxu0 %v224
  %1075 = vmatpush.msra.mxu0 %v223
  %1076 = vmatpush.msra.mxu0 %v222
  %1077 = vmatpush.msra.mxu0 %v221
  %1078 = vmatpush.msra.mxu0 %v220
  %1079 = vmatpush.msra.mxu0 %v219
  %1080 = vmatpush.msra.mxu0 %v218
  %1081 = vmatmul.f32.gmra.mxu0 %v899
  %v1082 = vpop.f32.mrf.mxu0
  %v1083 = vadd.f32 %v1060, %v1082
  %1084 = vmatmul.f32.gmra.mxu0 %v902
  %v1085 = vpop.f32.mrf.mxu0
  %v1086 = vadd.f32 %v1063, %v1085
  %1087 = vdwg.mxu0
  %v1088 = vadd.f32 %v1083, %v856
  %v1089 = vadd.f32 %v1086, %v859
  %v1090 = vadd.f32 %v1088, %v895
  %v1091 = vadd.f32 %v1089, %v896
  %v1092 = vadd.f32 %v1090, %v893
  %v1093 = vadd.f32 %v1091, %v894
  %v1094 = vld [vmem:[%s4] sm:$0xff]
  %v1095 = vld [vmem:[%s4 + $0x8] sm:$0xff]
  %v1096 = vld [vmem:[%s4 + $0x10] sm:$0xff]
  %v1097 = vld [vmem:[%s4 + $0x18] sm:$0xff]
  %v1098 = vld [vmem:[%s4 + $0x20] sm:$0xff]
  %v1099 = vld [vmem:[%s4 + $0x28] sm:$0xff]
  %v1100 = vld [vmem:[%s4 + $0x30] sm:$0xff]
  %v1101 = vld [vmem:[%s4 + $0x38] sm:$0xff]
  %v1102 = vld [vmem:[%s4 + $0x40] sm:$0xff]
  %v1103 = vld [vmem:[%s4 + $0x48] sm:$0xff]
  %v1104 = vld [vmem:[%s4 + $0x50] sm:$0xff]
  %v1105 = vld [vmem:[%s4 + $0x58] sm:$0xff]
  %v1106 = vld [vmem:[%s4 + $0x60] sm:$0xff]
  %v1107 = vld [vmem:[%s4 + $0x68] sm:$0xff]
  %v1108 = vld [vmem:[%s4 + $0x70] sm:$0xff]
  %v1109 = vld [vmem:[%s4 + $0x78] sm:$0xff]
  %s1110 = scalar_lea.vmem %s4, 128
  %v1111 = vld [vmem:[%s1110] sm:$0xff]
  %v1112 = vld [vmem:[%s1110 + $0x8] sm:$0xff]
  %v1113 = vld [vmem:[%s1110 + $0x10] sm:$0xff]
  %v1114 = vld [vmem:[%s1110 + $0x18] sm:$0xff]
  %v1115 = vld [vmem:[%s1110 + $0x20] sm:$0xff]
  %v1116 = vld [vmem:[%s1110 + $0x28] sm:$0xff]
  %v1117 = vld [vmem:[%s1110 + $0x30] sm:$0xff]
  %v1118 = vld [vmem:[%s1110 + $0x38] sm:$0xff]
  %v1119 = vld [vmem:[%s1110 + $0x40] sm:$0xff]
  %v1120 = vld [vmem:[%s1110 + $0x48] sm:$0xff]
  %v1121 = vld [vmem:[%s1110 + $0x50] sm:$0xff]
  %v1122 = vld [vmem:[%s1110 + $0x58] sm:$0xff]
  %v1123 = vld [vmem:[%s1110 + $0x60] sm:$0xff]
  %v1124 = vld [vmem:[%s1110 + $0x68] sm:$0xff]
  %v1125 = vld [vmem:[%s1110 + $0x70] sm:$0xff]
  %v1126 = vld [vmem:[%s1110 + $0x78] sm:$0xff]
  %v1127 = vld [vmem:[%s5] sm:$0xff]
  %v1128 = vld [vmem:[%s5 + $0x8] sm:$0xff]
  %v1129 = vld [vmem:[%s6] sm:$0xff]
  %v1130 = vld [vmem:[%s6 + $0x8] sm:$0xff]
  %v1131 = vld [vmem:[%s6 + $0x10] sm:$0xff]
  %v1132 = vld [vmem:[%s6 + $0x18] sm:$0xff]
  %v1133 = vld [vmem:[%s6 + $0x20] sm:$0xff]
  %v1134 = vld [vmem:[%s6 + $0x28] sm:$0xff]
  %v1135 = vld [vmem:[%s6 + $0x30] sm:$0xff]
  %v1136 = vld [vmem:[%s6 + $0x38] sm:$0xff]
  %v1137 = vld [vmem:[%s6 + $0x40] sm:$0xff]
  %v1138 = vld [vmem:[%s6 + $0x48] sm:$0xff]
  %v1139 = vld [vmem:[%s6 + $0x50] sm:$0xff]
  %v1140 = vld [vmem:[%s6 + $0x58] sm:$0xff]
  %v1141 = vld [vmem:[%s6 + $0x60] sm:$0xff]
  %v1142 = vld [vmem:[%s6 + $0x68] sm:$0xff]
  %v1143 = vld [vmem:[%s6 + $0x70] sm:$0xff]
  %v1144 = vld [vmem:[%s6 + $0x78] sm:$0xff]
  %v1145 = vld [vmem:[%s7] sm:$0xff]
  %v1146 = vld [vmem:[%s7 + $0x8] sm:$0xff]
  %v1147 = vld [vmem:[%s7 + $0x10] sm:$0xff]
  %v1148 = vld [vmem:[%s7 + $0x18] sm:$0xff]
  %s1149 = scalar_lea.vmem %s7, 32
  %v1150 = vld [vmem:[%s1149] sm:$0xff]
  %v1151 = vld [vmem:[%s1149 + $0x8] sm:$0xff]
  %v1152 = vld [vmem:[%s1149 + $0x10] sm:$0xff]
  %v1153 = vld [vmem:[%s1149 + $0x18] sm:$0xff]
  %s1154 = scalar_lea.vmem %s7, 64
  %v1155 = vld [vmem:[%s1154] sm:$0xff]
  %v1156 = vld [vmem:[%s1154 + $0x8] sm:$0xff]
  %v1157 = vld [vmem:[%s1154 + $0x10] sm:$0xff]
  %v1158 = vld [vmem:[%s1154 + $0x18] sm:$0xff]
  %v1159 = vld [vmem:[%s10] sm:$0xff]
  %v1160 = vld [vmem:[%s8] sm:$0xff]
  %v1161 = vld [vmem:[%s8 + $0x8] sm:$0xff]
  %v1162 = vld [vmem:[%s8 + $0x10] sm:$0xff]
  %v1163 = vld [vmem:[%s8 + $0x18] sm:$0xff]
  %v1164 = vld [vmem:[%s9] sm:$0xff]
  %v1165 = vld [vmem:[%s9 + $0x8] sm:$0xff]
  %v1166 = vld [vmem:[%s9 + $0x10] sm:$0xff]
  %v1167 = vld [vmem:[%s9 + $0x18] sm:$0xff]
  %v1168 = vld [vmem:[%s9 + $0x20] sm:$0xff]
  %v1169 = vld [vmem:[%s9 + $0x28] sm:$0xff]
  %v1170 = vld [vmem:[%s9 + $0x30] sm:$0xff]
  %v1171 = vld [vmem:[%s9 + $0x38] sm:$0xff]
  %v1172 = vld [vmem:[%s11] sm:$0x1]
  %v1173 = vperm.slane %v1159, 0
  %vm1174 = vcmask 261120
  %v1176 = vsel %vm1174, %v1090, 0
  %v1179 = vsel %vm1174, %v1091, 0
  %1181 = vmatpush.msra.mxu0 0.0
  %1182 = vmatpush.msra.mxu0 0.0
  %1183 = vmatpush.msra.mxu0 0.0
  %1184 = vmatpush.msra.mxu0 0.0
  %1185 = vmatpush.msra.mxu0 0.0
  %1186 = vmatpush.msra.mxu0 0.0
  %1187 = vmatpush.msra.mxu0 0.0
  %1188 = vmatpush.msra.mxu0 0.0
  %1189 = vmatpush.msra.mxu0 0.0
  %1190 = vmatpush.msra.mxu0 0.0
  %1191 = vmatpush.msra.mxu0 0.0
  %1192 = vmatpush.msra.mxu0 0.0
  %1193 = vmatpush.msra.mxu0 %v1148
  %1194 = vmatpush.msra.mxu0 %v1147
  %1195 = vmatpush.msra.mxu0 %v1146
  %1196 = vmatpush.msra.mxu0 %v1145
  %1197 = vmatmul.f32.gmra.mxu0 %v1176
  %v1198 = vpop.f32.mrf.mxu0
  %v1199 = vadd.f32 %v1173, %v1198
  %1200 = vmatmul.f32.gmra.mxu0 %v1179
  %v1201 = vpop.f32.mrf.mxu0
  %v1202 = vadd.f32 %v1173, %v1201
  %1203 = vdwg.mxu0
  %v1204 = vperm.slane %v1159, 1
  %v1206 = vsel %vm1174, %v1092, 0
  %v1209 = vsel %vm1174, %v1093, 0
  %1211 = vmatpush.msra.mxu0 0.0
  %1212 = vmatpush.msra.mxu0 0.0
  %1213 = vmatpush.msra.mxu0 0.0
  %1214 = vmatpush.msra.mxu0 0.0
  %1215 = vmatpush.msra.mxu0 0.0
  %1216 = vmatpush.msra.mxu0 0.0
  %1217 = vmatpush.msra.mxu0 0.0
  %1218 = vmatpush.msra.mxu0 0.0
  %1219 = vmatpush.msra.mxu0 0.0
  %1220 = vmatpush.msra.mxu0 0.0
  %1221 = vmatpush.msra.mxu0 0.0
  %1222 = vmatpush.msra.mxu0 0.0
  %1223 = vmatpush.msra.mxu0 %v1153
  %1224 = vmatpush.msra.mxu0 %v1152
  %1225 = vmatpush.msra.mxu0 %v1151
  %1226 = vmatpush.msra.mxu0 %v1150
  %1227 = vmatmul.f32.gmra.mxu0 %v1206
  %v1228 = vpop.f32.mrf.mxu0
  %v1229 = vadd.f32 %v1204, %v1228
  %1230 = vmatmul.f32.gmra.mxu0 %v1209
  %v1231 = vpop.f32.mrf.mxu0
  %v1232 = vadd.f32 %v1204, %v1231
  %1233 = vdwg.mxu0
  %vm1234 = vcmask 130048
  %v1236 = vsel %vm1234, %v1094, 0
  %v1239 = vsel %vm1234, %v1095, 0
  %v1242 = vsel %vm1234, %v1096, 0
  %v1245 = vsel %vm1234, %v1097, 0
  %v1248 = vsel %vm1234, %v1098, 0
  %v1251 = vsel %vm1234, %v1099, 0
  %v1254 = vsel %vm1234, %v1100, 0
  %v1257 = vsel %vm1234, %v1101, 0
  %v1260 = vsel %vm1234, %v1102, 0
  %v1263 = vsel %vm1234, %v1103, 0
  %v1266 = vsel %vm1234, %v1104, 0
  %v1269 = vsel %vm1234, %v1105, 0
  %v1272 = vsel %vm1234, %v1106, 0
  %v1275 = vsel %vm1234, %v1107, 0
  %v1278 = vsel %vm1234, %v1108, 0
  %v1281 = vsel %vm1234, %v1109, 0
  %1283 = vmatpush.msra.mxu0 0.0
  %1284 = vmatpush.msra.mxu0 0.0
  %1285 = vmatpush.msra.mxu0 0.0
  %1286 = vmatpush.msra.mxu0 0.0
  %1287 = vmatpush.msra.mxu0 0.0
  %1288 = vmatpush.msra.mxu0 0.0
  %1289 = vmatpush.msra.mxu0 0.0
  %1290 = vmatpush.msra.mxu0 0.0
  %1291 = vmatpush.msra.mxu0 0.0
  %1292 = vmatpush.msra.mxu0 0.0
  %1293 = vmatpush.msra.mxu0 0.0
  %1294 = vmatpush.msra.mxu0 0.0
  %1295 = vmatpush.msra.mxu0 0.0
  %1296 = vmatpush.msra.mxu0 0.0
  %1297 = vmatpush.msra.mxu0 %v1202
  %1298 = vmatpush.msra.mxu0 %v1199
  %1299 = vmatmul.f32.gmra.mxu0 %v1236
  %v1300 = vpop.f32.mrf.mxu0
  %v1301 = vadd.f32 0.0, %v1300
  %1302 = vmatmul.f32.gmra.mxu0 %v1239
  %v1303 = vpop.f32.mrf.mxu0
  %v1304 = vadd.f32 0.0, %v1303
  %1305 = vmatmul.f32.gmra.mxu0 %v1242
  %v1306 = vpop.f32.mrf.mxu0
  %v1307 = vadd.f32 0.0, %v1306
  %1308 = vmatmul.f32.gmra.mxu0 %v1245
  %v1309 = vpop.f32.mrf.mxu0
  %v1310 = vadd.f32 0.0, %v1309
  %1311 = vmatmul.f32.gmra.mxu0 %v1248
  %v1312 = vpop.f32.mrf.mxu0
  %v1313 = vadd.f32 0.0, %v1312
  %1314 = vmatmul.f32.gmra.mxu0 %v1251
  %v1315 = vpop.f32.mrf.mxu0
  %v1316 = vadd.f32 0.0, %v1315
  %1317 = vmatmul.f32.gmra.mxu0 %v1254
  %v1318 = vpop.f32.mrf.mxu0
  %v1319 = vadd.f32 0.0, %v1318
  %1320 = vmatmul.f32.gmra.mxu0 %v1257
  %v1321 = vpop.f32.mrf.mxu0
  %v1322 = vadd.f32 0.0, %v1321
  %1323 = vmatmul.f32.gmra.mxu0 %v1260
  %v1324 = vpop.f32.mrf.mxu0
  %v1325 = vadd.f32 0.0, %v1324
  %1326 = vmatmul.f32.gmra.mxu0 %v1263
  %v1327 = vpop.f32.mrf.mxu0
  %v1328 = vadd.f32 0.0, %v1327
  %1329 = vmatmul.f32.gmra.mxu0 %v1266
  %v1330 = vpop.f32.mrf.mxu0
  %v1331 = vadd.f32 0.0, %v1330
  %1332 = vmatmul.f32.gmra.mxu0 %v1269
  %v1333 = vpop.f32.mrf.mxu0
  %v1334 = vadd.f32 0.0, %v1333
  %1335 = vmatmul.f32.gmra.mxu0 %v1272
  %v1336 = vpop.f32.mrf.mxu0
  %v1337 = vadd.f32 0.0, %v1336
  %1338 = vmatmul.f32.gmra.mxu0 %v1275
  %v1339 = vpop.f32.mrf.mxu0
  %v1340 = vadd.f32 0.0, %v1339
  %1341 = vmatmul.f32.gmra.mxu0 %v1278
  %v1342 = vpop.f32.mrf.mxu0
  %v1343 = vadd.f32 0.0, %v1342
  %1344 = vmatmul.f32.gmra.mxu0 %v1281
  %v1345 = vpop.f32.mrf.mxu0
  %v1346 = vadd.f32 0.0, %v1345
  %1347 = vdwg.mxu0
  %v1348 = vmul.f32 %v1301, %v1129
  %v1349 = vmul.f32 %v1304, %v1130
  %v1350 = vmul.f32 %v1307, %v1131
  %v1351 = vmul.f32 %v1310, %v1132
  %v1352 = vmul.f32 %v1313, %v1133
  %v1353 = vmul.f32 %v1316, %v1134
  %v1354 = vmul.f32 %v1319, %v1135
  %v1355 = vmul.f32 %v1322, %v1136
  %v1356 = vmul.f32 %v1325, %v1137
  %v1357 = vmul.f32 %v1328, %v1138
  %v1358 = vmul.f32 %v1331, %v1139
  %v1359 = vmul.f32 %v1334, %v1140
  %v1360 = vmul.f32 %v1337, %v1141
  %v1361 = vmul.f32 %v1340, %v1142
  %v1362 = vmul.f32 %v1343, %v1143
  %v1363 = vmul.f32 %v1346, %v1144
  %v1365 = vsel %vm1174, %v1348, 0
  %v1368 = vsel %vm1174, %v1349, 0
  %v1371 = vsel %vm1174, %v1350, 0
  %v1374 = vsel %vm1174, %v1351, 0
  %v1377 = vsel %vm1174, %v1352, 0
  %v1380 = vsel %vm1174, %v1353, 0
  %v1383 = vsel %vm1174, %v1354, 0
  %v1386 = vsel %vm1174, %v1355, 0
  %v1389 = vsel %vm1174, %v1356, 0
  %v1392 = vsel %vm1174, %v1357, 0
  %v1395 = vsel %vm1174, %v1358, 0
  %v1398 = vsel %vm1174, %v1359, 0
  %v1401 = vsel %vm1174, %v1360, 0
  %v1404 = vsel %vm1174, %v1361, 0
  %v1407 = vsel %vm1174, %v1362, 0
  %v1410 = vsel %vm1174, %v1363, 0
  %v1413 = vsel %vm1174, %v1199, 0
  %v1416 = vsel %vm1174, %v1202, 0
  %1418 = vmatpush.xpose.msra.mxu0 0.0
  %1419 = vmatpush.xpose.msra.mxu0 0.0
  %1420 = vmatpush.xpose.msra.mxu0 0.0
  %1421 = vmatpush.xpose.msra.mxu0 0.0
  %1422 = vmatpush.xpose.msra.mxu0 0.0
  %1423 = vmatpush.xpose.msra.mxu0 0.0
  %1424 = vmatpush.xpose.msra.mxu0 0.0
  %1425 = vmatpush.xpose.msra.mxu0 0.0
  %1426 = vmatpush.xpose.msra.mxu0 0.0
  %1427 = vmatpush.xpose.msra.mxu0 0.0
  %1428 = vmatpush.xpose.msra.mxu0 0.0
  %1429 = vmatpush.xpose.msra.mxu0 0.0
  %1430 = vmatpush.xpose.msra.mxu0 0.0
  %1431 = vmatpush.xpose.msra.mxu0 0.0
  %1432 = vmatpush.xpose.msra.mxu0 %v1416
  %1433 = vmatpush.xpose.msra.mxu0 %v1413
  %1434 = vmatmul.f32.gmra.mxu0 %v1365
  %v1435 = vpop.f32.mrf.mxu0
  %v1436 = vadd.f32 %v1111, %v1435
  %1437 = vmatmul.f32.gmra.mxu0 %v1368
  %v1438 = vpop.f32.mrf.mxu0
  %v1439 = vadd.f32 %v1112, %v1438
  %1440 = vmatmul.f32.gmra.mxu0 %v1371
  %v1441 = vpop.f32.mrf.mxu0
  %v1442 = vadd.f32 %v1113, %v1441
  %1443 = vmatmul.f32.gmra.mxu0 %v1374
  %v1444 = vpop.f32.mrf.mxu0
  %v1445 = vadd.f32 %v1114, %v1444
  %1446 = vmatmul.f32.gmra.mxu0 %v1377
  %v1447 = vpop.f32.mrf.mxu0
  %v1448 = vadd.f32 %v1115, %v1447
  %1449 = vmatmul.f32.gmra.mxu0 %v1380
  %v1450 = vpop.f32.mrf.mxu0
  %v1451 = vadd.f32 %v1116, %v1450
  %1452 = vmatmul.f32.gmra.mxu0 %v1383
  %v1453 = vpop.f32.mrf.mxu0
  %v1454 = vadd.f32 %v1117, %v1453
  %1455 = vmatmul.f32.gmra.mxu0 %v1386
  %v1456 = vpop.f32.mrf.mxu0
  %v1457 = vadd.f32 %v1118, %v1456
  %1458 = vmatmul.f32.gmra.mxu0 %v1389
  %v1459 = vpop.f32.mrf.mxu0
  %v1460 = vadd.f32 %v1119, %v1459
  %1461 = vmatmul.f32.gmra.mxu0 %v1392
  %v1462 = vpop.f32.mrf.mxu0
  %v1463 = vadd.f32 %v1120, %v1462
  %1464 = vmatmul.f32.gmra.mxu0 %v1395
  %v1465 = vpop.f32.mrf.mxu0
  %v1466 = vadd.f32 %v1121, %v1465
  %1467 = vmatmul.f32.gmra.mxu0 %v1398
  %v1468 = vpop.f32.mrf.mxu0
  %v1469 = vadd.f32 %v1122, %v1468
  %1470 = vmatmul.f32.gmra.mxu0 %v1401
  %v1471 = vpop.f32.mrf.mxu0
  %v1472 = vadd.f32 %v1123, %v1471
  %1473 = vmatmul.f32.gmra.mxu0 %v1404
  %v1474 = vpop.f32.mrf.mxu0
  %v1475 = vadd.f32 %v1124, %v1474
  %1476 = vmatmul.f32.gmra.mxu0 %v1407
  %v1477 = vpop.f32.mrf.mxu0
  %v1478 = vadd.f32 %v1125, %v1477
  %1479 = vmatmul.f32.gmra.mxu0 %v1410
  %v1480 = vpop.f32.mrf.mxu0
  %v1481 = vadd.f32 %v1126, %v1480
  %1482 = vdwg.mxu0
  %v1483 = vsel %vm1234, %v1436, -inf
  %1484 = vmax.xlane.f32.xlu0 %v1483
  %v1485 = vpop.xlane.xlu0 %1484
  %v1486 = vsel %vm1234, %v1439, -inf
  %1487 = vmax.xlane.f32.xlu0 %v1486
  %v1488 = vpop.xlane.xlu0 %1487
  %v1489 = vsel %vm1234, %v1442, -inf
  %1490 = vmax.xlane.f32.xlu0 %v1489
  %v1491 = vpop.xlane.xlu0 %1490
  %v1492 = vsel %vm1234, %v1445, -inf
  %1493 = vmax.xlane.f32.xlu0 %v1492
  %v1494 = vpop.xlane.xlu0 %1493
  %v1495 = vsel %vm1234, %v1448, -inf
  %1496 = vmax.xlane.f32.xlu0 %v1495
  %v1497 = vpop.xlane.xlu0 %1496
  %v1498 = vsel %vm1234, %v1451, -inf
  %1499 = vmax.xlane.f32.xlu0 %v1498
  %v1500 = vpop.xlane.xlu0 %1499
  %v1501 = vsel %vm1234, %v1454, -inf
  %1502 = vmax.xlane.f32.xlu0 %v1501
  %v1503 = vpop.xlane.xlu0 %1502
  %v1504 = vsel %vm1234, %v1457, -inf
  %1505 = vmax.xlane.f32.xlu0 %v1504
  %v1506 = vpop.xlane.xlu0 %1505
  %v1507 = vsel %vm1234, %v1460, -inf
  %1508 = vmax.xlane.f32.xlu0 %v1507
  %v1509 = vpop.xlane.xlu0 %1508
  %v1510 = vsel %vm1234, %v1463, -inf
  %1511 = vmax.xlane.f32.xlu0 %v1510
  %v1512 = vpop.xlane.xlu0 %1511
  %v1513 = vsel %vm1234, %v1466, -inf
  %1514 = vmax.xlane.f32.xlu0 %v1513
  %v1515 = vpop.xlane.xlu0 %1514
  %v1516 = vsel %vm1234, %v1469, -inf
  %1517 = vmax.xlane.f32.xlu0 %v1516
  %v1518 = vpop.xlane.xlu0 %1517
  %v1519 = vsel %vm1234, %v1472, -inf
  %1520 = vmax.xlane.f32.xlu0 %v1519
  %v1521 = vpop.xlane.xlu0 %1520
  %v1522 = vsel %vm1234, %v1475, -inf
  %1523 = vmax.xlane.f32.xlu0 %v1522
  %v1524 = vpop.xlane.xlu0 %1523
  %v1525 = vsel %vm1234, %v1478, -inf
  %1526 = vmax.xlane.f32.xlu0 %v1525
  %v1527 = vpop.xlane.xlu0 %1526
  %v1528 = vsel %vm1234, %v1481, -inf
  %1529 = vmax.xlane.f32.xlu0 %v1528
  %v1530 = vpop.xlane.xlu0 %1529
  %v1531 = vsub.f32 %v1436, %v1485
  %v1532 = vsub.f32 %v1439, %v1488
  %v1533 = vsub.f32 %v1442, %v1491
  %v1534 = vsub.f32 %v1445, %v1494
  %v1535 = vsub.f32 %v1448, %v1497
  %v1536 = vsub.f32 %v1451, %v1500
  %v1537 = vsub.f32 %v1454, %v1503
  %v1538 = vsub.f32 %v1457, %v1506
  %v1539 = vsub.f32 %v1460, %v1509
  %v1540 = vsub.f32 %v1463, %v1512
  %v1541 = vsub.f32 %v1466, %v1515
  %v1542 = vsub.f32 %v1469, %v1518
  %v1543 = vsub.f32 %v1472, %v1521
  %v1544 = vsub.f32 %v1475, %v1524
  %v1545 = vsub.f32 %v1478, %v1527
  %v1546 = vsub.f32 %v1481, %v1530
  %v1547 = vmul.f32 %v1531, 1.442695
  %v1548 = vpow.pop %v1547
  %v1549 = vmul.f32 %v1532, 1.442695
  %v1550 = vpow.pop %v1549
  %v1551 = vmul.f32 %v1533, 1.442695
  %v1552 = vpow.pop %v1551
  %v1553 = vmul.f32 %v1534, 1.442695
  %v1554 = vpow.pop %v1553
  %v1555 = vmul.f32 %v1535, 1.442695
  %v1556 = vpow.pop %v1555
  %v1557 = vmul.f32 %v1536, 1.442695
  %v1558 = vpow.pop %v1557
  %v1559 = vmul.f32 %v1537, 1.442695
  %v1560 = vpow.pop %v1559
  %v1561 = vmul.f32 %v1538, 1.442695
  %v1562 = vpow.pop %v1561
  %v1563 = vmul.f32 %v1539, 1.442695
  %v1564 = vpow.pop %v1563
  %v1565 = vmul.f32 %v1540, 1.442695
  %v1566 = vpow.pop %v1565
  %v1567 = vmul.f32 %v1541, 1.442695
  %v1568 = vpow.pop %v1567
  %v1569 = vmul.f32 %v1542, 1.442695
  %v1570 = vpow.pop %v1569
  %v1571 = vmul.f32 %v1543, 1.442695
  %v1572 = vpow.pop %v1571
  %v1573 = vmul.f32 %v1544, 1.442695
  %v1574 = vpow.pop %v1573
  %v1575 = vmul.f32 %v1545, 1.442695
  %v1576 = vpow.pop %v1575
  %v1577 = vmul.f32 %v1546, 1.442695
  %v1578 = vpow.pop %v1577
  %v1579 = vsel %vm1234, %v1548, 0.0
  %1580 = vadd.xlane.f32.xlu0 %v1579
  %v1581 = vpop.xlane.xlu0 %1580
  %v1582 = vsel %vm1234, %v1550, 0.0
  %1583 = vadd.xlane.f32.xlu0 %v1582
  %v1584 = vpop.xlane.xlu0 %1583
  %v1585 = vsel %vm1234, %v1552, 0.0
  %1586 = vadd.xlane.f32.xlu0 %v1585
  %v1587 = vpop.xlane.xlu0 %1586
  %v1588 = vsel %vm1234, %v1554, 0.0
  %1589 = vadd.xlane.f32.xlu0 %v1588
  %v1590 = vpop.xlane.xlu0 %1589
  %v1591 = vsel %vm1234, %v1556, 0.0
  %1592 = vadd.xlane.f32.xlu0 %v1591
  %v1593 = vpop.xlane.xlu0 %1592
  %v1594 = vsel %vm1234, %v1558, 0.0
  %1595 = vadd.xlane.f32.xlu0 %v1594
  %v1596 = vpop.xlane.xlu0 %1595
  %v1597 = vsel %vm1234, %v1560, 0.0
  %1598 = vadd.xlane.f32.xlu0 %v1597
  %v1599 = vpop.xlane.xlu0 %1598
  %v1600 = vsel %vm1234, %v1562, 0.0
  %1601 = vadd.xlane.f32.xlu0 %v1600
  %v1602 = vpop.xlane.xlu0 %1601
  %v1603 = vsel %vm1234, %v1564, 0.0
  %1604 = vadd.xlane.f32.xlu0 %v1603
  %v1605 = vpop.xlane.xlu0 %1604
  %v1606 = vsel %vm1234, %v1566, 0.0
  %1607 = vadd.xlane.f32.xlu0 %v1606
  %v1608 = vpop.xlane.xlu0 %1607
  %v1609 = vsel %vm1234, %v1568, 0.0
  %1610 = vadd.xlane.f32.xlu0 %v1609
  %v1611 = vpop.xlane.xlu0 %1610
  %v1612 = vsel %vm1234, %v1570, 0.0
  %1613 = vadd.xlane.f32.xlu0 %v1612
  %v1614 = vpop.xlane.xlu0 %1613
  %v1615 = vsel %vm1234, %v1572, 0.0
  %1616 = vadd.xlane.f32.xlu0 %v1615
  %v1617 = vpop.xlane.xlu0 %1616
  %v1618 = vsel %vm1234, %v1574, 0.0
  %1619 = vadd.xlane.f32.xlu0 %v1618
  %v1620 = vpop.xlane.xlu0 %1619
  %v1621 = vsel %vm1234, %v1576, 0.0
  %1622 = vadd.xlane.f32.xlu0 %v1621
  %v1623 = vpop.xlane.xlu0 %1622
  %v1624 = vsel %vm1234, %v1578, 0.0
  %1625 = vadd.xlane.f32.xlu0 %v1624
  %v1626 = vpop.xlane.xlu0 %1625
  %v1627 = vrcp.pop %v1581
  %v1628 = vmul.f32 %v1581, %v1627
  %v1629 = vsub.f32 1.0, %v1628
  %v1630 = vmul.f32 %v1627, %v1629
  %v1631 = vadd.f32 %v1627, %v1630
  %vm1632 = vweird.f32 %v1581
  %vm1633 = vweird.f32 %v1627
  %vm1634 = vmor %vm1632, %vm1633
  %v1635 = vsel %vm1634, %v1627, %v1631
  %v1636 = vand.u32 2147483647, %v1581
  %vm1637 = vcmp.eq.f32.partialorder %v1636, 8.507059e+37
  %v1638 = vand.u32 %v1581, 2147483648
  %v1639 = vor.u32 1.1754944e-38, %v1638
  %v1640 = vsel %vm1637, %v1639, %v1635
  %v1641 = vmul.f32 %v1548, %v1640
  %v1642 = vrcp.pop %v1584
  %v1643 = vmul.f32 %v1584, %v1642
  %v1644 = vsub.f32 1.0, %v1643
  %v1645 = vmul.f32 %v1642, %v1644
  %v1646 = vadd.f32 %v1642, %v1645
  %vm1647 = vweird.f32 %v1584
  %vm1648 = vweird.f32 %v1642
  %vm1649 = vmor %vm1647, %vm1648
  %v1650 = vsel %vm1649, %v1642, %v1646
  %v1651 = vand.u32 2147483647, %v1584
  %vm1652 = vcmp.eq.f32.partialorder %v1651, 8.507059e+37
  %v1653 = vand.u32 %v1584, 2147483648
  %v1654 = vor.u32 1.1754944e-38, %v1653
  %v1655 = vsel %vm1652, %v1654, %v1650
  %v1656 = vmul.f32 %v1550, %v1655
  %v1657 = vrcp.pop %v1587
  %v1658 = vmul.f32 %v1587, %v1657
  %v1659 = vsub.f32 1.0, %v1658
  %v1660 = vmul.f32 %v1657, %v1659
  %v1661 = vadd.f32 %v1657, %v1660
  %vm1662 = vweird.f32 %v1587
  %vm1663 = vweird.f32 %v1657
  %vm1664 = vmor %vm1662, %vm1663
  %v1665 = vsel %vm1664, %v1657, %v1661
  %v1666 = vand.u32 2147483647, %v1587
  %vm1667 = vcmp.eq.f32.partialorder %v1666, 8.507059e+37
  %v1668 = vand.u32 %v1587, 2147483648
  %v1669 = vor.u32 1.1754944e-38, %v1668
  %v1670 = vsel %vm1667, %v1669, %v1665
  %v1671 = vmul.f32 %v1552, %v1670
  %v1672 = vrcp.pop %v1590
  %v1673 = vmul.f32 %v1590, %v1672
  %v1674 = vsub.f32 1.0, %v1673
  %v1675 = vmul.f32 %v1672, %v1674
  %v1676 = vadd.f32 %v1672, %v1675
  %vm1677 = vweird.f32 %v1590
  %vm1678 = vweird.f32 %v1672
  %vm1679 = vmor %vm1677, %vm1678
  %v1680 = vsel %vm1679, %v1672, %v1676
  %v1681 = vand.u32 2147483647, %v1590
  %vm1682 = vcmp.eq.f32.partialorder %v1681, 8.507059e+37
  %v1683 = vand.u32 %v1590, 2147483648
  %v1684 = vor.u32 1.1754944e-38, %v1683
  %v1685 = vsel %vm1682, %v1684, %v1680
  %v1686 = vmul.f32 %v1554, %v1685
  %v1687 = vrcp.pop %v1593
  %v1688 = vmul.f32 %v1593, %v1687
  %v1689 = vsub.f32 1.0, %v1688
  %v1690 = vmul.f32 %v1687, %v1689
  %v1691 = vadd.f32 %v1687, %v1690
  %vm1692 = vweird.f32 %v1593
  %vm1693 = vweird.f32 %v1687
  %vm1694 = vmor %vm1692, %vm1693
  %v1695 = vsel %vm1694, %v1687, %v1691
  %v1696 = vand.u32 2147483647, %v1593
  %vm1697 = vcmp.eq.f32.partialorder %v1696, 8.507059e+37
  %v1698 = vand.u32 %v1593, 2147483648
  %v1699 = vor.u32 1.1754944e-38, %v1698
  %v1700 = vsel %vm1697, %v1699, %v1695
  %v1701 = vmul.f32 %v1556, %v1700
  %v1702 = vrcp.pop %v1596
  %v1703 = vmul.f32 %v1596, %v1702
  %v1704 = vsub.f32 1.0, %v1703
  %v1705 = vmul.f32 %v1702, %v1704
  %v1706 = vadd.f32 %v1702, %v1705
  %vm1707 = vweird.f32 %v1596
  %vm1708 = vweird.f32 %v1702
  %vm1709 = vmor %vm1707, %vm1708
  %v1710 = vsel %vm1709, %v1702, %v1706
  %v1711 = vand.u32 2147483647, %v1596
  %vm1712 = vcmp.eq.f32.partialorder %v1711, 8.507059e+37
  %v1713 = vand.u32 %v1596, 2147483648
  %v1714 = vor.u32 1.1754944e-38, %v1713
  %v1715 = vsel %vm1712, %v1714, %v1710
  %v1716 = vmul.f32 %v1558, %v1715
  %v1717 = vrcp.pop %v1599
  %v1718 = vmul.f32 %v1599, %v1717
  %v1719 = vsub.f32 1.0, %v1718
  %v1720 = vmul.f32 %v1717, %v1719
  %v1721 = vadd.f32 %v1717, %v1720
  %vm1722 = vweird.f32 %v1599
  %vm1723 = vweird.f32 %v1717
  %vm1724 = vmor %vm1722, %vm1723
  %v1725 = vsel %vm1724, %v1717, %v1721
  %v1726 = vand.u32 2147483647, %v1599
  %vm1727 = vcmp.eq.f32.partialorder %v1726, 8.507059e+37
  %v1728 = vand.u32 %v1599, 2147483648
  %v1729 = vor.u32 1.1754944e-38, %v1728
  %v1730 = vsel %vm1727, %v1729, %v1725
  %v1731 = vmul.f32 %v1560, %v1730
  %v1732 = vrcp.pop %v1602
  %v1733 = vmul.f32 %v1602, %v1732
  %v1734 = vsub.f32 1.0, %v1733
  %v1735 = vmul.f32 %v1732, %v1734
  %v1736 = vadd.f32 %v1732, %v1735
  %vm1737 = vweird.f32 %v1602
  %vm1738 = vweird.f32 %v1732
  %vm1739 = vmor %vm1737, %vm1738
  %v1740 = vsel %vm1739, %v1732, %v1736
  %v1741 = vand.u32 2147483647, %v1602
  %vm1742 = vcmp.eq.f32.partialorder %v1741, 8.507059e+37
  %v1743 = vand.u32 %v1602, 2147483648
  %v1744 = vor.u32 1.1754944e-38, %v1743
  %v1745 = vsel %vm1742, %v1744, %v1740
  %v1746 = vmul.f32 %v1562, %v1745
  %v1747 = vrcp.pop %v1605
  %v1748 = vmul.f32 %v1605, %v1747
  %v1749 = vsub.f32 1.0, %v1748
  %v1750 = vmul.f32 %v1747, %v1749
  %v1751 = vadd.f32 %v1747, %v1750
  %vm1752 = vweird.f32 %v1605
  %vm1753 = vweird.f32 %v1747
  %vm1754 = vmor %vm1752, %vm1753
  %v1755 = vsel %vm1754, %v1747, %v1751
  %v1756 = vand.u32 2147483647, %v1605
  %vm1757 = vcmp.eq.f32.partialorder %v1756, 8.507059e+37
  %v1758 = vand.u32 %v1605, 2147483648
  %v1759 = vor.u32 1.1754944e-38, %v1758
  %v1760 = vsel %vm1757, %v1759, %v1755
  %v1761 = vmul.f32 %v1564, %v1760
  %v1762 = vrcp.pop %v1608
  %v1763 = vmul.f32 %v1608, %v1762
  %v1764 = vsub.f32 1.0, %v1763
  %v1765 = vmul.f32 %v1762, %v1764
  %v1766 = vadd.f32 %v1762, %v1765
  %vm1767 = vweird.f32 %v1608
  %vm1768 = vweird.f32 %v1762
  %vm1769 = vmor %vm1767, %vm1768
  %v1770 = vsel %vm1769, %v1762, %v1766
  %v1771 = vand.u32 2147483647, %v1608
  %vm1772 = vcmp.eq.f32.partialorder %v1771, 8.507059e+37
  %v1773 = vand.u32 %v1608, 2147483648
  %v1774 = vor.u32 1.1754944e-38, %v1773
  %v1775 = vsel %vm1772, %v1774, %v1770
  %v1776 = vmul.f32 %v1566, %v1775
  %v1777 = vrcp.pop %v1611
  %v1778 = vmul.f32 %v1611, %v1777
  %v1779 = vsub.f32 1.0, %v1778
  %v1780 = vmul.f32 %v1777, %v1779
  %v1781 = vadd.f32 %v1777, %v1780
  %vm1782 = vweird.f32 %v1611
  %vm1783 = vweird.f32 %v1777
  %vm1784 = vmor %vm1782, %vm1783
  %v1785 = vsel %vm1784, %v1777, %v1781
  %v1786 = vand.u32 2147483647, %v1611
  %vm1787 = vcmp.eq.f32.partialorder %v1786, 8.507059e+37
  %v1788 = vand.u32 %v1611, 2147483648
  %v1789 = vor.u32 1.1754944e-38, %v1788
  %v1790 = vsel %vm1787, %v1789, %v1785
  %v1791 = vmul.f32 %v1568, %v1790
  %v1792 = vrcp.pop %v1614
  %v1793 = vmul.f32 %v1614, %v1792
  %v1794 = vsub.f32 1.0, %v1793
  %v1795 = vmul.f32 %v1792, %v1794
  %v1796 = vadd.f32 %v1792, %v1795
  %vm1797 = vweird.f32 %v1614
  %vm1798 = vweird.f32 %v1792
  %vm1799 = vmor %vm1797, %vm1798
  %v1800 = vsel %vm1799, %v1792, %v1796
  %v1801 = vand.u32 2147483647, %v1614
  %vm1802 = vcmp.eq.f32.partialorder %v1801, 8.507059e+37
  %v1803 = vand.u32 %v1614, 2147483648
  %v1804 = vor.u32 1.1754944e-38, %v1803
  %v1805 = vsel %vm1802, %v1804, %v1800
  %v1806 = vmul.f32 %v1570, %v1805
  %v1807 = vrcp.pop %v1617
  %v1808 = vmul.f32 %v1617, %v1807
  %v1809 = vsub.f32 1.0, %v1808
  %v1810 = vmul.f32 %v1807, %v1809
  %v1811 = vadd.f32 %v1807, %v1810
  %vm1812 = vweird.f32 %v1617
  %vm1813 = vweird.f32 %v1807
  %vm1814 = vmor %vm1812, %vm1813
  %v1815 = vsel %vm1814, %v1807, %v1811
  %v1816 = vand.u32 2147483647, %v1617
  %vm1817 = vcmp.eq.f32.partialorder %v1816, 8.507059e+37
  %v1818 = vand.u32 %v1617, 2147483648
  %v1819 = vor.u32 1.1754944e-38, %v1818
  %v1820 = vsel %vm1817, %v1819, %v1815
  %v1821 = vmul.f32 %v1572, %v1820
  %v1822 = vrcp.pop %v1620
  %v1823 = vmul.f32 %v1620, %v1822
  %v1824 = vsub.f32 1.0, %v1823
  %v1825 = vmul.f32 %v1822, %v1824
  %v1826 = vadd.f32 %v1822, %v1825
  %vm1827 = vweird.f32 %v1620
  %vm1828 = vweird.f32 %v1822
  %vm1829 = vmor %vm1827, %vm1828
  %v1830 = vsel %vm1829, %v1822, %v1826
  %v1831 = vand.u32 2147483647, %v1620
  %vm1832 = vcmp.eq.f32.partialorder %v1831, 8.507059e+37
  %v1833 = vand.u32 %v1620, 2147483648
  %v1834 = vor.u32 1.1754944e-38, %v1833
  %v1835 = vsel %vm1832, %v1834, %v1830
  %v1836 = vmul.f32 %v1574, %v1835
  %v1837 = vrcp.pop %v1623
  %v1838 = vmul.f32 %v1623, %v1837
  %v1839 = vsub.f32 1.0, %v1838
  %v1840 = vmul.f32 %v1837, %v1839
  %v1841 = vadd.f32 %v1837, %v1840
  %vm1842 = vweird.f32 %v1623
  %vm1843 = vweird.f32 %v1837
  %vm1844 = vmor %vm1842, %vm1843
  %v1845 = vsel %vm1844, %v1837, %v1841
  %v1846 = vand.u32 2147483647, %v1623
  %vm1847 = vcmp.eq.f32.partialorder %v1846, 8.507059e+37
  %v1848 = vand.u32 %v1623, 2147483648
  %v1849 = vor.u32 1.1754944e-38, %v1848
  %v1850 = vsel %vm1847, %v1849, %v1845
  %v1851 = vmul.f32 %v1576, %v1850
  %v1852 = vrcp.pop %v1626
  %v1853 = vmul.f32 %v1626, %v1852
  %v1854 = vsub.f32 1.0, %v1853
  %v1855 = vmul.f32 %v1852, %v1854
  %v1856 = vadd.f32 %v1852, %v1855
  %vm1857 = vweird.f32 %v1626
  %vm1858 = vweird.f32 %v1852
  %vm1859 = vmor %vm1857, %vm1858
  %v1860 = vsel %vm1859, %v1852, %v1856
  %v1861 = vand.u32 2147483647, %v1626
  %vm1862 = vcmp.eq.f32.partialorder %v1861, 8.507059e+37
  %v1863 = vand.u32 %v1626, 2147483648
  %v1864 = vor.u32 1.1754944e-38, %v1863
  %v1865 = vsel %vm1862, %v1864, %v1860
  %v1866 = vmul.f32 %v1578, %v1865
  %v1868 = vsel %vm1234, %v1641, 0
  %v1871 = vsel %vm1234, %v1656, 0
  %v1874 = vsel %vm1234, %v1671, 0
  %v1877 = vsel %vm1234, %v1686, 0
  %v1880 = vsel %vm1234, %v1701, 0
  %v1883 = vsel %vm1234, %v1716, 0
  %v1886 = vsel %vm1234, %v1731, 0
  %v1889 = vsel %vm1234, %v1746, 0
  %v1892 = vsel %vm1234, %v1761, 0
  %v1895 = vsel %vm1234, %v1776, 0
  %v1898 = vsel %vm1234, %v1791, 0
  %v1901 = vsel %vm1234, %v1806, 0
  %v1904 = vsel %vm1234, %v1821, 0
  %v1907 = vsel %vm1234, %v1836, 0
  %v1910 = vsel %vm1234, %v1851, 0
  %v1913 = vsel %vm1234, %v1866, 0
  %1915 = vmatpush.msra.mxu0 0.0
  %1916 = vmatpush.msra.mxu0 0.0
  %1917 = vmatpush.msra.mxu0 0.0
  %1918 = vmatpush.msra.mxu0 0.0
  %1919 = vmatpush.msra.mxu0 0.0
  %1920 = vmatpush.msra.mxu0 0.0
  %1921 = vmatpush.msra.mxu0 0.0
  %1922 = vmatpush.msra.mxu0 0.0
  %1923 = vmatpush.msra.mxu0 0.0
  %1924 = vmatpush.msra.mxu0 0.0
  %1925 = vmatpush.msra.mxu0 0.0
  %1926 = vmatpush.msra.mxu0 0.0
  %1927 = vmatpush.msra.mxu0 0.0
  %1928 = vmatpush.msra.mxu0 0.0
  %1929 = vmatpush.msra.mxu0 %v1232
  %1930 = vmatpush.msra.mxu0 %v1229
  %1931 = vmatmul.f32.gmra.mxu0 %v1868
  %v1932 = vpop.f32.mrf.mxu0
  %v1933 = vadd.f32 0.0, %v1932
  %1934 = vmatmul.f32.gmra.mxu0 %v1871
  %v1935 = vpop.f32.mrf.mxu0
  %v1936 = vadd.f32 0.0, %v1935
  %1937 = vmatmul.f32.gmra.mxu0 %v1874
  %v1938 = vpop.f32.mrf.mxu0
  %v1939 = vadd.f32 0.0, %v1938
  %1940 = vmatmul.f32.gmra.mxu0 %v1877
  %v1941 = vpop.f32.mrf.mxu0
  %v1942 = vadd.f32 0.0, %v1941
  %1943 = vmatmul.f32.gmra.mxu0 %v1880
  %v1944 = vpop.f32.mrf.mxu0
  %v1945 = vadd.f32 0.0, %v1944
  %1946 = vmatmul.f32.gmra.mxu0 %v1883
  %v1947 = vpop.f32.mrf.mxu0
  %v1948 = vadd.f32 0.0, %v1947
  %1949 = vmatmul.f32.gmra.mxu0 %v1886
  %v1950 = vpop.f32.mrf.mxu0
  %v1951 = vadd.f32 0.0, %v1950
  %1952 = vmatmul.f32.gmra.mxu0 %v1889
  %v1953 = vpop.f32.mrf.mxu0
  %v1954 = vadd.f32 0.0, %v1953
  %1955 = vmatmul.f32.gmra.mxu0 %v1892
  %v1956 = vpop.f32.mrf.mxu0
  %v1957 = vadd.f32 0.0, %v1956
  %1958 = vmatmul.f32.gmra.mxu0 %v1895
  %v1959 = vpop.f32.mrf.mxu0
  %v1960 = vadd.f32 0.0, %v1959
  %1961 = vmatmul.f32.gmra.mxu0 %v1898
  %v1962 = vpop.f32.mrf.mxu0
  %v1963 = vadd.f32 0.0, %v1962
  %1964 = vmatmul.f32.gmra.mxu0 %v1901
  %v1965 = vpop.f32.mrf.mxu0
  %v1966 = vadd.f32 0.0, %v1965
  %1967 = vmatmul.f32.gmra.mxu0 %v1904
  %v1968 = vpop.f32.mrf.mxu0
  %v1969 = vadd.f32 0.0, %v1968
  %1970 = vmatmul.f32.gmra.mxu0 %v1907
  %v1971 = vpop.f32.mrf.mxu0
  %v1972 = vadd.f32 0.0, %v1971
  %1973 = vmatmul.f32.gmra.mxu0 %v1910
  %v1974 = vpop.f32.mrf.mxu0
  %v1975 = vadd.f32 0.0, %v1974
  %1976 = vmatmul.f32.gmra.mxu0 %v1913
  %v1977 = vpop.f32.mrf.mxu0
  %v1978 = vadd.f32 0.0, %v1977
  %1979 = vdwg.mxu0
  %v1980 = vmul.f32 %v1933, %v1129
  %v1981 = vmul.f32 %v1936, %v1130
  %v1982 = vmul.f32 %v1939, %v1131
  %v1983 = vmul.f32 %v1942, %v1132
  %v1984 = vmul.f32 %v1945, %v1133
  %v1985 = vmul.f32 %v1948, %v1134
  %v1986 = vmul.f32 %v1951, %v1135
  %v1987 = vmul.f32 %v1954, %v1136
  %v1988 = vmul.f32 %v1957, %v1137
  %v1989 = vmul.f32 %v1960, %v1138
  %v1990 = vmul.f32 %v1963, %v1139
  %v1991 = vmul.f32 %v1966, %v1140
  %v1992 = vmul.f32 %v1969, %v1141
  %v1993 = vmul.f32 %v1972, %v1142
  %v1994 = vmul.f32 %v1975, %v1143
  %v1995 = vmul.f32 %v1978, %v1144
  %1996 = vmatpush.msra.mxu0 %v1995
  %1997 = vmatpush.msra.mxu0 %v1994
  %1998 = vmatpush.msra.mxu0 %v1993
  %1999 = vmatpush.msra.mxu0 %v1992
  %2000 = vmatpush.msra.mxu0 %v1991
  %2001 = vmatpush.msra.mxu0 %v1990
  %2002 = vmatpush.msra.mxu0 %v1989
  %2003 = vmatpush.msra.mxu0 %v1988
  %2004 = vmatpush.msra.mxu0 %v1987
  %2005 = vmatpush.msra.mxu0 %v1986
  %2006 = vmatpush.msra.mxu0 %v1985
  %2007 = vmatpush.msra.mxu0 %v1984
  %2008 = vmatpush.msra.mxu0 %v1983
  %2009 = vmatpush.msra.mxu0 %v1982
  %2010 = vmatpush.msra.mxu0 %v1981
  %2011 = vmatpush.msra.mxu0 %v1980
  %2012 = vmatmul.f32.gmra.mxu0 %v1127
  %v2013 = vpop.f32.mrf.mxu0
  %v2014 = vadd.f32 0.0, %v2013
  %2015 = vmatmul.f32.gmra.mxu0 %v1128
  %v2016 = vpop.f32.mrf.mxu0
  %v2017 = vadd.f32 0.0, %v2016
  %2018 = vdwg.mxu0
  %v2019 = vperm.slane %v1159, 2
  %v2021 = vsel %vm1174, %v2014, 0
  %v2024 = vsel %vm1174, %v2017, 0
  %2026 = vmatpush.msra.mxu0 0.0
  %2027 = vmatpush.msra.mxu0 0.0
  %2028 = vmatpush.msra.mxu0 0.0
  %2029 = vmatpush.msra.mxu0 0.0
  %2030 = vmatpush.msra.mxu0 0.0
  %2031 = vmatpush.msra.mxu0 0.0
  %2032 = vmatpush.msra.mxu0 0.0
  %2033 = vmatpush.msra.mxu0 0.0
  %2034 = vmatpush.msra.mxu0 0.0
  %2035 = vmatpush.msra.mxu0 0.0
  %2036 = vmatpush.msra.mxu0 0.0
  %2037 = vmatpush.msra.mxu0 0.0
  %2038 = vmatpush.msra.mxu0 %v1158
  %2039 = vmatpush.msra.mxu0 %v1157
  %2040 = vmatpush.msra.mxu0 %v1156
  %2041 = vmatpush.msra.mxu0 %v1155
  %2042 = vmatmul.f32.gmra.mxu0 %v2021
  %v2043 = vpop.f32.mrf.mxu0
  %v2044 = vadd.f32 %v2019, %v2043
  %2045 = vmatmul.f32.gmra.mxu0 %v2024
  %v2046 = vpop.f32.mrf.mxu0
  %v2047 = vadd.f32 %v2019, %v2046
  %2048 = vdwg.mxu0
  %v2049 = vadd.f32 %v1090, %v2044
  %v2050 = vadd.f32 %v1091, %v2047
  %v2051 = vsel %vm1174, %v2049, 0.0
  %2052 = vadd.xlane.f32.xlu0 %v2051
  %v2053 = vpop.xlane.xlu0 %2052
  %v2054 = vsel %vm1174, %v2050, 0.0
  %2055 = vadd.xlane.f32.xlu0 %v2054
  %v2056 = vpop.xlane.xlu0 %2055
  %v2057 = vrcp.pop 32.0
  %v2058 = vmul.f32 32.0, %v2057
  %v2059 = vsub.f32 1.0, %v2058
  %v2060 = vmul.f32 %v2057, %v2059
  %v2061 = vadd.f32 %v2057, %v2060
  %vm2062 = vweird.f32 %v2057
  %v2063 = vsel %vm2062, %v2057, %v2061
  %v2064 = vmul.f32 %v2053, %v2063
  %v2065 = vmul.f32 %v2056, %v2063
  %v2066 = vsub.f32 %v2049, %v2064
  %v2067 = vsub.f32 %v2050, %v2065
  %v2068 = vmul.f32 %v2066, %v2066
  %v2069 = vmul.f32 %v2067, %v2067
  %v2070 = vsel %vm1174, %v2068, 0.0
  %2071 = vadd.xlane.f32.xlu0 %v2070
  %v2072 = vpop.xlane.xlu0 %2071
  %v2073 = vsel %vm1174, %v2069, 0.0
  %2074 = vadd.xlane.f32.xlu0 %v2073
  %v2075 = vpop.xlane.xlu0 %2074
  %v2076 = vmul.f32 %v2072, %v2063
  %v2077 = vmul.f32 %v2075, %v2063
  %v2078 = vadd.f32 %v2076, 1e-05
  %v2079 = vadd.f32 %v2077, 1e-05
  %v2080 = vrsqrt.pop %v2078
  %v2081 = vmul.f32 %v2080, %v2078
  %v2082 = vmul.f32 %v2081, %v2080
  %v2083 = vmul.f32 0.5, %v2082
  %v2084 = vsub.f32 1.5, %v2083
  %v2085 = vmul.f32 %v2080, %v2084
  %vm2086 = vweird.f32 %v2078
  %vm2087 = vweird.f32 %v2080
  %vm2088 = vmor %vm2086, %vm2087
  %v2089 = vsel %vm2088, %v2080, %v2085
  %v2090 = vrsqrt.pop %v2079
  %v2091 = vmul.f32 %v2090, %v2079
  %v2092 = vmul.f32 %v2091, %v2090
  %v2093 = vmul.f32 0.5, %v2092
  %v2094 = vsub.f32 1.5, %v2093
  %v2095 = vmul.f32 %v2090, %v2094
  %vm2096 = vweird.f32 %v2079
  %vm2097 = vweird.f32 %v2090
  %vm2098 = vmor %vm2096, %vm2097
  %v2099 = vsel %vm2098, %v2090, %v2095
  %v2100 = vmul.f32 %v2066, %v2089
  %v2101 = vmul.f32 %v2067, %v2099
  %v2102 = vperm.slane %v1159, 3
  %v2103 = vmul.f32 %v2100, %v2102
  %v2104 = vmul.f32 %v2101, %v2102
  %v2105 = vperm.slane %v1159, 4
  %v2106 = vadd.f32 %v2103, %v2105
  %v2107 = vadd.f32 %v2104, %v2105
  %v2108 = vperm.slane %v1172, 0
  %v2110 = vsel %vm1174, %v2106, 0
  %v2113 = vsel %vm1174, %v2107, 0
  %2115 = vmatpush.msra.mxu0 0.0
  %2116 = vmatpush.msra.mxu0 0.0
  %2117 = vmatpush.msra.mxu0 0.0
  %2118 = vmatpush.msra.mxu0 0.0
  %2119 = vmatpush.msra.mxu0 0.0
  %2120 = vmatpush.msra.mxu0 0.0
  %2121 = vmatpush.msra.mxu0 0.0
  %2122 = vmatpush.msra.mxu0 0.0
  %2123 = vmatpush.msra.mxu0 0.0
  %2124 = vmatpush.msra.mxu0 0.0
  %2125 = vmatpush.msra.mxu0 0.0
  %2126 = vmatpush.msra.mxu0 0.0
  %2127 = vmatpush.msra.mxu0 %v1163
  %2128 = vmatpush.msra.mxu0 %v1162
  %2129 = vmatpush.msra.mxu0 %v1161
  %2130 = vmatpush.msra.mxu0 %v1160
  %2131 = vmatmul.f32.gmra.mxu0 %v2110
  %v2132 = vpop.f32.mrf.mxu0
  %v2133 = vadd.f32 %v2108, %v2132
  %2134 = vmatmul.f32.gmra.mxu0 %v2113
  %v2135 = vpop.f32.mrf.mxu0
  %v2136 = vadd.f32 %v2108, %v2135
  %2137 = vdwg.mxu0
  %v2138 = vmax.f32 %v2133, 0.0
  %v2139 = vmax.f32 %v2136, 0.0
  %v2140 = vperm.slane %v1159, 5
  %vm2141 = vcmask 523264
  %v2143 = vsel %vm2141, %v2138, 0
  %v2146 = vsel %vm2141, %v2139, 0
  %2148 = vmatpush.msra.mxu0 0.0
  %2149 = vmatpush.msra.mxu0 0.0
  %2150 = vmatpush.msra.mxu0 0.0
  %2151 = vmatpush.msra.mxu0 0.0
  %2152 = vmatpush.msra.mxu0 0.0
  %2153 = vmatpush.msra.mxu0 0.0
  %2154 = vmatpush.msra.mxu0 0.0
  %2155 = vmatpush.msra.mxu0 0.0
  %2156 = vmatpush.msra.mxu0 %v1171
  %2157 = vmatpush.msra.mxu0 %v1170
  %2158 = vmatpush.msra.mxu0 %v1169
  %2159 = vmatpush.msra.mxu0 %v1168
  %2160 = vmatpush.msra.mxu0 %v1167
  %2161 = vmatpush.msra.mxu0 %v1166
  %2162 = vmatpush.msra.mxu0 %v1165
  %2163 = vmatpush.msra.mxu0 %v1164
  %2164 = vmatmul.f32.gmra.mxu0 %v2143
  %v2165 = vpop.f32.mrf.mxu0
  %v2166 = vadd.f32 %v2140, %v2165
  %2167 = vmatmul.f32.gmra.mxu0 %v2146
  %v2168 = vpop.f32.mrf.mxu0
  %v2169 = vadd.f32 %v2140, %v2168
  %2170 = vdwg.mxu0
  %v2171 = vadd.f32 %v2106, %v2166
  %v2172 = vadd.f32 %v2107, %v2169
  %v2173 = vsel %vm1174, %v2171, 0.0
  %2174 = vadd.xlane.f32.xlu0 %v2173
  %v2175 = vpop.xlane.xlu0 %2174
  %v2176 = vsel %vm1174, %v2172, 0.0
  %2177 = vadd.xlane.f32.xlu0 %v2176
  %v2178 = vpop.xlane.xlu0 %2177
  %v2179 = vmul.f32 %v2175, %v2063
  %v2180 = vmul.f32 %v2178, %v2063
  %v2181 = vsub.f32 %v2171, %v2179
  %v2182 = vsub.f32 %v2172, %v2180
  %v2183 = vmul.f32 %v2181, %v2181
  %v2184 = vmul.f32 %v2182, %v2182
  %v2185 = vsel %vm1174, %v2183, 0.0
  %2186 = vadd.xlane.f32.xlu0 %v2185
  %v2187 = vpop.xlane.xlu0 %2186
  %v2188 = vsel %vm1174, %v2184, 0.0
  %2189 = vadd.xlane.f32.xlu0 %v2188
  %v2190 = vpop.xlane.xlu0 %2189
  %v2191 = vmul.f32 %v2187, %v2063
  %v2192 = vmul.f32 %v2190, %v2063
  %v2193 = vadd.f32 %v2191, 1e-05
  %v2194 = vadd.f32 %v2192, 1e-05
  %v2195 = vrsqrt.pop %v2193
  %v2196 = vmul.f32 %v2195, %v2193
  %v2197 = vmul.f32 %v2196, %v2195
  %v2198 = vmul.f32 0.5, %v2197
  %v2199 = vsub.f32 1.5, %v2198
  %v2200 = vmul.f32 %v2195, %v2199
  %vm2201 = vweird.f32 %v2193
  %vm2202 = vweird.f32 %v2195
  %vm2203 = vmor %vm2201, %vm2202
  %v2204 = vsel %vm2203, %v2195, %v2200
  %v2205 = vrsqrt.pop %v2194
  %v2206 = vmul.f32 %v2205, %v2194
  %v2207 = vmul.f32 %v2206, %v2205
  %v2208 = vmul.f32 0.5, %v2207
  %v2209 = vsub.f32 1.5, %v2208
  %v2210 = vmul.f32 %v2205, %v2209
  %vm2211 = vweird.f32 %v2194
  %vm2212 = vweird.f32 %v2205
  %vm2213 = vmor %vm2211, %vm2212
  %v2214 = vsel %vm2213, %v2205, %v2210
  %v2215 = vmul.f32 %v2181, %v2204
  %v2216 = vmul.f32 %v2182, %v2214
  %v2217 = vperm.slane %v1159, 6
  %v2218 = vmul.f32 %v2215, %v2217
  %v2219 = vmul.f32 %v2216, %v2217
  %v2220 = vperm.slane %v1159, 7
  %v2221 = vadd.f32 %v2218, %v2220
  %v2222 = vadd.f32 %v2219, %v2220
  %s2223 = scalar_lea.vmem %s7, 96
  %v2224 = vld [vmem:[%s2223] sm:$0xff]
  %v2225 = vld [vmem:[%s2223 + $0x8] sm:$0xff]
  %v2226 = vld [vmem:[%s2223 + $0x10] sm:$0xff]
  %v2227 = vld [vmem:[%s2223 + $0x18] sm:$0xff]
  %s2228 = scalar_lea.vmem %s7, 128
  %v2229 = vld [vmem:[%s2228] sm:$0xff]
  %v2230 = vld [vmem:[%s2228 + $0x8] sm:$0xff]
  %v2231 = vld [vmem:[%s2228 + $0x10] sm:$0xff]
  %v2232 = vld [vmem:[%s2228 + $0x18] sm:$0xff]
  %s2233 = scalar_lea.vmem %s7, 160
  %v2234 = vld [vmem:[%s2233] sm:$0xff]
  %v2235 = vld [vmem:[%s2233 + $0x8] sm:$0xff]
  %v2236 = vld [vmem:[%s2233 + $0x10] sm:$0xff]
  %v2237 = vld [vmem:[%s2233 + $0x18] sm:$0xff]
  %s2238 = scalar_lea.vmem %s10, 8
  %v2239 = vld [vmem:[%s2238] sm:$0xff]
  %v2240 = vld [vmem:[%s8 + $0x20] sm:$0xff]
  %v2241 = vld [vmem:[%s8 + $0x28] sm:$0xff]
  %v2242 = vld [vmem:[%s8 + $0x30] sm:$0xff]
  %v2243 = vld [vmem:[%s8 + $0x38] sm:$0xff]
  %v2244 = vld [vmem:[%s9 + $0x40] sm:$0xff]
  %v2245 = vld [vmem:[%s9 + $0x48] sm:$0xff]
  %v2246 = vld [vmem:[%s9 + $0x50] sm:$0xff]
  %v2247 = vld [vmem:[%s9 + $0x58] sm:$0xff]
  %v2248 = vld [vmem:[%s9 + $0x60] sm:$0xff]
  %v2249 = vld [vmem:[%s9 + $0x68] sm:$0xff]
  %v2250 = vld [vmem:[%s9 + $0x70] sm:$0xff]
  %v2251 = vld [vmem:[%s9 + $0x78] sm:$0xff]
  %v2252 = vld [vmem:[%s11 + $0x1] sm:$0x1]
  %v2253 = vperm.slane %v2239, 0
  %v2255 = vsel %vm1174, %v2221, 0
  %v2258 = vsel %vm1174, %v2222, 0
  %2260 = vmatpush.msra.mxu0 0.0
  %2261 = vmatpush.msra.mxu0 0.0
  %2262 = vmatpush.msra.mxu0 0.0
  %2263 = vmatpush.msra.mxu0 0.0
  %2264 = vmatpush.msra.mxu0 0.0
  %2265 = vmatpush.msra.mxu0 0.0
  %2266 = vmatpush.msra.mxu0 0.0
  %2267 = vmatpush.msra.mxu0 0.0
  %2268 = vmatpush.msra.mxu0 0.0
  %2269 = vmatpush.msra.mxu0 0.0
  %2270 = vmatpush.msra.mxu0 0.0
  %2271 = vmatpush.msra.mxu0 0.0
  %2272 = vmatpush.msra.mxu0 %v2227
  %2273 = vmatpush.msra.mxu0 %v2226
  %2274 = vmatpush.msra.mxu0 %v2225
  %2275 = vmatpush.msra.mxu0 %v2224
  %2276 = vmatmul.f32.gmra.mxu0 %v2255
  %v2277 = vpop.f32.mrf.mxu0
  %v2278 = vadd.f32 %v2253, %v2277
  %2279 = vmatmul.f32.gmra.mxu0 %v2258
  %v2280 = vpop.f32.mrf.mxu0
  %v2281 = vadd.f32 %v2253, %v2280
  %2282 = vdwg.mxu0
  %v2283 = vperm.slane %v2239, 1
  %2284 = vmatpush.msra.mxu0 0.0
  %2285 = vmatpush.msra.mxu0 0.0
  %2286 = vmatpush.msra.mxu0 0.0
  %2287 = vmatpush.msra.mxu0 0.0
  %2288 = vmatpush.msra.mxu0 0.0
  %2289 = vmatpush.msra.mxu0 0.0
  %2290 = vmatpush.msra.mxu0 0.0
  %2291 = vmatpush.msra.mxu0 0.0
  %2292 = vmatpush.msra.mxu0 0.0
  %2293 = vmatpush.msra.mxu0 0.0
  %2294 = vmatpush.msra.mxu0 0.0
  %2295 = vmatpush.msra.mxu0 0.0
  %2296 = vmatpush.msra.mxu0 %v2232
  %2297 = vmatpush.msra.mxu0 %v2231
  %2298 = vmatpush.msra.mxu0 %v2230
  %2299 = vmatpush.msra.mxu0 %v2229
  %2300 = vmatmul.f32.gmra.mxu0 %v1206
  %v2301 = vpop.f32.mrf.mxu0
  %v2302 = vadd.f32 %v2283, %v2301
  %2303 = vmatmul.f32.gmra.mxu0 %v1209
  %v2304 = vpop.f32.mrf.mxu0
  %v2305 = vadd.f32 %v2283, %v2304
  %2306 = vdwg.mxu0
  %2307 = vmatpush.msra.mxu0 0.0
  %2308 = vmatpush.msra.mxu0 0.0
  %2309 = vmatpush.msra.mxu0 0.0
  %2310 = vmatpush.msra.mxu0 0.0
  %2311 = vmatpush.msra.mxu0 0.0
  %2312 = vmatpush.msra.mxu0 0.0
  %2313 = vmatpush.msra.mxu0 0.0
  %2314 = vmatpush.msra.mxu0 0.0
  %2315 = vmatpush.msra.mxu0 0.0
  %2316 = vmatpush.msra.mxu0 0.0
  %2317 = vmatpush.msra.mxu0 0.0
  %2318 = vmatpush.msra.mxu0 0.0
  %2319 = vmatpush.msra.mxu0 0.0
  %2320 = vmatpush.msra.mxu0 0.0
  %2321 = vmatpush.msra.mxu0 %v2281
  %2322 = vmatpush.msra.mxu0 %v2278
  %2323 = vmatmul.f32.gmra.mxu0 %v1236
  %v2324 = vpop.f32.mrf.mxu0
  %v2325 = vadd.f32 0.0, %v2324
  %2326 = vmatmul.f32.gmra.mxu0 %v1239
  %v2327 = vpop.f32.mrf.mxu0
  %v2328 = vadd.f32 0.0, %v2327
  %2329 = vmatmul.f32.gmra.mxu0 %v1242
  %v2330 = vpop.f32.mrf.mxu0
  %v2331 = vadd.f32 0.0, %v2330
  %2332 = vmatmul.f32.gmra.mxu0 %v1245
  %v2333 = vpop.f32.mrf.mxu0
  %v2334 = vadd.f32 0.0, %v2333
  %2335 = vmatmul.f32.gmra.mxu0 %v1248
  %v2336 = vpop.f32.mrf.mxu0
  %v2337 = vadd.f32 0.0, %v2336
  %2338 = vmatmul.f32.gmra.mxu0 %v1251
  %v2339 = vpop.f32.mrf.mxu0
  %v2340 = vadd.f32 0.0, %v2339
  %2341 = vmatmul.f32.gmra.mxu0 %v1254
  %v2342 = vpop.f32.mrf.mxu0
  %v2343 = vadd.f32 0.0, %v2342
  %2344 = vmatmul.f32.gmra.mxu0 %v1257
  %v2345 = vpop.f32.mrf.mxu0
  %v2346 = vadd.f32 0.0, %v2345
  %2347 = vmatmul.f32.gmra.mxu0 %v1260
  %v2348 = vpop.f32.mrf.mxu0
  %v2349 = vadd.f32 0.0, %v2348
  %2350 = vmatmul.f32.gmra.mxu0 %v1263
  %v2351 = vpop.f32.mrf.mxu0
  %v2352 = vadd.f32 0.0, %v2351
  %2353 = vmatmul.f32.gmra.mxu0 %v1266
  %v2354 = vpop.f32.mrf.mxu0
  %v2355 = vadd.f32 0.0, %v2354
  %2356 = vmatmul.f32.gmra.mxu0 %v1269
  %v2357 = vpop.f32.mrf.mxu0
  %v2358 = vadd.f32 0.0, %v2357
  %2359 = vmatmul.f32.gmra.mxu0 %v1272
  %v2360 = vpop.f32.mrf.mxu0
  %v2361 = vadd.f32 0.0, %v2360
  %2362 = vmatmul.f32.gmra.mxu0 %v1275
  %v2363 = vpop.f32.mrf.mxu0
  %v2364 = vadd.f32 0.0, %v2363
  %2365 = vmatmul.f32.gmra.mxu0 %v1278
  %v2366 = vpop.f32.mrf.mxu0
  %v2367 = vadd.f32 0.0, %v2366
  %2368 = vmatmul.f32.gmra.mxu0 %v1281
  %v2369 = vpop.f32.mrf.mxu0
  %v2370 = vadd.f32 0.0, %v2369
  %2371 = vdwg.mxu0
  %v2372 = vmul.f32 %v2325, %v1129
  %v2373 = vmul.f32 %v2328, %v1130
  %v2374 = vmul.f32 %v2331, %v1131
  %v2375 = vmul.f32 %v2334, %v1132
  %v2376 = vmul.f32 %v2337, %v1133
  %v2377 = vmul.f32 %v2340, %v1134
  %v2378 = vmul.f32 %v2343, %v1135
  %v2379 = vmul.f32 %v2346, %v1136
  %v2380 = vmul.f32 %v2349, %v1137
  %v2381 = vmul.f32 %v2352, %v1138
  %v2382 = vmul.f32 %v2355, %v1139
  %v2383 = vmul.f32 %v2358, %v1140
  %v2384 = vmul.f32 %v2361, %v1141
  %v2385 = vmul.f32 %v2364, %v1142
  %v2386 = vmul.f32 %v2367, %v1143
  %v2387 = vmul.f32 %v2370, %v1144
  %v2389 = vsel %vm1174, %v2372, 0
  %v2392 = vsel %vm1174, %v2373, 0
  %v2395 = vsel %vm1174, %v2374, 0
  %v2398 = vsel %vm1174, %v2375, 0
  %v2401 = vsel %vm1174, %v2376, 0
  %v2404 = vsel %vm1174, %v2377, 0
  %v2407 = vsel %vm1174, %v2378, 0
  %v2410 = vsel %vm1174, %v2379, 0
  %v2413 = vsel %vm1174, %v2380, 0
  %v2416 = vsel %vm1174, %v2381, 0
  %v2419 = vsel %vm1174, %v2382, 0
  %v2422 = vsel %vm1174, %v2383, 0
  %v2425 = vsel %vm1174, %v2384, 0
  %v2428 = vsel %vm1174, %v2385, 0
  %v2431 = vsel %vm1174, %v2386, 0
  %v2434 = vsel %vm1174, %v2387, 0
  %v2437 = vsel %vm1174, %v2278, 0
  %v2440 = vsel %vm1174, %v2281, 0
  %2442 = vmatpush.xpose.msra.mxu0 0.0
  %2443 = vmatpush.xpose.msra.mxu0 0.0
  %2444 = vmatpush.xpose.msra.mxu0 0.0
  %2445 = vmatpush.xpose.msra.mxu0 0.0
  %2446 = vmatpush.xpose.msra.mxu0 0.0
  %2447 = vmatpush.xpose.msra.mxu0 0.0
  %2448 = vmatpush.xpose.msra.mxu0 0.0
  %2449 = vmatpush.xpose.msra.mxu0 0.0
  %2450 = vmatpush.xpose.msra.mxu0 0.0
  %2451 = vmatpush.xpose.msra.mxu0 0.0
  %2452 = vmatpush.xpose.msra.mxu0 0.0
  %2453 = vmatpush.xpose.msra.mxu0 0.0
  %2454 = vmatpush.xpose.msra.mxu0 0.0
  %2455 = vmatpush.xpose.msra.mxu0 0.0
  %2456 = vmatpush.xpose.msra.mxu0 %v2440
  %2457 = vmatpush.xpose.msra.mxu0 %v2437
  %2458 = vmatmul.f32.gmra.mxu0 %v2389
  %v2459 = vpop.f32.mrf.mxu0
  %v2460 = vadd.f32 %v1111, %v2459
  %2461 = vmatmul.f32.gmra.mxu0 %v2392
  %v2462 = vpop.f32.mrf.mxu0
  %v2463 = vadd.f32 %v1112, %v2462
  %2464 = vmatmul.f32.gmra.mxu0 %v2395
  %v2465 = vpop.f32.mrf.mxu0
  %v2466 = vadd.f32 %v1113, %v2465
  %2467 = vmatmul.f32.gmra.mxu0 %v2398
  %v2468 = vpop.f32.mrf.mxu0
  %v2469 = vadd.f32 %v1114, %v2468
  %2470 = vmatmul.f32.gmra.mxu0 %v2401
  %v2471 = vpop.f32.mrf.mxu0
  %v2472 = vadd.f32 %v1115, %v2471
  %2473 = vmatmul.f32.gmra.mxu0 %v2404
  %v2474 = vpop.f32.mrf.mxu0
  %v2475 = vadd.f32 %v1116, %v2474
  %2476 = vmatmul.f32.gmra.mxu0 %v2407
  %v2477 = vpop.f32.mrf.mxu0
  %v2478 = vadd.f32 %v1117, %v2477
  %2479 = vmatmul.f32.gmra.mxu0 %v2410
  %v2480 = vpop.f32.mrf.mxu0
  %v2481 = vadd.f32 %v1118, %v2480
  %2482 = vmatmul.f32.gmra.mxu0 %v2413
  %v2483 = vpop.f32.mrf.mxu0
  %v2484 = vadd.f32 %v1119, %v2483
  %2485 = vmatmul.f32.gmra.mxu0 %v2416
  %v2486 = vpop.f32.mrf.mxu0
  %v2487 = vadd.f32 %v1120, %v2486
  %2488 = vmatmul.f32.gmra.mxu0 %v2419
  %v2489 = vpop.f32.mrf.mxu0
  %v2490 = vadd.f32 %v1121, %v2489
  %2491 = vmatmul.f32.gmra.mxu0 %v2422
  %v2492 = vpop.f32.mrf.mxu0
  %v2493 = vadd.f32 %v1122, %v2492
  %2494 = vmatmul.f32.gmra.mxu0 %v2425
  %v2495 = vpop.f32.mrf.mxu0
  %v2496 = vadd.f32 %v1123, %v2495
  %2497 = vmatmul.f32.gmra.mxu0 %v2428
  %v2498 = vpop.f32.mrf.mxu0
  %v2499 = vadd.f32 %v1124, %v2498
  %2500 = vmatmul.f32.gmra.mxu0 %v2431
  %v2501 = vpop.f32.mrf.mxu0
  %v2502 = vadd.f32 %v1125, %v2501
  %2503 = vmatmul.f32.gmra.mxu0 %v2434
  %v2504 = vpop.f32.mrf.mxu0
  %v2505 = vadd.f32 %v1126, %v2504
  %2506 = vdwg.mxu0
  %v2507 = vsel %vm1234, %v2460, -inf
  %2508 = vmax.xlane.f32.xlu0 %v2507
  %v2509 = vpop.xlane.xlu0 %2508
  %v2510 = vsel %vm1234, %v2463, -inf
  %2511 = vmax.xlane.f32.xlu0 %v2510
  %v2512 = vpop.xlane.xlu0 %2511
  %v2513 = vsel %vm1234, %v2466, -inf
  %2514 = vmax.xlane.f32.xlu0 %v2513
  %v2515 = vpop.xlane.xlu0 %2514
  %v2516 = vsel %vm1234, %v2469, -inf
  %2517 = vmax.xlane.f32.xlu0 %v2516
  %v2518 = vpop.xlane.xlu0 %2517
  %v2519 = vsel %vm1234, %v2472, -inf
  %2520 = vmax.xlane.f32.xlu0 %v2519
  %v2521 = vpop.xlane.xlu0 %2520
  %v2522 = vsel %vm1234, %v2475, -inf
  %2523 = vmax.xlane.f32.xlu0 %v2522
  %v2524 = vpop.xlane.xlu0 %2523
  %v2525 = vsel %vm1234, %v2478, -inf
  %2526 = vmax.xlane.f32.xlu0 %v2525
  %v2527 = vpop.xlane.xlu0 %2526
  %v2528 = vsel %vm1234, %v2481, -inf
  %2529 = vmax.xlane.f32.xlu0 %v2528
  %v2530 = vpop.xlane.xlu0 %2529
  %v2531 = vsel %vm1234, %v2484, -inf
  %2532 = vmax.xlane.f32.xlu0 %v2531
  %v2533 = vpop.xlane.xlu0 %2532
  %v2534 = vsel %vm1234, %v2487, -inf
  %2535 = vmax.xlane.f32.xlu0 %v2534
  %v2536 = vpop.xlane.xlu0 %2535
  %v2537 = vsel %vm1234, %v2490, -inf
  %2538 = vmax.xlane.f32.xlu0 %v2537
  %v2539 = vpop.xlane.xlu0 %2538
  %v2540 = vsel %vm1234, %v2493, -inf
  %2541 = vmax.xlane.f32.xlu0 %v2540
  %v2542 = vpop.xlane.xlu0 %2541
  %v2543 = vsel %vm1234, %v2496, -inf
  %2544 = vmax.xlane.f32.xlu0 %v2543
  %v2545 = vpop.xlane.xlu0 %2544
  %v2546 = vsel %vm1234, %v2499, -inf
  %2547 = vmax.xlane.f32.xlu0 %v2546
  %v2548 = vpop.xlane.xlu0 %2547
  %v2549 = vsel %vm1234, %v2502, -inf
  %2550 = vmax.xlane.f32.xlu0 %v2549
  %v2551 = vpop.xlane.xlu0 %2550
  %v2552 = vsel %vm1234, %v2505, -inf
  %2553 = vmax.xlane.f32.xlu0 %v2552
  %v2554 = vpop.xlane.xlu0 %2553
  %v2555 = vsub.f32 %v2460, %v2509
  %v2556 = vsub.f32 %v2463, %v2512
  %v2557 = vsub.f32 %v2466, %v2515
  %v2558 = vsub.f32 %v2469, %v2518
  %v2559 = vsub.f32 %v2472, %v2521
  %v2560 = vsub.f32 %v2475, %v2524
  %v2561 = vsub.f32 %v2478, %v2527
  %v2562 = vsub.f32 %v2481, %v2530
  %v2563 = vsub.f32 %v2484, %v2533
  %v2564 = vsub.f32 %v2487, %v2536
  %v2565 = vsub.f32 %v2490, %v2539
  %v2566 = vsub.f32 %v2493, %v2542
  %v2567 = vsub.f32 %v2496, %v2545
  %v2568 = vsub.f32 %v2499, %v2548
  %v2569 = vsub.f32 %v2502, %v2551
  %v2570 = vsub.f32 %v2505, %v2554
  %v2571 = vmul.f32 %v2555, 1.442695
  %v2572 = vpow.pop %v2571
  %v2573 = vmul.f32 %v2556, 1.442695
  %v2574 = vpow.pop %v2573
  %v2575 = vmul.f32 %v2557, 1.442695
  %v2576 = vpow.pop %v2575
  %v2577 = vmul.f32 %v2558, 1.442695
  %v2578 = vpow.pop %v2577
  %v2579 = vmul.f32 %v2559, 1.442695
  %v2580 = vpow.pop %v2579
  %v2581 = vmul.f32 %v2560, 1.442695
  %v2582 = vpow.pop %v2581
  %v2583 = vmul.f32 %v2561, 1.442695
  %v2584 = vpow.pop %v2583
  %v2585 = vmul.f32 %v2562, 1.442695
  %v2586 = vpow.pop %v2585
  %v2587 = vmul.f32 %v2563, 1.442695
  %v2588 = vpow.pop %v2587
  %v2589 = vmul.f32 %v2564, 1.442695
  %v2590 = vpow.pop %v2589
  %v2591 = vmul.f32 %v2565, 1.442695
  %v2592 = vpow.pop %v2591
  %v2593 = vmul.f32 %v2566, 1.442695
  %v2594 = vpow.pop %v2593
  %v2595 = vmul.f32 %v2567, 1.442695
  %v2596 = vpow.pop %v2595
  %v2597 = vmul.f32 %v2568, 1.442695
  %v2598 = vpow.pop %v2597
  %v2599 = vmul.f32 %v2569, 1.442695
  %v2600 = vpow.pop %v2599
  %v2601 = vmul.f32 %v2570, 1.442695
  %v2602 = vpow.pop %v2601
  %v2603 = vsel %vm1234, %v2572, 0.0
  %2604 = vadd.xlane.f32.xlu0 %v2603
  %v2605 = vpop.xlane.xlu0 %2604
  %v2606 = vsel %vm1234, %v2574, 0.0
  %2607 = vadd.xlane.f32.xlu0 %v2606
  %v2608 = vpop.xlane.xlu0 %2607
  %v2609 = vsel %vm1234, %v2576, 0.0
  %2610 = vadd.xlane.f32.xlu0 %v2609
  %v2611 = vpop.xlane.xlu0 %2610
  %v2612 = vsel %vm1234, %v2578, 0.0
  %2613 = vadd.xlane.f32.xlu0 %v2612
  %v2614 = vpop.xlane.xlu0 %2613
  %v2615 = vsel %vm1234, %v2580, 0.0
  %2616 = vadd.xlane.f32.xlu0 %v2615
  %v2617 = vpop.xlane.xlu0 %2616
  %v2618 = vsel %vm1234, %v2582, 0.0
  %2619 = vadd.xlane.f32.xlu0 %v2618
  %v2620 = vpop.xlane.xlu0 %2619
  %v2621 = vsel %vm1234, %v2584, 0.0
  %2622 = vadd.xlane.f32.xlu0 %v2621
  %v2623 = vpop.xlane.xlu0 %2622
  %v2624 = vsel %vm1234, %v2586, 0.0
  %2625 = vadd.xlane.f32.xlu0 %v2624
  %v2626 = vpop.xlane.xlu0 %2625
  %v2627 = vsel %vm1234, %v2588, 0.0
  %2628 = vadd.xlane.f32.xlu0 %v2627
  %v2629 = vpop.xlane.xlu0 %2628
  %v2630 = vsel %vm1234, %v2590, 0.0
  %2631 = vadd.xlane.f32.xlu0 %v2630
  %v2632 = vpop.xlane.xlu0 %2631
  %v2633 = vsel %vm1234, %v2592, 0.0
  %2634 = vadd.xlane.f32.xlu0 %v2633
  %v2635 = vpop.xlane.xlu0 %2634
  %v2636 = vsel %vm1234, %v2594, 0.0
  %2637 = vadd.xlane.f32.xlu0 %v2636
  %v2638 = vpop.xlane.xlu0 %2637
  %v2639 = vsel %vm1234, %v2596, 0.0
  %2640 = vadd.xlane.f32.xlu0 %v2639
  %v2641 = vpop.xlane.xlu0 %2640
  %v2642 = vsel %vm1234, %v2598, 0.0
  %2643 = vadd.xlane.f32.xlu0 %v2642
  %v2644 = vpop.xlane.xlu0 %2643
  %v2645 = vsel %vm1234, %v2600, 0.0
  %2646 = vadd.xlane.f32.xlu0 %v2645
  %v2647 = vpop.xlane.xlu0 %2646
  %v2648 = vsel %vm1234, %v2602, 0.0
  %2649 = vadd.xlane.f32.xlu0 %v2648
  %v2650 = vpop.xlane.xlu0 %2649
  %v2651 = vrcp.pop %v2605
  %v2652 = vmul.f32 %v2605, %v2651
  %v2653 = vsub.f32 1.0, %v2652
  %v2654 = vmul.f32 %v2651, %v2653
  %v2655 = vadd.f32 %v2651, %v2654
  %vm2656 = vweird.f32 %v2605
  %vm2657 = vweird.f32 %v2651
  %vm2658 = vmor %vm2656, %vm2657
  %v2659 = vsel %vm2658, %v2651, %v2655
  %v2660 = vand.u32 2147483647, %v2605
  %vm2661 = vcmp.eq.f32.partialorder %v2660, 8.507059e+37
  %v2662 = vand.u32 %v2605, 2147483648
  %v2663 = vor.u32 1.1754944e-38, %v2662
  %v2664 = vsel %vm2661, %v2663, %v2659
  %v2665 = vmul.f32 %v2572, %v2664
  %v2666 = vrcp.pop %v2608
  %v2667 = vmul.f32 %v2608, %v2666
  %v2668 = vsub.f32 1.0, %v2667
  %v2669 = vmul.f32 %v2666, %v2668
  %v2670 = vadd.f32 %v2666, %v2669
  %vm2671 = vweird.f32 %v2608
  %vm2672 = vweird.f32 %v2666
  %vm2673 = vmor %vm2671, %vm2672
  %v2674 = vsel %vm2673, %v2666, %v2670
  %v2675 = vand.u32 2147483647, %v2608
  %vm2676 = vcmp.eq.f32.partialorder %v2675, 8.507059e+37
  %v2677 = vand.u32 %v2608, 2147483648
  %v2678 = vor.u32 1.1754944e-38, %v2677
  %v2679 = vsel %vm2676, %v2678, %v2674
  %v2680 = vmul.f32 %v2574, %v2679
  %v2681 = vrcp.pop %v2611
  %v2682 = vmul.f32 %v2611, %v2681
  %v2683 = vsub.f32 1.0, %v2682
  %v2684 = vmul.f32 %v2681, %v2683
  %v2685 = vadd.f32 %v2681, %v2684
  %vm2686 = vweird.f32 %v2611
  %vm2687 = vweird.f32 %v2681
  %vm2688 = vmor %vm2686, %vm2687
  %v2689 = vsel %vm2688, %v2681, %v2685
  %v2690 = vand.u32 2147483647, %v2611
  %vm2691 = vcmp.eq.f32.partialorder %v2690, 8.507059e+37
  %v2692 = vand.u32 %v2611, 2147483648
  %v2693 = vor.u32 1.1754944e-38, %v2692
  %v2694 = vsel %vm2691, %v2693, %v2689
  %v2695 = vmul.f32 %v2576, %v2694
  %v2696 = vrcp.pop %v2614
  %v2697 = vmul.f32 %v2614, %v2696
  %v2698 = vsub.f32 1.0, %v2697
  %v2699 = vmul.f32 %v2696, %v2698
  %v2700 = vadd.f32 %v2696, %v2699
  %vm2701 = vweird.f32 %v2614
  %vm2702 = vweird.f32 %v2696
  %vm2703 = vmor %vm2701, %vm2702
  %v2704 = vsel %vm2703, %v2696, %v2700
  %v2705 = vand.u32 2147483647, %v2614
  %vm2706 = vcmp.eq.f32.partialorder %v2705, 8.507059e+37
  %v2707 = vand.u32 %v2614, 2147483648
  %v2708 = vor.u32 1.1754944e-38, %v2707
  %v2709 = vsel %vm2706, %v2708, %v2704
  %v2710 = vmul.f32 %v2578, %v2709
  %v2711 = vrcp.pop %v2617
  %v2712 = vmul.f32 %v2617, %v2711
  %v2713 = vsub.f32 1.0, %v2712
  %v2714 = vmul.f32 %v2711, %v2713
  %v2715 = vadd.f32 %v2711, %v2714
  %vm2716 = vweird.f32 %v2617
  %vm2717 = vweird.f32 %v2711
  %vm2718 = vmor %vm2716, %vm2717
  %v2719 = vsel %vm2718, %v2711, %v2715
  %v2720 = vand.u32 2147483647, %v2617
  %vm2721 = vcmp.eq.f32.partialorder %v2720, 8.507059e+37
  %v2722 = vand.u32 %v2617, 2147483648
  %v2723 = vor.u32 1.1754944e-38, %v2722
  %v2724 = vsel %vm2721, %v2723, %v2719
  %v2725 = vmul.f32 %v2580, %v2724
  %v2726 = vrcp.pop %v2620
  %v2727 = vmul.f32 %v2620, %v2726
  %v2728 = vsub.f32 1.0, %v2727
  %v2729 = vmul.f32 %v2726, %v2728
  %v2730 = vadd.f32 %v2726, %v2729
  %vm2731 = vweird.f32 %v2620
  %vm2732 = vweird.f32 %v2726
  %vm2733 = vmor %vm2731, %vm2732
  %v2734 = vsel %vm2733, %v2726, %v2730
  %v2735 = vand.u32 2147483647, %v2620
  %vm2736 = vcmp.eq.f32.partialorder %v2735, 8.507059e+37
  %v2737 = vand.u32 %v2620, 2147483648
  %v2738 = vor.u32 1.1754944e-38, %v2737
  %v2739 = vsel %vm2736, %v2738, %v2734
  %v2740 = vmul.f32 %v2582, %v2739
  %v2741 = vrcp.pop %v2623
  %v2742 = vmul.f32 %v2623, %v2741
  %v2743 = vsub.f32 1.0, %v2742
  %v2744 = vmul.f32 %v2741, %v2743
  %v2745 = vadd.f32 %v2741, %v2744
  %vm2746 = vweird.f32 %v2623
  %vm2747 = vweird.f32 %v2741
  %vm2748 = vmor %vm2746, %vm2747
  %v2749 = vsel %vm2748, %v2741, %v2745
  %v2750 = vand.u32 2147483647, %v2623
  %vm2751 = vcmp.eq.f32.partialorder %v2750, 8.507059e+37
  %v2752 = vand.u32 %v2623, 2147483648
  %v2753 = vor.u32 1.1754944e-38, %v2752
  %v2754 = vsel %vm2751, %v2753, %v2749
  %v2755 = vmul.f32 %v2584, %v2754
  %v2756 = vrcp.pop %v2626
  %v2757 = vmul.f32 %v2626, %v2756
  %v2758 = vsub.f32 1.0, %v2757
  %v2759 = vmul.f32 %v2756, %v2758
  %v2760 = vadd.f32 %v2756, %v2759
  %vm2761 = vweird.f32 %v2626
  %vm2762 = vweird.f32 %v2756
  %vm2763 = vmor %vm2761, %vm2762
  %v2764 = vsel %vm2763, %v2756, %v2760
  %v2765 = vand.u32 2147483647, %v2626
  %vm2766 = vcmp.eq.f32.partialorder %v2765, 8.507059e+37
  %v2767 = vand.u32 %v2626, 2147483648
  %v2768 = vor.u32 1.1754944e-38, %v2767
  %v2769 = vsel %vm2766, %v2768, %v2764
  %v2770 = vmul.f32 %v2586, %v2769
  %v2771 = vrcp.pop %v2629
  %v2772 = vmul.f32 %v2629, %v2771
  %v2773 = vsub.f32 1.0, %v2772
  %v2774 = vmul.f32 %v2771, %v2773
  %v2775 = vadd.f32 %v2771, %v2774
  %vm2776 = vweird.f32 %v2629
  %vm2777 = vweird.f32 %v2771
  %vm2778 = vmor %vm2776, %vm2777
  %v2779 = vsel %vm2778, %v2771, %v2775
  %v2780 = vand.u32 2147483647, %v2629
  %vm2781 = vcmp.eq.f32.partialorder %v2780, 8.507059e+37
  %v2782 = vand.u32 %v2629, 2147483648
  %v2783 = vor.u32 1.1754944e-38, %v2782
  %v2784 = vsel %vm2781, %v2783, %v2779
  %v2785 = vmul.f32 %v2588, %v2784
  %v2786 = vrcp.pop %v2632
  %v2787 = vmul.f32 %v2632, %v2786
  %v2788 = vsub.f32 1.0, %v2787
  %v2789 = vmul.f32 %v2786, %v2788
  %v2790 = vadd.f32 %v2786, %v2789
  %vm2791 = vweird.f32 %v2632
  %vm2792 = vweird.f32 %v2786
  %vm2793 = vmor %vm2791, %vm2792
  %v2794 = vsel %vm2793, %v2786, %v2790
  %v2795 = vand.u32 2147483647, %v2632
  %vm2796 = vcmp.eq.f32.partialorder %v2795, 8.507059e+37
  %v2797 = vand.u32 %v2632, 2147483648
  %v2798 = vor.u32 1.1754944e-38, %v2797
  %v2799 = vsel %vm2796, %v2798, %v2794
  %v2800 = vmul.f32 %v2590, %v2799
  %v2801 = vrcp.pop %v2635
  %v2802 = vmul.f32 %v2635, %v2801
  %v2803 = vsub.f32 1.0, %v2802
  %v2804 = vmul.f32 %v2801, %v2803
  %v2805 = vadd.f32 %v2801, %v2804
  %vm2806 = vweird.f32 %v2635
  %vm2807 = vweird.f32 %v2801
  %vm2808 = vmor %vm2806, %vm2807
  %v2809 = vsel %vm2808, %v2801, %v2805
  %v2810 = vand.u32 2147483647, %v2635
  %vm2811 = vcmp.eq.f32.partialorder %v2810, 8.507059e+37
  %v2812 = vand.u32 %v2635, 2147483648
  %v2813 = vor.u32 1.1754944e-38, %v2812
  %v2814 = vsel %vm2811, %v2813, %v2809
  %v2815 = vmul.f32 %v2592, %v2814
  %v2816 = vrcp.pop %v2638
  %v2817 = vmul.f32 %v2638, %v2816
  %v2818 = vsub.f32 1.0, %v2817
  %v2819 = vmul.f32 %v2816, %v2818
  %v2820 = vadd.f32 %v2816, %v2819
  %vm2821 = vweird.f32 %v2638
  %vm2822 = vweird.f32 %v2816
  %vm2823 = vmor %vm2821, %vm2822
  %v2824 = vsel %vm2823, %v2816, %v2820
  %v2825 = vand.u32 2147483647, %v2638
  %vm2826 = vcmp.eq.f32.partialorder %v2825, 8.507059e+37
  %v2827 = vand.u32 %v2638, 2147483648
  %v2828 = vor.u32 1.1754944e-38, %v2827
  %v2829 = vsel %vm2826, %v2828, %v2824
  %v2830 = vmul.f32 %v2594, %v2829
  %v2831 = vrcp.pop %v2641
  %v2832 = vmul.f32 %v2641, %v2831
  %v2833 = vsub.f32 1.0, %v2832
  %v2834 = vmul.f32 %v2831, %v2833
  %v2835 = vadd.f32 %v2831, %v2834
  %vm2836 = vweird.f32 %v2641
  %vm2837 = vweird.f32 %v2831
  %vm2838 = vmor %vm2836, %vm2837
  %v2839 = vsel %vm2838, %v2831, %v2835
  %v2840 = vand.u32 2147483647, %v2641
  %vm2841 = vcmp.eq.f32.partialorder %v2840, 8.507059e+37
  %v2842 = vand.u32 %v2641, 2147483648
  %v2843 = vor.u32 1.1754944e-38, %v2842
  %v2844 = vsel %vm2841, %v2843, %v2839
  %v2845 = vmul.f32 %v2596, %v2844
  %v2846 = vrcp.pop %v2644
  %v2847 = vmul.f32 %v2644, %v2846
  %v2848 = vsub.f32 1.0, %v2847
  %v2849 = vmul.f32 %v2846, %v2848
  %v2850 = vadd.f32 %v2846, %v2849
  %vm2851 = vweird.f32 %v2644
  %vm2852 = vweird.f32 %v2846
  %vm2853 = vmor %vm2851, %vm2852
  %v2854 = vsel %vm2853, %v2846, %v2850
  %v2855 = vand.u32 2147483647, %v2644
  %vm2856 = vcmp.eq.f32.partialorder %v2855, 8.507059e+37
  %v2857 = vand.u32 %v2644, 2147483648
  %v2858 = vor.u32 1.1754944e-38, %v2857
  %v2859 = vsel %vm2856, %v2858, %v2854
  %v2860 = vmul.f32 %v2598, %v2859
  %v2861 = vrcp.pop %v2647
  %v2862 = vmul.f32 %v2647, %v2861
  %v2863 = vsub.f32 1.0, %v2862
  %v2864 = vmul.f32 %v2861, %v2863
  %v2865 = vadd.f32 %v2861, %v2864
  %vm2866 = vweird.f32 %v2647
  %vm2867 = vweird.f32 %v2861
  %vm2868 = vmor %vm2866, %vm2867
  %v2869 = vsel %vm2868, %v2861, %v2865
  %v2870 = vand.u32 2147483647, %v2647
  %vm2871 = vcmp.eq.f32.partialorder %v2870, 8.507059e+37
  %v2872 = vand.u32 %v2647, 2147483648
  %v2873 = vor.u32 1.1754944e-38, %v2872
  %v2874 = vsel %vm2871, %v2873, %v2869
  %v2875 = vmul.f32 %v2600, %v2874
  %v2876 = vrcp.pop %v2650
  %v2877 = vmul.f32 %v2650, %v2876
  %v2878 = vsub.f32 1.0, %v2877
  %v2879 = vmul.f32 %v2876, %v2878
  %v2880 = vadd.f32 %v2876, %v2879
  %vm2881 = vweird.f32 %v2650
  %vm2882 = vweird.f32 %v2876
  %vm2883 = vmor %vm2881, %vm2882
  %v2884 = vsel %vm2883, %v2876, %v2880
  %v2885 = vand.u32 2147483647, %v2650
  %vm2886 = vcmp.eq.f32.partialorder %v2885, 8.507059e+37
  %v2887 = vand.u32 %v2650, 2147483648
  %v2888 = vor.u32 1.1754944e-38, %v2887
  %v2889 = vsel %vm2886, %v2888, %v2884
  %v2890 = vmul.f32 %v2602, %v2889
  %v2892 = vsel %vm1234, %v2665, 0
  %v2895 = vsel %vm1234, %v2680, 0
  %v2898 = vsel %vm1234, %v2695, 0
  %v2901 = vsel %vm1234, %v2710, 0
  %v2904 = vsel %vm1234, %v2725, 0
  %v2907 = vsel %vm1234, %v2740, 0
  %v2910 = vsel %vm1234, %v2755, 0
  %v2913 = vsel %vm1234, %v2770, 0
  %v2916 = vsel %vm1234, %v2785, 0
  %v2919 = vsel %vm1234, %v2800, 0
  %v2922 = vsel %vm1234, %v2815, 0
  %v2925 = vsel %vm1234, %v2830, 0
  %v2928 = vsel %vm1234, %v2845, 0
  %v2931 = vsel %vm1234, %v2860, 0
  %v2934 = vsel %vm1234, %v2875, 0
  %v2937 = vsel %vm1234, %v2890, 0
  %2939 = vmatpush.msra.mxu0 0.0
  %2940 = vmatpush.msra.mxu0 0.0
  %2941 = vmatpush.msra.mxu0 0.0
  %2942 = vmatpush.msra.mxu0 0.0
  %2943 = vmatpush.msra.mxu0 0.0
  %2944 = vmatpush.msra.mxu0 0.0
  %2945 = vmatpush.msra.mxu0 0.0
  %2946 = vmatpush.msra.mxu0 0.0
  %2947 = vmatpush.msra.mxu0 0.0
  %2948 = vmatpush.msra.mxu0 0.0
  %2949 = vmatpush.msra.mxu0 0.0
  %2950 = vmatpush.msra.mxu0 0.0
  %2951 = vmatpush.msra.mxu0 0.0
  %2952 = vmatpush.msra.mxu0 0.0
  %2953 = vmatpush.msra.mxu0 %v2305
  %2954 = vmatpush.msra.mxu0 %v2302
  %2955 = vmatmul.f32.gmra.mxu0 %v2892
  %v2956 = vpop.f32.mrf.mxu0
  %v2957 = vadd.f32 0.0, %v2956
  %2958 = vmatmul.f32.gmra.mxu0 %v2895
  %v2959 = vpop.f32.mrf.mxu0
  %v2960 = vadd.f32 0.0, %v2959
  %2961 = vmatmul.f32.gmra.mxu0 %v2898
  %v2962 = vpop.f32.mrf.mxu0
  %v2963 = vadd.f32 0.0, %v2962
  %2964 = vmatmul.f32.gmra.mxu0 %v2901
  %v2965 = vpop.f32.mrf.mxu0
  %v2966 = vadd.f32 0.0, %v2965
  %2967 = vmatmul.f32.gmra.mxu0 %v2904
  %v2968 = vpop.f32.mrf.mxu0
  %v2969 = vadd.f32 0.0, %v2968
  %2970 = vmatmul.f32.gmra.mxu0 %v2907
  %v2971 = vpop.f32.mrf.mxu0
  %v2972 = vadd.f32 0.0, %v2971
  %2973 = vmatmul.f32.gmra.mxu0 %v2910
  %v2974 = vpop.f32.mrf.mxu0
  %v2975 = vadd.f32 0.0, %v2974
  %2976 = vmatmul.f32.gmra.mxu0 %v2913
  %v2977 = vpop.f32.mrf.mxu0
  %v2978 = vadd.f32 0.0, %v2977
  %2979 = vmatmul.f32.gmra.mxu0 %v2916
  %v2980 = vpop.f32.mrf.mxu0
  %v2981 = vadd.f32 0.0, %v2980
  %2982 = vmatmul.f32.gmra.mxu0 %v2919
  %v2983 = vpop.f32.mrf.mxu0
  %v2984 = vadd.f32 0.0, %v2983
  %2985 = vmatmul.f32.gmra.mxu0 %v2922
  %v2986 = vpop.f32.mrf.mxu0
  %v2987 = vadd.f32 0.0, %v2986
  %2988 = vmatmul.f32.gmra.mxu0 %v2925
  %v2989 = vpop.f32.mrf.mxu0
  %v2990 = vadd.f32 0.0, %v2989
  %2991 = vmatmul.f32.gmra.mxu0 %v2928
  %v2992 = vpop.f32.mrf.mxu0
  %v2993 = vadd.f32 0.0, %v2992
  %2994 = vmatmul.f32.gmra.mxu0 %v2931
  %v2995 = vpop.f32.mrf.mxu0
  %v2996 = vadd.f32 0.0, %v2995
  %2997 = vmatmul.f32.gmra.mxu0 %v2934
  %v2998 = vpop.f32.mrf.mxu0
  %v2999 = vadd.f32 0.0, %v2998
  %3000 = vmatmul.f32.gmra.mxu0 %v2937
  %v3001 = vpop.f32.mrf.mxu0
  %v3002 = vadd.f32 0.0, %v3001
  %3003 = vdwg.mxu0
  %v3004 = vmul.f32 %v2957, %v1129
  %v3005 = vmul.f32 %v2960, %v1130
  %v3006 = vmul.f32 %v2963, %v1131
  %v3007 = vmul.f32 %v2966, %v1132
  %v3008 = vmul.f32 %v2969, %v1133
  %v3009 = vmul.f32 %v2972, %v1134
  %v3010 = vmul.f32 %v2975, %v1135
  %v3011 = vmul.f32 %v2978, %v1136
  %v3012 = vmul.f32 %v2981, %v1137
  %v3013 = vmul.f32 %v2984, %v1138
  %v3014 = vmul.f32 %v2987, %v1139
  %v3015 = vmul.f32 %v2990, %v1140
  %v3016 = vmul.f32 %v2993, %v1141
  %v3017 = vmul.f32 %v2996, %v1142
  %v3018 = vmul.f32 %v2999, %v1143
  %v3019 = vmul.f32 %v3002, %v1144
  %3020 = vmatpush.msra.mxu0 %v3019
  %3021 = vmatpush.msra.mxu0 %v3018
  %3022 = vmatpush.msra.mxu0 %v3017
  %3023 = vmatpush.msra.mxu0 %v3016
  %3024 = vmatpush.msra.mxu0 %v3015
  %3025 = vmatpush.msra.mxu0 %v3014
  %3026 = vmatpush.msra.mxu0 %v3013
  %3027 = vmatpush.msra.mxu0 %v3012
  %3028 = vmatpush.msra.mxu0 %v3011
  %3029 = vmatpush.msra.mxu0 %v3010
  %3030 = vmatpush.msra.mxu0 %v3009
  %3031 = vmatpush.msra.mxu0 %v3008
  %3032 = vmatpush.msra.mxu0 %v3007
  %3033 = vmatpush.msra.mxu0 %v3006
  %3034 = vmatpush.msra.mxu0 %v3005
  %3035 = vmatpush.msra.mxu0 %v3004
  %3036 = vmatmul.f32.gmra.mxu0 %v1127
  %v3037 = vpop.f32.mrf.mxu0
  %v3038 = vadd.f32 0.0, %v3037
  %3039 = vmatmul.f32.gmra.mxu0 %v1128
  %v3040 = vpop.f32.mrf.mxu0
  %v3041 = vadd.f32 0.0, %v3040
  %3042 = vdwg.mxu0
  %v3043 = vperm.slane %v2239, 2
  %v3045 = vsel %vm1174, %v3038, 0
  %v3048 = vsel %vm1174, %v3041, 0
  %3050 = vmatpush.msra.mxu0 0.0
  %3051 = vmatpush.msra.mxu0 0.0
  %3052 = vmatpush.msra.mxu0 0.0
  %3053 = vmatpush.msra.mxu0 0.0
  %3054 = vmatpush.msra.mxu0 0.0
  %3055 = vmatpush.msra.mxu0 0.0
  %3056 = vmatpush.msra.mxu0 0.0
  %3057 = vmatpush.msra.mxu0 0.0
  %3058 = vmatpush.msra.mxu0 0.0
  %3059 = vmatpush.msra.mxu0 0.0
  %3060 = vmatpush.msra.mxu0 0.0
  %3061 = vmatpush.msra.mxu0 0.0
  %3062 = vmatpush.msra.mxu0 %v2237
  %3063 = vmatpush.msra.mxu0 %v2236
  %3064 = vmatpush.msra.mxu0 %v2235
  %3065 = vmatpush.msra.mxu0 %v2234
  %3066 = vmatmul.f32.gmra.mxu0 %v3045
  %v3067 = vpop.f32.mrf.mxu0
  %v3068 = vadd.f32 %v3043, %v3067
  %3069 = vmatmul.f32.gmra.mxu0 %v3048
  %v3070 = vpop.f32.mrf.mxu0
  %v3071 = vadd.f32 %v3043, %v3070
  %3072 = vdwg.mxu0
  %v3073 = vadd.f32 %v2221, %v3068
  %v3074 = vadd.f32 %v2222, %v3071
  %v3075 = vsel %vm1174, %v3073, 0.0
  %3076 = vadd.xlane.f32.xlu0 %v3075
  %v3077 = vpop.xlane.xlu0 %3076
  %v3078 = vsel %vm1174, %v3074, 0.0
  %3079 = vadd.xlane.f32.xlu0 %v3078
  %v3080 = vpop.xlane.xlu0 %3079
  %v3081 = vmul.f32 %v3077, %v2063
  %v3082 = vmul.f32 %v3080, %v2063
  %v3083 = vsub.f32 %v3073, %v3081
  %v3084 = vsub.f32 %v3074, %v3082
  %v3085 = vmul.f32 %v3083, %v3083
  %v3086 = vmul.f32 %v3084, %v3084
  %v3087 = vsel %vm1174, %v3085, 0.0
  %3088 = vadd.xlane.f32.xlu0 %v3087
  %v3089 = vpop.xlane.xlu0 %3088
  %v3090 = vsel %vm1174, %v3086, 0.0
  %3091 = vadd.xlane.f32.xlu0 %v3090
  %v3092 = vpop.xlane.xlu0 %3091
  %v3093 = vmul.f32 %v3089, %v2063
  %v3094 = vmul.f32 %v3092, %v2063
  %v3095 = vadd.f32 %v3093, 1e-05
  %v3096 = vadd.f32 %v3094, 1e-05
  %v3097 = vrsqrt.pop %v3095
  %v3098 = vmul.f32 %v3097, %v3095
  %v3099 = vmul.f32 %v3098, %v3097
  %v3100 = vmul.f32 0.5, %v3099
  %v3101 = vsub.f32 1.5, %v3100
  %v3102 = vmul.f32 %v3097, %v3101
  %vm3103 = vweird.f32 %v3095
  %vm3104 = vweird.f32 %v3097
  %vm3105 = vmor %vm3103, %vm3104
  %v3106 = vsel %vm3105, %v3097, %v3102
  %v3107 = vrsqrt.pop %v3096
  %v3108 = vmul.f32 %v3107, %v3096
  %v3109 = vmul.f32 %v3108, %v3107
  %v3110 = vmul.f32 0.5, %v3109
  %v3111 = vsub.f32 1.5, %v3110
  %v3112 = vmul.f32 %v3107, %v3111
  %vm3113 = vweird.f32 %v3096
  %vm3114 = vweird.f32 %v3107
  %vm3115 = vmor %vm3113, %vm3114
  %v3116 = vsel %vm3115, %v3107, %v3112
  %v3117 = vmul.f32 %v3083, %v3106
  %v3118 = vmul.f32 %v3084, %v3116
  %v3119 = vperm.slane %v2239, 3
  %v3120 = vmul.f32 %v3117, %v3119
  %v3121 = vmul.f32 %v3118, %v3119
  %v3122 = vperm.slane %v2239, 4
  %v3123 = vadd.f32 %v3120, %v3122
  %v3124 = vadd.f32 %v3121, %v3122
  %v3125 = vperm.slane %v2252, 0
  %v3127 = vsel %vm1174, %v3123, 0
  %v3130 = vsel %vm1174, %v3124, 0
  %3132 = vmatpush.msra.mxu0 0.0
  %3133 = vmatpush.msra.mxu0 0.0
  %3134 = vmatpush.msra.mxu0 0.0
  %3135 = vmatpush.msra.mxu0 0.0
  %3136 = vmatpush.msra.mxu0 0.0
  %3137 = vmatpush.msra.mxu0 0.0
  %3138 = vmatpush.msra.mxu0 0.0
  %3139 = vmatpush.msra.mxu0 0.0
  %3140 = vmatpush.msra.mxu0 0.0
  %3141 = vmatpush.msra.mxu0 0.0
  %3142 = vmatpush.msra.mxu0 0.0
  %3143 = vmatpush.msra.mxu0 0.0
  %3144 = vmatpush.msra.mxu0 %v2243
  %3145 = vmatpush.msra.mxu0 %v2242
  %3146 = vmatpush.msra.mxu0 %v2241
  %3147 = vmatpush.msra.mxu0 %v2240
  %3148 = vmatmul.f32.gmra.mxu0 %v3127
  %v3149 = vpop.f32.mrf.mxu0
  %v3150 = vadd.f32 %v3125, %v3149
  %3151 = vmatmul.f32.gmra.mxu0 %v3130
  %v3152 = vpop.f32.mrf.mxu0
  %v3153 = vadd.f32 %v3125, %v3152
  %3154 = vdwg.mxu0
  %v3155 = vmax.f32 %v3150, 0.0
  %v3156 = vmax.f32 %v3153, 0.0
  %v3157 = vperm.slane %v2239, 5
  %v3159 = vsel %vm2141, %v3155, 0
  %v3162 = vsel %vm2141, %v3156, 0
  %3164 = vmatpush.msra.mxu0 0.0
  %3165 = vmatpush.msra.mxu0 0.0
  %3166 = vmatpush.msra.mxu0 0.0
  %3167 = vmatpush.msra.mxu0 0.0
  %3168 = vmatpush.msra.mxu0 0.0
  %3169 = vmatpush.msra.mxu0 0.0
  %3170 = vmatpush.msra.mxu0 0.0
  %3171 = vmatpush.msra.mxu0 0.0
  %3172 = vmatpush.msra.mxu0 %v2251
  %3173 = vmatpush.msra.mxu0 %v2250
  %3174 = vmatpush.msra.mxu0 %v2249
  %3175 = vmatpush.msra.mxu0 %v2248
  %3176 = vmatpush.msra.mxu0 %v2247
  %3177 = vmatpush.msra.mxu0 %v2246
  %3178 = vmatpush.msra.mxu0 %v2245
  %3179 = vmatpush.msra.mxu0 %v2244
  %3180 = vmatmul.f32.gmra.mxu0 %v3159
  %v3181 = vpop.f32.mrf.mxu0
  %v3182 = vadd.f32 %v3157, %v3181
  %3183 = vmatmul.f32.gmra.mxu0 %v3162
  %v3184 = vpop.f32.mrf.mxu0
  %v3185 = vadd.f32 %v3157, %v3184
  %3186 = vdwg.mxu0
  %v3187 = vadd.f32 %v3123, %v3182
  %v3188 = vadd.f32 %v3124, %v3185
  %v3189 = vsel %vm1174, %v3187, 0.0
  %3190 = vadd.xlane.f32.xlu0 %v3189
  %v3191 = vpop.xlane.xlu0 %3190
  %v3192 = vsel %vm1174, %v3188, 0.0
  %3193 = vadd.xlane.f32.xlu0 %v3192
  %v3194 = vpop.xlane.xlu0 %3193
  %v3195 = vmul.f32 %v3191, %v2063
  %v3196 = vmul.f32 %v3194, %v2063
  %v3197 = vsub.f32 %v3187, %v3195
  %v3198 = vsub.f32 %v3188, %v3196
  %v3199 = vmul.f32 %v3197, %v3197
  %v3200 = vmul.f32 %v3198, %v3198
  %v3201 = vsel %vm1174, %v3199, 0.0
  %3202 = vadd.xlane.f32.xlu0 %v3201
  %v3203 = vpop.xlane.xlu0 %3202
  %v3204 = vsel %vm1174, %v3200, 0.0
  %3205 = vadd.xlane.f32.xlu0 %v3204
  %v3206 = vpop.xlane.xlu0 %3205
  %v3207 = vmul.f32 %v3203, %v2063
  %v3208 = vmul.f32 %v3206, %v2063
  %v3209 = vadd.f32 %v3207, 1e-05
  %v3210 = vadd.f32 %v3208, 1e-05
  %v3211 = vrsqrt.pop %v3209
  %v3212 = vmul.f32 %v3211, %v3209
  %v3213 = vmul.f32 %v3212, %v3211
  %v3214 = vmul.f32 0.5, %v3213
  %v3215 = vsub.f32 1.5, %v3214
  %v3216 = vmul.f32 %v3211, %v3215
  %vm3217 = vweird.f32 %v3209
  %vm3218 = vweird.f32 %v3211
  %vm3219 = vmor %vm3217, %vm3218
  %v3220 = vsel %vm3219, %v3211, %v3216
  %v3221 = vrsqrt.pop %v3210
  %v3222 = vmul.f32 %v3221, %v3210
  %v3223 = vmul.f32 %v3222, %v3221
  %v3224 = vmul.f32 0.5, %v3223
  %v3225 = vsub.f32 1.5, %v3224
  %v3226 = vmul.f32 %v3221, %v3225
  %vm3227 = vweird.f32 %v3210
  %vm3228 = vweird.f32 %v3221
  %vm3229 = vmor %vm3227, %vm3228
  %v3230 = vsel %vm3229, %v3221, %v3226
  %v3231 = vmul.f32 %v3197, %v3220
  %v3232 = vmul.f32 %v3198, %v3230
  %v3233 = vperm.slane %v2239, 6
  %v3234 = vmul.f32 %v3231, %v3233
  %v3235 = vmul.f32 %v3232, %v3233
  %v3236 = vperm.slane %v2239, 7
  %v3237 = vadd.f32 %v3234, %v3236
  %v3238 = vadd.f32 %v3235, %v3236
  %v3239 = vld [vmem:[%s8 + $0x40] sm:$0xff]
  %v3240 = vld [vmem:[%s8 + $0x48] sm:$0xff]
  %v3241 = vld [vmem:[%s8 + $0x50] sm:$0xff]
  %v3242 = vld [vmem:[%s8 + $0x58] sm:$0xff]
  %v3243 = vld [vmem:[%s8 + $0x60] sm:$0xff]
  %v3244 = vld [vmem:[%s8 + $0x68] sm:$0xff]
  %v3245 = vld [vmem:[%s8 + $0x70] sm:$0xff]
  %v3246 = vld [vmem:[%s8 + $0x78] sm:$0xff]
  %v3247 = vld [vmem:[%s9 + $0x80] sm:$0xff]
  %v3248 = vld [vmem:[%s9 + $0x88] sm:$0xff]
  %v3249 = vld [vmem:[%s9 + $0x90] sm:$0xff]
  %v3250 = vld [vmem:[%s9 + $0x98] sm:$0xff]
  %v3251 = vld [vmem:[%s9 + $0xa0] sm:$0xff]
  %v3252 = vld [vmem:[%s9 + $0xa8] sm:$0xff]
  %v3253 = vld [vmem:[%s9 + $0xb0] sm:$0xff]
  %v3254 = vld [vmem:[%s9 + $0xb8] sm:$0xff]
  %v3255 = vld [vmem:[%s11 + $0x2] sm:$0x1]
  %v3256 = vld [vmem:[%s11 + $0x3] sm:$0x1]
  %v3257 = vld [vmem:[%s11 + $0x4] sm:$0x1]
  %v3258 = vld [vmem:[%s11 + $0x5] sm:$0x1]
  %3261 = vrot.lane.b32.xlu0 %v1088, 32
  %v3262 = vpop.permute.xlu0 %3261
  %3263 = vrot.lane.b32.xlu0 %v1089, 32
  %v3264 = vpop.permute.xlu0 %3263
  %v3267 = vsel %vm1174, %v3237, %v3262
  %v3268 = vsel %vm1174, %v3238, %v3264
  %v3269 = vperm.slane %v3255, 0
  %v3271 = vsel %vm2141, %v3267, 0
  %v3274 = vsel %vm2141, %v3268, 0
  %3276 = vmatpush.msra.mxu0 0.0
  %3277 = vmatpush.msra.mxu0 0.0
  %3278 = vmatpush.msra.mxu0 0.0
  %3279 = vmatpush.msra.mxu0 0.0
  %3280 = vmatpush.msra.mxu0 0.0
  %3281 = vmatpush.msra.mxu0 0.0
  %3282 = vmatpush.msra.mxu0 0.0
  %3283 = vmatpush.msra.mxu0 0.0
  %3284 = vmatpush.msra.mxu0 %v3246
  %3285 = vmatpush.msra.mxu0 %v3245
  %3286 = vmatpush.msra.mxu0 %v3244
  %3287 = vmatpush.msra.mxu0 %v3243
  %3288 = vmatpush.msra.mxu0 %v3242
  %3289 = vmatpush.msra.mxu0 %v3241
  %3290 = vmatpush.msra.mxu0 %v3240
  %3291 = vmatpush.msra.mxu0 %v3239
  %3292 = vmatmul.f32.gmra.mxu0 %v3271
  %v3293 = vpop.f32.mrf.mxu0
  %v3294 = vadd.f32 %v3269, %v3293
  %3295 = vmatmul.f32.gmra.mxu0 %v3274
  %v3296 = vpop.f32.mrf.mxu0
  %v3297 = vadd.f32 %v3269, %v3296
  %3298 = vdwg.mxu0
  %v3299 = vmax.f32 %v3294, 0.0
  %v3300 = vmax.f32 %v3297, 0.0
  %v3301 = vperm.slane %v3256, 0
  %v3303 = vsel %vm2141, %v3299, 0
  %v3306 = vsel %vm2141, %v3300, 0
  %3308 = vmatpush.msra.mxu0 0.0
  %3309 = vmatpush.msra.mxu0 0.0
  %3310 = vmatpush.msra.mxu0 0.0
  %3311 = vmatpush.msra.mxu0 0.0
  %3312 = vmatpush.msra.mxu0 0.0
  %3313 = vmatpush.msra.mxu0 0.0
  %3314 = vmatpush.msra.mxu0 0.0
  %3315 = vmatpush.msra.mxu0 0.0
  %3316 = vmatpush.msra.mxu0 %v3254
  %3317 = vmatpush.msra.mxu0 %v3253
  %3318 = vmatpush.msra.mxu0 %v3252
  %3319 = vmatpush.msra.mxu0 %v3251
  %3320 = vmatpush.msra.mxu0 %v3250
  %3321 = vmatpush.msra.mxu0 %v3249
  %3322 = vmatpush.msra.mxu0 %v3248
  %3323 = vmatpush.msra.mxu0 %v3247
  %3324 = vmatmul.f32.gmra.mxu0 %v3303
  %v3325 = vpop.f32.mrf.mxu0
  %v3326 = vadd.f32 %v3301, %v3325
  %3327 = vmatmul.f32.gmra.mxu0 %v3306
  %v3328 = vpop.f32.mrf.mxu0
  %v3329 = vadd.f32 %v3301, %v3328
  %3330 = vdwg.mxu0
  %v3331 = vmax.f32 %v3326, 0.0
  %v3332 = vmax.f32 %v3329, 0.0
  %3334 = vset.pattern.permute.xlu0 0
  %3335 = vperm.xlu0 %3334, %v3258
  %v3336 = vpop.permute.xlu0 %3335
  %v3339 = vsel %vm1174, %v3257, 0
  %v3342 = vsel %vm1174, %v3331, 0
  %v3345 = vsel %vm1174, %v3332, 0
  %3347 = vmatpush.xpose.msra.mxu0 0.0
  %3348 = vmatpush.xpose.msra.mxu0 0.0
  %3349 = vmatpush.xpose.msra.mxu0 0.0
  %3350 = vmatpush.xpose.msra.mxu0 0.0
  %3351 = vmatpush.xpose.msra.mxu0 0.0
  %3352 = vmatpush.xpose.msra.mxu0 0.0
  %3353 = vmatpush.xpose.msra.mxu0 0.0
  %3354 = vmatpush.xpose.msra.mxu0 0.0
  %3355 = vmatpush.xpose.msra.mxu0 0.0
  %3356 = vmatpush.xpose.msra.mxu0 0.0
  %3357 = vmatpush.xpose.msra.mxu0 0.0
  %3358 = vmatpush.xpose.msra.mxu0 0.0
  %3359 = vmatpush.xpose.msra.mxu0 0.0
  %3360 = vmatpush.xpose.msra.mxu0 0.0
  %3361 = vmatpush.xpose.msra.mxu0 %v3345
  %3362 = vmatpush.xpose.msra.mxu0 %v3342
  %3363 = vmatmul.f32.gmra.mxu0 %v3339
  %v3364 = vpop.f32.mrf.mxu0
  %v3365 = vadd.f32 %v3336, %v3364
  %3366 = vdwg.mxu0
  %v3367 = vsub.f32 0.0, %v3365
  %v3368 = vmul.f32 %v3367, 1.442695
  %v3369 = vpow.pop %v3368
  %v3370 = vadd.f32 %v3369, 1.0
  %v3371 = vrcp.pop %v3370
  %v3372 = vmul.f32 %v3370, %v3371
  %v3373 = vsub.f32 1.0, %v3372
  %v3374 = vmul.f32 %v3371, %v3373
  %v3375 = vadd.f32 %v3371, %v3374
  %vm3376 = vweird.f32 %v3370
  %vm3377 = vweird.f32 %v3371
  %vm3378 = vmor %vm3376, %vm3377
  %v3379 = vsel %vm3378, %v3371, %v3375
  %v3380 = vand.u32 2147483647, %v3370
  %vm3381 = vcmp.eq.f32.partialorder %v3380, 8.507059e+37
  %v3382 = vand.u32 %v3370, 2147483648
  %v3383 = vor.u32 1.1754944e-38, %v3382
  %v3384 = vsel %vm3381, %v3383, %v3379
  %v3385 = vmul.f32 1.0, %v3384
  %vm3386 = vcmask 122880
  %3387 = vst.msk [vmem:[%s12] sm:$0x1] %vm3386, %v3385
  // Predicated region
  $region50: #{spkt_forward.1} parent=0 // pred_check
    _
  $region51: #{spkt_forward.1} parent=0 // pred_check_branch
    %3389 = sbr.rel (0) target = $region53
  $region52: #{spkt_forward.1} parent=0 // pred_region
    _
  $region53: #{spkt_forward.1} parent=0 // pred_fallthru
    _
  // Predicated region
  $region54: #{spkt_forward.1} parent=0 // pred_check
    _
  $region55: #{spkt_forward.1} parent=0 // pred_check_branch
    %3391 = sbr.rel (0) target = $region57
  $region56: #{spkt_forward.1} parent=0 // pred_region
    _
  $region57: #{spkt_forward.1} parent=0 // pred_fallthru
    _

</llo_original>
